<compile_context>
chip_gen: v7x
topology: tpu7x:2x2x1
jax: 0.10.0
libtpu: 0.0.40
codegen_flags: <defaults>
</compile_context>

<pallas_src>
import functools

import jax
import jax.numpy as jnp
from jax import lax
from jax.experimental import pallas as pl
from jax.experimental.pallas import tpu as pltpu

# ----------------------------- model configuration -----------------------------
BATCH = 2
IN_CHANS = 3
IMG = 16
PATCH = 8
EMBED = 32
NUM_HEADS = 4
HEAD_DIM = EMBED // NUM_HEADS
DEPTH = 2              # tiny synthetic ViT: 2 blocks total
GRAD_FROM_BLOCK = 1    # blocks[:1] -> frozen backbone, blocks[1:] -> contrastive branch
NUM_ATTR = 4           # number of attribute heads
ATT_DIM = 8            # attribute embedding channels (fixed to 8 in the module)
MLP_RATIO = 4
HIDDEN = MLP_RATIO * EMBED

LN_EPS = 1e-6          # timm ViT LayerNorm eps
BN_EPS = 1e-5          # nn.BatchNorm1d default eps
L2_EPS = 1e-12         # F.normalize default eps
NEG_INF = -1e30

_INV_SQRT2 = 0.7071067811865475

assert NUM_ATTR * ATT_DIM == EMBED          # tail-blob lane packing relies on this
assert HIDDEN <= 128 and 3 * EMBED <= 128   # block-vector blob rows are 128 lanes


def _gelu_exact(x):
    # nn.GELU() default (approximate='none'): 0.5*x*(1+erf(x/sqrt(2)))
    return 0.5 * x * (1.0 + lax.erf(x * _INV_SQRT2))


def _layernorm(x, g, b):
    mu = jnp.mean(x, axis=-1, keepdims=True)
    xc = x - mu
    var = jnp.mean(xc * xc, axis=-1, keepdims=True)
    return xc * lax.rsqrt(var + LN_EPS) * g + b


def _bf16(x):
    return x.astype(jnp.bfloat16)


# --------------------------------- fused kernel --------------------------------
def _fused_forward_kernel(
    # activations / constant mask
    patches_ref, base_ref, attn_bias_ref,
    # packed weights (bf16)
    patch_w_ref, qkv_w_ref, proj_w_ref, fc1_w_ref, fc2_w_ref,
    # packed vector params (f32)
    blkv_ref, tail_ref,
    # outputs
    co_att_ref, heads_ref,
    *, depth, num_heads, batch, n_tok,
):
    D = base_ref.shape[-1]
    dh = D // num_heads
    scale = 1.0 / (float(dh) ** 0.5)
    attn_bias = attn_bias_ref[...]            # (BN, BN) block-diagonal mask (0 / -1e30)

    # patch embedding; cls token, pos embedding and patch bias are folded into `base`
    # (patch rows at the cls positions are all-zero so they contribute nothing there).
    z = base_ref[...] + jnp.dot(patches_ref[...], patch_w_ref[...],
                                preferred_element_type=jnp.float32)   # (BN, D) f32

    for l in range(depth):
        blkv = blkv_ref[l]                               # (8, 128) f32 vector blob
        ln1_g, ln1_b = blkv[0:1, 0:D], blkv[1:2, 0:D]
        qkv_b = blkv[2:3, 0:3 * D]
        proj_b = blkv[3:4, 0:D]
        ln2_g, ln2_b = blkv[4:5, 0:D], blkv[5:6, 0:D]
        fc1_b = blkv[6:7, :]
        fc2_b = blkv[7:8, 0:D]

        # ---- multi-head self-attention (pre-norm), all samples at once ----
        h = _layernorm(z, ln1_g, ln1_b)
        qkv = jnp.dot(_bf16(h), qkv_w_ref[l],
                      preferred_element_type=jnp.float32) + qkv_b     # (BN, 3D)
        o_parts = []
        for hd in range(num_heads):
            q = _bf16(qkv[:, hd * dh:(hd + 1) * dh])
            k = _bf16(qkv[:, D + hd * dh:D + (hd + 1) * dh])
            v = _bf16(qkv[:, 2 * D + hd * dh:2 * D + (hd + 1) * dh])
            s = lax.dot_general(q, k, (((1,), (1,)), ((), ())),
                                preferred_element_type=jnp.float32) * scale
            s = s + attn_bias                                  # per-sample block-diag mask
            p = jnp.exp(s - jnp.max(s, axis=-1, keepdims=True))
            denom = jnp.sum(p, axis=-1, keepdims=True)
            o = jnp.dot(_bf16(p), v, preferred_element_type=jnp.float32)   # (BN, Dh)
            o_parts.append(o * pl.reciprocal(denom, approx=True))          # deferred norm
        o_all = jnp.concatenate(o_parts, axis=-1)              # (BN, D) lane-concat heads
        z = z + jnp.dot(_bf16(o_all), proj_w_ref[l],
                        preferred_element_type=jnp.float32) + proj_b

        # ---- MLP (pre-norm) ----
        h = _layernorm(z, ln2_g, ln2_b)
        m = _gelu_exact(jnp.dot(_bf16(h), fc1_w_ref[l],
                                preferred_element_type=jnp.float32) + fc1_b)
        z = z + jnp.dot(_bf16(m), fc2_w_ref[l],
                        preferred_element_type=jnp.float32) + fc2_b

    # ---- final LayerNorm + attribute embedding branch (BN folded, eval) ----
    tail = tail_ref[...]                                       # (48, 32) f32 blob
    norm_g, norm_b = tail[0:1, :], tail[1:2, :]
    att_b = tail[2:3, 0:ATT_DIM]
    head_b = tail[3:4, :]
    att_w = tail[8:8 + D, 0:ATT_DIM]                           # (D, 8)
    head_w = tail[8 + D:8 + D + ATT_DIM, :]                    # (8, A*8)

    co = _layernorm(z, norm_g, norm_b)                                          # (BN, D)
    att = _gelu_exact(jnp.dot(_bf16(co), _bf16(att_w),
                              preferred_element_type=jnp.float32) + att_b)      # (BN, 8)
    co_att_ref[...] = jnp.concatenate([co, att], axis=-1)      # one lane-dense store

    # ---- all attribute heads at once + per-sample masked max over tokens ----
    hall = _gelu_exact(jnp.dot(_bf16(att), _bf16(head_w),
                               preferred_element_type=jnp.float32) + head_b)    # (BN, A*8)
    row_id = lax.broadcasted_iota(jnp.int32, hall.shape, 0)
    rows = []
    for b in range(batch):
        in_b = jnp.logical_and(row_id >= b * n_tok, row_id < (b + 1) * n_tok)
        rows.append(jnp.max(jnp.where(in_b, hall, NEG_INF), axis=0, keepdims=True))
    heads_ref[...] = jnp.concatenate(rows, axis=0)             # single full store


# ------------------------------ parameter preparation ----------------------------
def _prep_kernel_params(params):
    """Stack per-block weights (bf16), pack vector params into blobs, fold eval BN."""
    blocks = list(params["bottom_blocks"]) + list(params["top_blocks"])
    D = EMBED

    def pad_row(v, width=128):
        v = v.reshape(1, -1)
        return jnp.pad(v, ((0, 0), (0, width - v.shape[-1])))

    # per-block vector blob: 8 rows x 128 lanes
    blkv = jnp.stack([
        jnp.concatenate([
            pad_row(blk["norm1_g"]), pad_row(blk["norm1_b"]),
            pad_row(blk["qkv_b"]), pad_row(blk["proj_b"]),
            pad_row(blk["norm2_g"]), pad_row(blk["norm2_b"]),
            pad_row(blk["fc1_b"]), pad_row(blk["fc2_b"]),
        ], axis=0) for blk in blocks], axis=0).astype(jnp.float32)     # (depth, 8, 128)

    qkv_w = jnp.stack([blk["qkv_w"] for blk in blocks], 0).astype(jnp.bfloat16)   # (depth, D, 3D)
    proj_w = jnp.stack([blk["proj_w"] for blk in blocks], 0).astype(jnp.bfloat16)  # (depth, D, D)
    fc1_w = jnp.stack([blk["fc1_w"] for blk in blocks], 0).astype(jnp.bfloat16)    # (depth, D, H)
    fc2_w = jnp.stack([blk["fc2_w"] for blk in blocks], 0).astype(jnp.bfloat16)    # (depth, H, D)

    # attribute_embedding_branch: fold eval-mode BN(8) into the 1x1 conv
    att_s = params["att_bn_g"] * lax.rsqrt(params["att_bn_rv"] + BN_EPS)
    att_t = params["att_bn_b"] - params["att_bn_rm"] * att_s
    att_w = params["att_w"] * att_s[None, :]                   # (D, 8)
    att_b = params["att_b"] * att_s + att_t                    # (8,)

    # attribute heads: fold per-head BN(8), concatenate all heads on the lane axis
    head_s = params["head_bn_g"] * lax.rsqrt(params["head_bn_rv"] + BN_EPS)   # (A, 8)
    head_t = params["head_bn_b"] - params["head_bn_rm"] * head_s
    hw = params["head_w"] * head_s[:, None, :]                                # (A, 8, 8)
    hb = params["head_b"] * head_s + head_t                                   # (A, 8)
    head_w = hw.transpose(1, 0, 2).reshape(ATT_DIM, NUM_ATTR * ATT_DIM)       # (8, A*8)
    head_b = hb.reshape(1, NUM_ATTR * ATT_DIM)

    # tail blob (sublane-tile aligned): rows 0-3 vectors, 8-39 att_w, 40-47 head_w
    tail = jnp.concatenate([
        params["norm_g"].reshape(1, D),
        params["norm_b"].reshape(1, D),
        jnp.pad(att_b.reshape(1, ATT_DIM), ((0, 0), (0, D - ATT_DIM))),
        head_b,
        jnp.zeros((4, D), jnp.float32),
        jnp.pad(att_w, ((0, 0), (0, D - ATT_DIM))),
        head_w,
    ], axis=0).astype(jnp.float32)                                            # (48, 32)

    return dict(patch_w=params["patch_w"].astype(jnp.bfloat16),
                qkv_w=qkv_w, proj_w=proj_w, fc1_w=fc1_w, fc2_w=fc2_w,
                blkv=blkv, tail=tail)


def _full_spec(arr):
    nd = arr.ndim
    return pl.BlockSpec(arr.shape, lambda i, nd=nd: (0,) * nd)


def l2_normalize(x, axis=1, eps=L2_EPS):
    n = jnp.sqrt(jnp.sum(x * x, axis=axis, keepdims=True))
    return x / jnp.maximum(n, eps)


# ------------------------------- model forward ----------------------------------
@functools.partial(jax.jit, static_argnames=("concat", "training"))
def attribute_transformer4_forward(params, x, concat=False, training=False):
    """Mirrors AttributeTransformer4.forward.  x: (B, C, H, W) float32 (NCHW)."""
    B, C, H, W = x.shape
    gh, gw = H // PATCH, W // PATCH
    n_tok = 1 + gh * gw
    bn = B * n_tok
    cpp = C * PATCH * PATCH

    kp = _prep_kernel_params(params)

    # im2col for the stride==kernel patch-embed conv; insert an all-zero row at each
    # sample's cls position so the patch matmul contributes nothing there.
    patches = (x.reshape(B, C, gh, PATCH, gw, PATCH)
                 .transpose(0, 2, 4, 1, 3, 5)
                 .reshape(B, gh * gw, cpp))
    patches0 = jnp.concatenate(
        [jnp.zeros((B, 1, cpp), x.dtype), patches], axis=1
    ).reshape(bn, cpp).astype(jnp.bfloat16)

    # token template: (cls_token + pos[0]) at row 0 of each sample; (pos[i] + patch_b)
    # at the patch rows.  npatch==N and w==h, so no pos-embed interpolation is needed.
    cls_row = params["cls_token"].reshape(1, EMBED) + params["pos_embed"][0, 0:1]
    patch_rows = params["pos_embed"][0, 1:] + params["patch_b"][None, :]
    base = jnp.tile(jnp.concatenate([cls_row, patch_rows], axis=0), (B, 1))

    # block-diagonal (per-sample) additive attention mask
    row_b = jnp.arange(bn) // n_tok
    attn_bias = jnp.where(row_b[:, None] == row_b[None, :], 0.0, NEG_INF).astype(jnp.float32)

    inputs = [patches0, base, attn_bias,
              kp["patch_w"], kp["qkv_w"], kp["proj_w"], kp["fc1_w"], kp["fc2_w"],
              kp["blkv"], kp["tail"]]

    out_shapes = (
        jax.ShapeDtypeStruct((bn, EMBED + ATT_DIM), jnp.float32),     # co | att (merged)
        jax.ShapeDtypeStruct((B, NUM_ATTR * ATT_DIM), jnp.float32),   # all head embeddings
    )
    out_specs = (
        pl.BlockSpec((bn, EMBED + ATT_DIM), lambda i: (0, 0)),
        pl.BlockSpec((B, NUM_ATTR * ATT_DIM), lambda i: (0, 0)),
    )

    co_att, heads = pl.pallas_call(
        functools.partial(_fused_forward_kernel, depth=DEPTH,
                          num_heads=NUM_HEADS, batch=B, n_tok=n_tok),
        out_shape=out_shapes,
        grid=(1,),
        in_specs=[_full_spec(a) for a in inputs],
        out_specs=out_specs,
        compiler_params=pltpu.CompilerParams(dimension_semantics=("arbitrary",)),
    )(*inputs)

    co2 = co_att[:, :EMBED]
    att2 = co_att[:, EMBED:]
    cls_emb = co2.reshape(B, n_tok, EMBED)[:, 0]                      # co_embedding[:, 0]
    att = att2.reshape(B, n_tok, ATT_DIM)
    head_embedding_list = [heads[:, a * ATT_DIM:(a + 1) * ATT_DIM] for a in range(NUM_ATTR)]

    if training:
        # TODO(synk): training-mode BatchNorm batch statistics are not reproduced here.
        return cls_emb, head_embedding_list
    if concat:
        att_ncl_flat = att.transpose(0, 2, 1).reshape(B, -1)          # PyTorch NCL flatten order
        return jnp.concatenate(
            [l2_normalize(cls_emb, axis=1), l2_normalize(att_ncl_flat, axis=1)], axis=1)
    return cls_emb


# --------------------------------- parameter init -------------------------------
def init_params(key):
    keys = iter(jax.random.split(key, 128))

    def nrm(shape, std=0.02):
        return (std * jax.random.normal(next(keys), shape)).astype(jnp.float32)

    def block():
        return {
            "norm1_g": jnp.ones((EMBED,), jnp.float32),
            "norm1_b": jnp.zeros((EMBED,), jnp.float32),
            "qkv_w": nrm((EMBED, 3 * EMBED)),
            "qkv_b": nrm((3 * EMBED,)),
            "proj_w": nrm((EMBED, EMBED)),
            "proj_b": nrm((EMBED,)),
            "norm2_g": jnp.ones((EMBED,), jnp.float32),
            "norm2_b": jnp.zeros((EMBED,), jnp.float32),
            "fc1_w": nrm((EMBED, HIDDEN)),
            "fc1_b": nrm((HIDDEN,)),
            "fc2_w": nrm((HIDDEN, EMBED)),
            "fc2_b": nrm((EMBED,)),
        }

    n_tokens = 1 + (IMG // PATCH) ** 2
    params = {
        "patch_w": nrm((IN_CHANS * PATCH * PATCH, EMBED)),
        "patch_b": nrm((EMBED,)),
        "cls_token": nrm((1, 1, EMBED)),
        "pos_embed": nrm((1, n_tokens, EMBED)),
        "bottom_blocks": [block() for _ in range(GRAD_FROM_BLOCK)],
        "top_blocks": [block() for _ in range(DEPTH - GRAD_FROM_BLOCK)],
        "norm_g": jnp.ones((EMBED,), jnp.float32),
        "norm_b": jnp.zeros((EMBED,), jnp.float32),
        # attribute_embedding_branch: Conv1d(D->8,1) + BN(8)
        "att_w": nrm((EMBED, ATT_DIM)),
        "att_b": nrm((ATT_DIM,)),
        "att_bn_g": jnp.ones((ATT_DIM,), jnp.float32),
        "att_bn_b": jnp.zeros((ATT_DIM,), jnp.float32),
        "att_bn_rm": jnp.zeros((ATT_DIM,), jnp.float32),
        "att_bn_rv": jnp.ones((ATT_DIM,), jnp.float32),
        # attribute_branch_list: per-head Conv1d(8->8,1) + BN(8), stacked on axis 0
        "head_w": nrm((NUM_ATTR, ATT_DIM, ATT_DIM)),
        "head_b": nrm((NUM_ATTR, ATT_DIM)),
        "head_bn_g": jnp.ones((NUM_ATTR, ATT_DIM), jnp.float32),
        "head_bn_b": jnp.zeros((NUM_ATTR, ATT_DIM), jnp.float32),
        "head_bn_rm": jnp.zeros((NUM_ATTR, ATT_DIM), jnp.float32),
        "head_bn_rv": jnp.ones((NUM_ATTR, ATT_DIM), jnp.float32),
    }
    return params


# -------------------------------------- main -------------------------------------
if __name__ == "__main__":
    root = jax.random.PRNGKey(0)
    pkey, xkey = jax.random.split(root)
    params = init_params(pkey)
    x = jax.random.normal(xkey, (BATCH, IN_CHANS, IMG, IMG), jnp.float32)

    # eval path with concat=True: normalized cls embedding ++ normalized att embedding
    out_concat = attribute_transformer4_forward(params, x, concat=True, training=False)
    # "training" return path: (co_embedding[:, 0], head_embedding_list)
    cls_emb, head_list = attribute_transformer4_forward(params, x, training=True)
    # default eval path
    cls_only = attribute_transformer4_forward(params, x)

    jax.block_until_ready(out_concat)
    jax.block_until_ready(cls_emb)
    jax.block_until_ready(cls_only)
    for h in head_list:
        jax.block_until_ready(h)

    n_tok = 1 + (IMG // PATCH) ** 2
    assert out_concat.shape == (BATCH, EMBED + ATT_DIM * n_tok)
    assert cls_emb.shape == (BATCH, EMBED)
    assert cls_only.shape == (BATCH, EMBED)
    assert len(head_list) == NUM_ATTR and head_list[0].shape == (BATCH, ATT_DIM)
    assert bool(jnp.all(jnp.isfinite(out_concat)))
    print("KERNEL_OK")
</pallas_src>

<mosaic_0001>
module attributes {stable_mosaic.version = 11 : i64} {
  func.func @_fused_forward_kernel(%arg0: i32, %arg1: memref<10x192xbf16, #tpu.memory_space<vmem>>, %arg2: memref<10x32xf32, #tpu.memory_space<vmem>>, %arg3: memref<10x10xf32, #tpu.memory_space<vmem>>, %arg4: memref<192x32xbf16, #tpu.memory_space<vmem>>, %arg5: memref<2x32x96xbf16, #tpu.memory_space<vmem>>, %arg6: memref<2x32x32xbf16, #tpu.memory_space<vmem>>, %arg7: memref<2x32x128xbf16, #tpu.memory_space<vmem>>, %arg8: memref<2x128x32xbf16, #tpu.memory_space<vmem>>, %arg9: memref<2x8x128xf32, #tpu.memory_space<vmem>>, %arg10: memref<48x32xf32, #tpu.memory_space<vmem>>, %arg11: memref<10x40xf32, #tpu.memory_space<vmem>>, %arg12: memref<2x32xf32, #tpu.memory_space<vmem>>) attributes {dimension_semantics = [#tpu.dimension_semantics<arbitrary>], iteration_bounds = array<i64: 1>, scalar_prefetch = 0 : i64, scratch_operands = 0 : i64, tpu.core_type = #tpu.core_type<tc>, window_params = [{pipeline_mode = #tpu.pipeline_mode<synchronous>, transform_indices = @transform_0, window_bounds = array<i64: 10, 192>}, {pipeline_mode = #tpu.pipeline_mode<synchronous>, transform_indices = @transform_1, window_bounds = array<i64: 10, 32>}, {pipeline_mode = #tpu.pipeline_mode<synchronous>, transform_indices = @transform_2, window_bounds = array<i64: 10, 10>}, {pipeline_mode = #tpu.pipeline_mode<synchronous>, transform_indices = @transform_3, window_bounds = array<i64: 192, 32>}, {pipeline_mode = #tpu.pipeline_mode<synchronous>, transform_indices = @transform_4, window_bounds = array<i64: 2, 32, 96>}, {pipeline_mode = #tpu.pipeline_mode<synchronous>, transform_indices = @transform_5, window_bounds = array<i64: 2, 32, 32>}, {pipeline_mode = #tpu.pipeline_mode<synchronous>, transform_indices = @transform_6, window_bounds = array<i64: 2, 32, 128>}, {pipeline_mode = #tpu.pipeline_mode<synchronous>, transform_indices = @transform_7, window_bounds = array<i64: 2, 128, 32>}, {pipeline_mode = #tpu.pipeline_mode<synchronous>, transform_indices = @transform_8, window_bounds = array<i64: 2, 8, 128>}, {pipeline_mode = #tpu.pipeline_mode<synchronous>, transform_indices = @transform_9, window_bounds = array<i64: 48, 32>}, {pipeline_mode = #tpu.pipeline_mode<synchronous>, transform_indices = @transform_10, window_bounds = array<i64: 10, 40>}, {pipeline_mode = #tpu.pipeline_mode<synchronous>, transform_indices = @transform_11, window_bounds = array<i64: 2, 32>}]} {
    %c0 = arith.constant 0 : index
    %c0_0 = arith.constant 0 : index
    %0 = vector.load %arg3[%c0, %c0_0] : memref<10x10xf32, #tpu.memory_space<vmem>>, vector<10x10xf32>
    %c0_1 = arith.constant 0 : index
    %c0_2 = arith.constant 0 : index
    %1 = vector.load %arg2[%c0_1, %c0_2] : memref<10x32xf32, #tpu.memory_space<vmem>>, vector<10x32xf32>
    %c0_3 = arith.constant 0 : index
    %c0_4 = arith.constant 0 : index
    %2 = vector.load %arg1[%c0_3, %c0_4] : memref<10x192xbf16, #tpu.memory_space<vmem>>, vector<10x192xbf16>
    %c0_5 = arith.constant 0 : index
    %c0_6 = arith.constant 0 : index
    %3 = vector.load %arg4[%c0_5, %c0_6] : memref<192x32xbf16, #tpu.memory_space<vmem>>, vector<192x32xbf16>
    %cst = arith.constant dense<0.000000e+00> : vector<10x32xf32>
    %4 = tpu.matmul %2, %3, %cst {dimension_numbers = #tpu.dot_dimension_numbers<[1], [0], [0], [1], [0, 0, 1, 1], [], []>} : vector<10x192xbf16>, vector<192x32xbf16>, vector<10x32xf32> -> vector<10x32xf32>
    %5 = arith.addf %1, %4 : vector<10x32xf32>
    %c0_7 = arith.constant 0 : index
    %c0_8 = arith.constant 0 : index
    %c0_9 = arith.constant 0 : index
    %6 = vector.load %arg9[%c0_7, %c0_8, %c0_9] : memref<2x8x128xf32, #tpu.memory_space<vmem>>, vector<1x8x128xf32>
    %7 = vector.shape_cast %6 : vector<1x8x128xf32> to vector<8x128xf32>
    %8 = vector.extract_strided_slice %7 {offsets = [0, 0], sizes = [1, 32], strides = [1, 1]} : vector<8x128xf32> to vector<1x32xf32>
    %9 = vector.extract_strided_slice %7 {offsets = [1, 0], sizes = [1, 32], strides = [1, 1]} : vector<8x128xf32> to vector<1x32xf32>
    %10 = vector.extract_strided_slice %7 {offsets = [2, 0], sizes = [1, 96], strides = [1, 1]} : vector<8x128xf32> to vector<1x96xf32>
    %11 = vector.extract_strided_slice %7 {offsets = [3, 0], sizes = [1, 32], strides = [1, 1]} : vector<8x128xf32> to vector<1x32xf32>
    %12 = vector.extract_strided_slice %7 {offsets = [4, 0], sizes = [1, 32], strides = [1, 1]} : vector<8x128xf32> to vector<1x32xf32>
    %13 = vector.extract_strided_slice %7 {offsets = [5, 0], sizes = [1, 32], strides = [1, 1]} : vector<8x128xf32> to vector<1x32xf32>
    %14 = vector.extract_strided_slice %7 {offsets = [6, 0], sizes = [1, 128], strides = [1, 1]} : vector<8x128xf32> to vector<1x128xf32>
    %15 = vector.extract_strided_slice %7 {offsets = [7, 0], sizes = [1, 32], strides = [1, 1]} : vector<8x128xf32> to vector<1x32xf32>
    %cst_10 = arith.constant dense<0.000000e+00> : vector<10xf32>
    %16 = vector.multi_reduction <add>, %5, %cst_10 [1] : vector<10x32xf32> to vector<10xf32>
    %17 = vector.shape_cast %16 : vector<10xf32> to vector<10x1xf32>
    %cst_11 = arith.constant 3.200000e+01 : f32
    %18 = vector.broadcast %cst_11 : f32 to vector<10x1xf32>
    %19 = arith.divf %17, %18 : vector<10x1xf32>
    %20 = vector.broadcast %19 : vector<10x1xf32> to vector<10x32xf32>
    %21 = arith.subf %5, %20 : vector<10x32xf32>
    %22 = arith.mulf %21, %21 : vector<10x32xf32>
    %cst_12 = arith.constant dense<0.000000e+00> : vector<10xf32>
    %23 = vector.multi_reduction <add>, %22, %cst_12 [1] : vector<10x32xf32> to vector<10xf32>
    %24 = vector.shape_cast %23 : vector<10xf32> to vector<10x1xf32>
    %cst_13 = arith.constant 3.200000e+01 : f32
    %25 = vector.broadcast %cst_13 : f32 to vector<10x1xf32>
    %26 = arith.divf %24, %25 : vector<10x1xf32>
    %cst_14 = arith.constant 9.99999997E-7 : f32
    %27 = vector.broadcast %cst_14 : f32 to vector<10x1xf32>
    %28 = arith.addf %26, %27 : vector<10x1xf32>
    %29 = math.rsqrt %28 : vector<10x1xf32>
    %30 = vector.broadcast %29 : vector<10x1xf32> to vector<10x32xf32>
    %31 = arith.mulf %21, %30 : vector<10x32xf32>
    %32 = vector.broadcast %8 : vector<1x32xf32> to vector<10x32xf32>
    %33 = arith.mulf %31, %32 : vector<10x32xf32>
    %34 = vector.broadcast %9 : vector<1x32xf32> to vector<10x32xf32>
    %35 = arith.addf %33, %34 : vector<10x32xf32>
    %36 = arith.truncf %35 : vector<10x32xf32> to vector<10x32xbf16>
    %c0_15 = arith.constant 0 : index
    %c0_16 = arith.constant 0 : index
    %c0_17 = arith.constant 0 : index
    %37 = vector.load %arg5[%c0_15, %c0_16, %c0_17] : memref<2x32x96xbf16, #tpu.memory_space<vmem>>, vector<1x32x96xbf16>
    %38 = vector.shape_cast %37 : vector<1x32x96xbf16> to vector<32x96xbf16>
    %cst_18 = arith.constant dense<0.000000e+00> : vector<10x96xf32>
    %39 = tpu.matmul %36, %38, %cst_18 {dimension_numbers = #tpu.dot_dimension_numbers<[1], [0], [0], [1], [0, 0, 1, 1], [], []>} : vector<10x32xbf16>, vector<32x96xbf16>, vector<10x96xf32> -> vector<10x96xf32>
    %40 = vector.broadcast %10 : vector<1x96xf32> to vector<10x96xf32>
    %41 = arith.addf %39, %40 : vector<10x96xf32>
    %42 = vector.extract_strided_slice %41 {offsets = [0, 0], sizes = [10, 8], strides = [1, 1]} : vector<10x96xf32> to vector<10x8xf32>
    %43 = arith.truncf %42 : vector<10x8xf32> to vector<10x8xbf16>
    %44 = vector.extract_strided_slice %41 {offsets = [0, 32], sizes = [10, 8], strides = [1, 1]} : vector<10x96xf32> to vector<10x8xf32>
    %45 = arith.truncf %44 : vector<10x8xf32> to vector<10x8xbf16>
    %46 = vector.extract_strided_slice %41 {offsets = [0, 64], sizes = [10, 8], strides = [1, 1]} : vector<10x96xf32> to vector<10x8xf32>
    %47 = arith.truncf %46 : vector<10x8xf32> to vector<10x8xbf16>
    %cst_19 = arith.constant dense<0.000000e+00> : vector<10x10xf32>
    %48 = tpu.matmul %43, %45, %cst_19 {dimension_numbers = #tpu.dot_dimension_numbers<[1], [1], [0], [0], [0, 0, 1, 0], [], []>} : vector<10x8xbf16>, vector<10x8xbf16>, vector<10x10xf32> -> vector<10x10xf32>
    %cst_20 = arith.constant 0.353553385 : f32
    %49 = vector.broadcast %cst_20 : f32 to vector<10x10xf32>
    %50 = arith.mulf %48, %49 : vector<10x10xf32>
    %51 = arith.addf %50, %0 : vector<10x10xf32>
    %cst_21 = arith.constant dense<0xFF800000> : vector<10xf32>
    %52 = vector.multi_reduction <maximumf>, %51, %cst_21 [1] : vector<10x10xf32> to vector<10xf32>
    %53 = vector.shape_cast %52 : vector<10xf32> to vector<10x1xf32>
    %54 = vector.broadcast %53 : vector<10x1xf32> to vector<10x10xf32>
    %55 = arith.subf %51, %54 : vector<10x10xf32>
    %56 = math.exp %55 : vector<10x10xf32>
    %cst_22 = arith.constant dense<0.000000e+00> : vector<10xf32>
    %57 = vector.multi_reduction <add>, %56, %cst_22 [1] : vector<10x10xf32> to vector<10xf32>
    %58 = vector.shape_cast %57 : vector<10xf32> to vector<10x1xf32>
    %59 = arith.truncf %56 : vector<10x10xf32> to vector<10x10xbf16>
    %cst_23 = arith.constant dense<0.000000e+00> : vector<10x8xf32>
    %60 = tpu.matmul %59, %47, %cst_23 {dimension_numbers = #tpu.dot_dimension_numbers<[1], [0], [0], [1], [0, 0, 1, 1], [], []>} : vector<10x10xbf16>, vector<10x8xbf16>, vector<10x8xf32> -> vector<10x8xf32>
    %61 = tpu.reciprocal %58 {approx = true} : vector<10x1xf32> -> vector<10x1xf32>
    %62 = vector.broadcast %61 : vector<10x1xf32> to vector<10x8xf32>
    %63 = arith.mulf %60, %62 : vector<10x8xf32>
    %64 = vector.extract_strided_slice %41 {offsets = [0, 8], sizes = [10, 8], strides = [1, 1]} : vector<10x96xf32> to vector<10x8xf32>
    %65 = arith.truncf %64 : vector<10x8xf32> to vector<10x8xbf16>
    %66 = vector.extract_strided_slice %41 {offsets = [0, 40], sizes = [10, 8], strides = [1, 1]} : vector<10x96xf32> to vector<10x8xf32>
    %67 = arith.truncf %66 : vector<10x8xf32> to vector<10x8xbf16>
    %68 = vector.extract_strided_slice %41 {offsets = [0, 72], sizes = [10, 8], strides = [1, 1]} : vector<10x96xf32> to vector<10x8xf32>
    %69 = arith.truncf %68 : vector<10x8xf32> to vector<10x8xbf16>
    %cst_24 = arith.constant dense<0.000000e+00> : vector<10x10xf32>
    %70 = tpu.matmul %65, %67, %cst_24 {dimension_numbers = #tpu.dot_dimension_numbers<[1], [1], [0], [0], [0, 0, 1, 0], [], []>} : vector<10x8xbf16>, vector<10x8xbf16>, vector<10x10xf32> -> vector<10x10xf32>
    %cst_25 = arith.constant 0.353553385 : f32
    %71 = vector.broadcast %cst_25 : f32 to vector<10x10xf32>
    %72 = arith.mulf %70, %71 : vector<10x10xf32>
    %73 = arith.addf %72, %0 : vector<10x10xf32>
    %cst_26 = arith.constant dense<0xFF800000> : vector<10xf32>
    %74 = vector.multi_reduction <maximumf>, %73, %cst_26 [1] : vector<10x10xf32> to vector<10xf32>
    %75 = vector.shape_cast %74 : vector<10xf32> to vector<10x1xf32>
    %76 = vector.broadcast %75 : vector<10x1xf32> to vector<10x10xf32>
    %77 = arith.subf %73, %76 : vector<10x10xf32>
    %78 = math.exp %77 : vector<10x10xf32>
    %cst_27 = arith.constant dense<0.000000e+00> : vector<10xf32>
    %79 = vector.multi_reduction <add>, %78, %cst_27 [1] : vector<10x10xf32> to vector<10xf32>
    %80 = vector.shape_cast %79 : vector<10xf32> to vector<10x1xf32>
    %81 = arith.truncf %78 : vector<10x10xf32> to vector<10x10xbf16>
    %cst_28 = arith.constant dense<0.000000e+00> : vector<10x8xf32>
    %82 = tpu.matmul %81, %69, %cst_28 {dimension_numbers = #tpu.dot_dimension_numbers<[1], [0], [0], [1], [0, 0, 1, 1], [], []>} : vector<10x10xbf16>, vector<10x8xbf16>, vector<10x8xf32> -> vector<10x8xf32>
    %83 = tpu.reciprocal %80 {approx = true} : vector<10x1xf32> -> vector<10x1xf32>
    %84 = vector.broadcast %83 : vector<10x1xf32> to vector<10x8xf32>
    %85 = arith.mulf %82, %84 : vector<10x8xf32>
    %86 = vector.extract_strided_slice %41 {offsets = [0, 16], sizes = [10, 8], strides = [1, 1]} : vector<10x96xf32> to vector<10x8xf32>
    %87 = arith.truncf %86 : vector<10x8xf32> to vector<10x8xbf16>
    %88 = vector.extract_strided_slice %41 {offsets = [0, 48], sizes = [10, 8], strides = [1, 1]} : vector<10x96xf32> to vector<10x8xf32>
    %89 = arith.truncf %88 : vector<10x8xf32> to vector<10x8xbf16>
    %90 = vector.extract_strided_slice %41 {offsets = [0, 80], sizes = [10, 8], strides = [1, 1]} : vector<10x96xf32> to vector<10x8xf32>
    %91 = arith.truncf %90 : vector<10x8xf32> to vector<10x8xbf16>
    %cst_29 = arith.constant dense<0.000000e+00> : vector<10x10xf32>
    %92 = tpu.matmul %87, %89, %cst_29 {dimension_numbers = #tpu.dot_dimension_numbers<[1], [1], [0], [0], [0, 0, 1, 0], [], []>} : vector<10x8xbf16>, vector<10x8xbf16>, vector<10x10xf32> -> vector<10x10xf32>
    %cst_30 = arith.constant 0.353553385 : f32
    %93 = vector.broadcast %cst_30 : f32 to vector<10x10xf32>
    %94 = arith.mulf %92, %93 : vector<10x10xf32>
    %95 = arith.addf %94, %0 : vector<10x10xf32>
    %cst_31 = arith.constant dense<0xFF800000> : vector<10xf32>
    %96 = vector.multi_reduction <maximumf>, %95, %cst_31 [1] : vector<10x10xf32> to vector<10xf32>
    %97 = vector.shape_cast %96 : vector<10xf32> to vector<10x1xf32>
    %98 = vector.broadcast %97 : vector<10x1xf32> to vector<10x10xf32>
    %99 = arith.subf %95, %98 : vector<10x10xf32>
    %100 = math.exp %99 : vector<10x10xf32>
    %cst_32 = arith.constant dense<0.000000e+00> : vector<10xf32>
    %101 = vector.multi_reduction <add>, %100, %cst_32 [1] : vector<10x10xf32> to vector<10xf32>
    %102 = vector.shape_cast %101 : vector<10xf32> to vector<10x1xf32>
    %103 = arith.truncf %100 : vector<10x10xf32> to vector<10x10xbf16>
    %cst_33 = arith.constant dense<0.000000e+00> : vector<10x8xf32>
    %104 = tpu.matmul %103, %91, %cst_33 {dimension_numbers = #tpu.dot_dimension_numbers<[1], [0], [0], [1], [0, 0, 1, 1], [], []>} : vector<10x10xbf16>, vector<10x8xbf16>, vector<10x8xf32> -> vector<10x8xf32>
    %105 = tpu.reciprocal %102 {approx = true} : vector<10x1xf32> -> vector<10x1xf32>
    %106 = vector.broadcast %105 : vector<10x1xf32> to vector<10x8xf32>
    %107 = arith.mulf %104, %106 : vector<10x8xf32>
    %108 = vector.extract_strided_slice %41 {offsets = [0, 24], sizes = [10, 8], strides = [1, 1]} : vector<10x96xf32> to vector<10x8xf32>
    %109 = arith.truncf %108 : vector<10x8xf32> to vector<10x8xbf16>
    %110 = vector.extract_strided_slice %41 {offsets = [0, 56], sizes = [10, 8], strides = [1, 1]} : vector<10x96xf32> to vector<10x8xf32>
    %111 = arith.truncf %110 : vector<10x8xf32> to vector<10x8xbf16>
    %112 = vector.extract_strided_slice %41 {offsets = [0, 88], sizes = [10, 8], strides = [1, 1]} : vector<10x96xf32> to vector<10x8xf32>
    %113 = arith.truncf %112 : vector<10x8xf32> to vector<10x8xbf16>
    %cst_34 = arith.constant dense<0.000000e+00> : vector<10x10xf32>
    %114 = tpu.matmul %109, %111, %cst_34 {dimension_numbers = #tpu.dot_dimension_numbers<[1], [1], [0], [0], [0, 0, 1, 0], [], []>} : vector<10x8xbf16>, vector<10x8xbf16>, vector<10x10xf32> -> vector<10x10xf32>
    %cst_35 = arith.constant 0.353553385 : f32
    %115 = vector.broadcast %cst_35 : f32 to vector<10x10xf32>
    %116 = arith.mulf %114, %115 : vector<10x10xf32>
    %117 = arith.addf %116, %0 : vector<10x10xf32>
    %cst_36 = arith.constant dense<0xFF800000> : vector<10xf32>
    %118 = vector.multi_reduction <maximumf>, %117, %cst_36 [1] : vector<10x10xf32> to vector<10xf32>
    %119 = vector.shape_cast %118 : vector<10xf32> to vector<10x1xf32>
    %120 = vector.broadcast %119 : vector<10x1xf32> to vector<10x10xf32>
    %121 = arith.subf %117, %120 : vector<10x10xf32>
    %122 = math.exp %121 : vector<10x10xf32>
    %cst_37 = arith.constant dense<0.000000e+00> : vector<10xf32>
    %123 = vector.multi_reduction <add>, %122, %cst_37 [1] : vector<10x10xf32> to vector<10xf32>
    %124 = vector.shape_cast %123 : vector<10xf32> to vector<10x1xf32>
    %125 = arith.truncf %122 : vector<10x10xf32> to vector<10x10xbf16>
    %cst_38 = arith.constant dense<0.000000e+00> : vector<10x8xf32>
    %126 = tpu.matmul %125, %113, %cst_38 {dimension_numbers = #tpu.dot_dimension_numbers<[1], [0], [0], [1], [0, 0, 1, 1], [], []>} : vector<10x10xbf16>, vector<10x8xbf16>, vector<10x8xf32> -> vector<10x8xf32>
    %127 = tpu.reciprocal %124 {approx = true} : vector<10x1xf32> -> vector<10x1xf32>
    %128 = vector.broadcast %127 : vector<10x1xf32> to vector<10x8xf32>
    %129 = arith.mulf %126, %128 : vector<10x8xf32>
    %130 = tpu.concatenate %63, %85, %107, %129 in 1 : vector<10x8xf32>, vector<10x8xf32>, vector<10x8xf32>, vector<10x8xf32> -> vector<10x32xf32>
    %131 = arith.truncf %130 : vector<10x32xf32> to vector<10x32xbf16>
    %c0_39 = arith.constant 0 : index
    %c0_40 = arith.constant 0 : index
    %c0_41 = arith.constant 0 : index
    %132 = vector.load %arg6[%c0_39, %c0_40, %c0_41] : memref<2x32x32xbf16, #tpu.memory_space<vmem>>, vector<1x32x32xbf16>
    %133 = vector.shape_cast %132 : vector<1x32x32xbf16> to vector<32x32xbf16>
    %cst_42 = arith.constant dense<0.000000e+00> : vector<10x32xf32>
    %134 = tpu.matmul %131, %133, %cst_42 {dimension_numbers = #tpu.dot_dimension_numbers<[1], [0], [0], [1], [0, 0, 1, 1], [], []>} : vector<10x32xbf16>, vector<32x32xbf16>, vector<10x32xf32> -> vector<10x32xf32>
    %135 = arith.addf %5, %134 : vector<10x32xf32>
    %136 = vector.broadcast %11 : vector<1x32xf32> to vector<10x32xf32>
    %137 = arith.addf %135, %136 : vector<10x32xf32>
    %cst_43 = arith.constant dense<0.000000e+00> : vector<10xf32>
    %138 = vector.multi_reduction <add>, %137, %cst_43 [1] : vector<10x32xf32> to vector<10xf32>
    %139 = vector.shape_cast %138 : vector<10xf32> to vector<10x1xf32>
    %cst_44 = arith.constant 3.200000e+01 : f32
    %140 = vector.broadcast %cst_44 : f32 to vector<10x1xf32>
    %141 = arith.divf %139, %140 : vector<10x1xf32>
    %142 = vector.broadcast %141 : vector<10x1xf32> to vector<10x32xf32>
    %143 = arith.subf %137, %142 : vector<10x32xf32>
    %144 = arith.mulf %143, %143 : vector<10x32xf32>
    %cst_45 = arith.constant dense<0.000000e+00> : vector<10xf32>
    %145 = vector.multi_reduction <add>, %144, %cst_45 [1] : vector<10x32xf32> to vector<10xf32>
    %146 = vector.shape_cast %145 : vector<10xf32> to vector<10x1xf32>
    %cst_46 = arith.constant 3.200000e+01 : f32
    %147 = vector.broadcast %cst_46 : f32 to vector<10x1xf32>
    %148 = arith.divf %146, %147 : vector<10x1xf32>
    %cst_47 = arith.constant 9.99999997E-7 : f32
    %149 = vector.broadcast %cst_47 : f32 to vector<10x1xf32>
    %150 = arith.addf %148, %149 : vector<10x1xf32>
    %151 = math.rsqrt %150 : vector<10x1xf32>
    %152 = vector.broadcast %151 : vector<10x1xf32> to vector<10x32xf32>
    %153 = arith.mulf %143, %152 : vector<10x32xf32>
    %154 = vector.broadcast %12 : vector<1x32xf32> to vector<10x32xf32>
    %155 = arith.mulf %153, %154 : vector<10x32xf32>
    %156 = vector.broadcast %13 : vector<1x32xf32> to vector<10x32xf32>
    %157 = arith.addf %155, %156 : vector<10x32xf32>
    %158 = arith.truncf %157 : vector<10x32xf32> to vector<10x32xbf16>
    %c0_48 = arith.constant 0 : index
    %c0_49 = arith.constant 0 : index
    %c0_50 = arith.constant 0 : index
    %159 = vector.load %arg7[%c0_48, %c0_49, %c0_50] : memref<2x32x128xbf16, #tpu.memory_space<vmem>>, vector<1x32x128xbf16>
    %160 = vector.shape_cast %159 : vector<1x32x128xbf16> to vector<32x128xbf16>
    %cst_51 = arith.constant dense<0.000000e+00> : vector<10x128xf32>
    %161 = tpu.matmul %158, %160, %cst_51 {dimension_numbers = #tpu.dot_dimension_numbers<[1], [0], [0], [1], [0, 0, 1, 1], [], []>} : vector<10x32xbf16>, vector<32x128xbf16>, vector<10x128xf32> -> vector<10x128xf32>
    %162 = vector.broadcast %14 : vector<1x128xf32> to vector<10x128xf32>
    %163 = arith.addf %161, %162 : vector<10x128xf32>
    %cst_52 = arith.constant 5.000000e-01 : f32
    %164 = vector.broadcast %cst_52 : f32 to vector<10x128xf32>
    %165 = arith.mulf %164, %163 : vector<10x128xf32>
    %cst_53 = arith.constant 0.707106769 : f32
    %166 = vector.broadcast %cst_53 : f32 to vector<10x128xf32>
    %167 = arith.mulf %163, %166 : vector<10x128xf32>
    %168 = math.erf %167 : vector<10x128xf32>
    %cst_54 = arith.constant 1.000000e+00 : f32
    %169 = vector.broadcast %cst_54 : f32 to vector<10x128xf32>
    %170 = arith.addf %169, %168 : vector<10x128xf32>
    %171 = arith.mulf %165, %170 : vector<10x128xf32>
    %172 = arith.truncf %171 : vector<10x128xf32> to vector<10x128xbf16>
    %c0_55 = arith.constant 0 : index
    %c0_56 = arith.constant 0 : index
    %c0_57 = arith.constant 0 : index
    %173 = vector.load %arg8[%c0_55, %c0_56, %c0_57] : memref<2x128x32xbf16, #tpu.memory_space<vmem>>, vector<1x128x32xbf16>
    %174 = vector.shape_cast %173 : vector<1x128x32xbf16> to vector<128x32xbf16>
    %cst_58 = arith.constant dense<0.000000e+00> : vector<10x32xf32>
    %175 = tpu.matmul %172, %174, %cst_58 {dimension_numbers = #tpu.dot_dimension_numbers<[1], [0], [0], [1], [0, 0, 1, 1], [], []>} : vector<10x128xbf16>, vector<128x32xbf16>, vector<10x32xf32> -> vector<10x32xf32>
    %176 = arith.addf %137, %175 : vector<10x32xf32>
    %177 = vector.broadcast %15 : vector<1x32xf32> to vector<10x32xf32>
    %178 = arith.addf %176, %177 : vector<10x32xf32>
    %c1 = arith.constant 1 : index
    %c0_59 = arith.constant 0 : index
    %c0_60 = arith.constant 0 : index
    %179 = vector.load %arg9[%c1, %c0_59, %c0_60] : memref<2x8x128xf32, #tpu.memory_space<vmem>>, vector<1x8x128xf32>
    %180 = vector.shape_cast %179 : vector<1x8x128xf32> to vector<8x128xf32>
    %181 = vector.extract_strided_slice %180 {offsets = [0, 0], sizes = [1, 32], strides = [1, 1]} : vector<8x128xf32> to vector<1x32xf32>
    %182 = vector.extract_strided_slice %180 {offsets = [1, 0], sizes = [1, 32], strides = [1, 1]} : vector<8x128xf32> to vector<1x32xf32>
    %183 = vector.extract_strided_slice %180 {offsets = [2, 0], sizes = [1, 96], strides = [1, 1]} : vector<8x128xf32> to vector<1x96xf32>
    %184 = vector.extract_strided_slice %180 {offsets = [3, 0], sizes = [1, 32], strides = [1, 1]} : vector<8x128xf32> to vector<1x32xf32>
    %185 = vector.extract_strided_slice %180 {offsets = [4, 0], sizes = [1, 32], strides = [1, 1]} : vector<8x128xf32> to vector<1x32xf32>
    %186 = vector.extract_strided_slice %180 {offsets = [5, 0], sizes = [1, 32], strides = [1, 1]} : vector<8x128xf32> to vector<1x32xf32>
    %187 = vector.extract_strided_slice %180 {offsets = [6, 0], sizes = [1, 128], strides = [1, 1]} : vector<8x128xf32> to vector<1x128xf32>
    %188 = vector.extract_strided_slice %180 {offsets = [7, 0], sizes = [1, 32], strides = [1, 1]} : vector<8x128xf32> to vector<1x32xf32>
    %cst_61 = arith.constant dense<0.000000e+00> : vector<10xf32>
    %189 = vector.multi_reduction <add>, %178, %cst_61 [1] : vector<10x32xf32> to vector<10xf32>
    %190 = vector.shape_cast %189 : vector<10xf32> to vector<10x1xf32>
    %cst_62 = arith.constant 3.200000e+01 : f32
    %191 = vector.broadcast %cst_62 : f32 to vector<10x1xf32>
    %192 = arith.divf %190, %191 : vector<10x1xf32>
    %193 = vector.broadcast %192 : vector<10x1xf32> to vector<10x32xf32>
    %194 = arith.subf %178, %193 : vector<10x32xf32>
    %195 = arith.mulf %194, %194 : vector<10x32xf32>
    %cst_63 = arith.constant dense<0.000000e+00> : vector<10xf32>
    %196 = vector.multi_reduction <add>, %195, %cst_63 [1] : vector<10x32xf32> to vector<10xf32>
    %197 = vector.shape_cast %196 : vector<10xf32> to vector<10x1xf32>
    %cst_64 = arith.constant 3.200000e+01 : f32
    %198 = vector.broadcast %cst_64 : f32 to vector<10x1xf32>
    %199 = arith.divf %197, %198 : vector<10x1xf32>
    %cst_65 = arith.constant 9.99999997E-7 : f32
    %200 = vector.broadcast %cst_65 : f32 to vector<10x1xf32>
    %201 = arith.addf %199, %200 : vector<10x1xf32>
    %202 = math.rsqrt %201 : vector<10x1xf32>
    %203 = vector.broadcast %202 : vector<10x1xf32> to vector<10x32xf32>
    %204 = arith.mulf %194, %203 : vector<10x32xf32>
    %205 = vector.broadcast %181 : vector<1x32xf32> to vector<10x32xf32>
    %206 = arith.mulf %204, %205 : vector<10x32xf32>
    %207 = vector.broadcast %182 : vector<1x32xf32> to vector<10x32xf32>
    %208 = arith.addf %206, %207 : vector<10x32xf32>
    %209 = arith.truncf %208 : vector<10x32xf32> to vector<10x32xbf16>
    %c1_66 = arith.constant 1 : index
    %c0_67 = arith.constant 0 : index
    %c0_68 = arith.constant 0 : index
    %210 = vector.load %arg5[%c1_66, %c0_67, %c0_68] : memref<2x32x96xbf16, #tpu.memory_space<vmem>>, vector<1x32x96xbf16>
    %211 = vector.shape_cast %210 : vector<1x32x96xbf16> to vector<32x96xbf16>
    %cst_69 = arith.constant dense<0.000000e+00> : vector<10x96xf32>
    %212 = tpu.matmul %209, %211, %cst_69 {dimension_numbers = #tpu.dot_dimension_numbers<[1], [0], [0], [1], [0, 0, 1, 1], [], []>} : vector<10x32xbf16>, vector<32x96xbf16>, vector<10x96xf32> -> vector<10x96xf32>
    %213 = vector.broadcast %183 : vector<1x96xf32> to vector<10x96xf32>
    %214 = arith.addf %212, %213 : vector<10x96xf32>
    %215 = vector.extract_strided_slice %214 {offsets = [0, 0], sizes = [10, 8], strides = [1, 1]} : vector<10x96xf32> to vector<10x8xf32>
    %216 = arith.truncf %215 : vector<10x8xf32> to vector<10x8xbf16>
    %217 = vector.extract_strided_slice %214 {offsets = [0, 32], sizes = [10, 8], strides = [1, 1]} : vector<10x96xf32> to vector<10x8xf32>
    %218 = arith.truncf %217 : vector<10x8xf32> to vector<10x8xbf16>
    %219 = vector.extract_strided_slice %214 {offsets = [0, 64], sizes = [10, 8], strides = [1, 1]} : vector<10x96xf32> to vector<10x8xf32>
    %220 = arith.truncf %219 : vector<10x8xf32> to vector<10x8xbf16>
    %cst_70 = arith.constant dense<0.000000e+00> : vector<10x10xf32>
    %221 = tpu.matmul %216, %218, %cst_70 {dimension_numbers = #tpu.dot_dimension_numbers<[1], [1], [0], [0], [0, 0, 1, 0], [], []>} : vector<10x8xbf16>, vector<10x8xbf16>, vector<10x10xf32> -> vector<10x10xf32>
    %cst_71 = arith.constant 0.353553385 : f32
    %222 = vector.broadcast %cst_71 : f32 to vector<10x10xf32>
    %223 = arith.mulf %221, %222 : vector<10x10xf32>
    %224 = arith.addf %223, %0 : vector<10x10xf32>
    %cst_72 = arith.constant dense<0xFF800000> : vector<10xf32>
    %225 = vector.multi_reduction <maximumf>, %224, %cst_72 [1] : vector<10x10xf32> to vector<10xf32>
    %226 = vector.shape_cast %225 : vector<10xf32> to vector<10x1xf32>
    %227 = vector.broadcast %226 : vector<10x1xf32> to vector<10x10xf32>
    %228 = arith.subf %224, %227 : vector<10x10xf32>
    %229 = math.exp %228 : vector<10x10xf32>
    %cst_73 = arith.constant dense<0.000000e+00> : vector<10xf32>
    %230 = vector.multi_reduction <add>, %229, %cst_73 [1] : vector<10x10xf32> to vector<10xf32>
    %231 = vector.shape_cast %230 : vector<10xf32> to vector<10x1xf32>
    %232 = arith.truncf %229 : vector<10x10xf32> to vector<10x10xbf16>
    %cst_74 = arith.constant dense<0.000000e+00> : vector<10x8xf32>
    %233 = tpu.matmul %232, %220, %cst_74 {dimension_numbers = #tpu.dot_dimension_numbers<[1], [0], [0], [1], [0, 0, 1, 1], [], []>} : vector<10x10xbf16>, vector<10x8xbf16>, vector<10x8xf32> -> vector<10x8xf32>
    %234 = tpu.reciprocal %231 {approx = true} : vector<10x1xf32> -> vector<10x1xf32>
    %235 = vector.broadcast %234 : vector<10x1xf32> to vector<10x8xf32>
    %236 = arith.mulf %233, %235 : vector<10x8xf32>
    %237 = vector.extract_strided_slice %214 {offsets = [0, 8], sizes = [10, 8], strides = [1, 1]} : vector<10x96xf32> to vector<10x8xf32>
    %238 = arith.truncf %237 : vector<10x8xf32> to vector<10x8xbf16>
    %239 = vector.extract_strided_slice %214 {offsets = [0, 40], sizes = [10, 8], strides = [1, 1]} : vector<10x96xf32> to vector<10x8xf32>
    %240 = arith.truncf %239 : vector<10x8xf32> to vector<10x8xbf16>
    %241 = vector.extract_strided_slice %214 {offsets = [0, 72], sizes = [10, 8], strides = [1, 1]} : vector<10x96xf32> to vector<10x8xf32>
    %242 = arith.truncf %241 : vector<10x8xf32> to vector<10x8xbf16>
    %cst_75 = arith.constant dense<0.000000e+00> : vector<10x10xf32>
    %243 = tpu.matmul %238, %240, %cst_75 {dimension_numbers = #tpu.dot_dimension_numbers<[1], [1], [0], [0], [0, 0, 1, 0], [], []>} : vector<10x8xbf16>, vector<10x8xbf16>, vector<10x10xf32> -> vector<10x10xf32>
    %cst_76 = arith.constant 0.353553385 : f32
    %244 = vector.broadcast %cst_76 : f32 to vector<10x10xf32>
    %245 = arith.mulf %243, %244 : vector<10x10xf32>
    %246 = arith.addf %245, %0 : vector<10x10xf32>
    %cst_77 = arith.constant dense<0xFF800000> : vector<10xf32>
    %247 = vector.multi_reduction <maximumf>, %246, %cst_77 [1] : vector<10x10xf32> to vector<10xf32>
    %248 = vector.shape_cast %247 : vector<10xf32> to vector<10x1xf32>
    %249 = vector.broadcast %248 : vector<10x1xf32> to vector<10x10xf32>
    %250 = arith.subf %246, %249 : vector<10x10xf32>
    %251 = math.exp %250 : vector<10x10xf32>
    %cst_78 = arith.constant dense<0.000000e+00> : vector<10xf32>
    %252 = vector.multi_reduction <add>, %251, %cst_78 [1] : vector<10x10xf32> to vector<10xf32>
    %253 = vector.shape_cast %252 : vector<10xf32> to vector<10x1xf32>
    %254 = arith.truncf %251 : vector<10x10xf32> to vector<10x10xbf16>
    %cst_79 = arith.constant dense<0.000000e+00> : vector<10x8xf32>
    %255 = tpu.matmul %254, %242, %cst_79 {dimension_numbers = #tpu.dot_dimension_numbers<[1], [0], [0], [1], [0, 0, 1, 1], [], []>} : vector<10x10xbf16>, vector<10x8xbf16>, vector<10x8xf32> -> vector<10x8xf32>
    %256 = tpu.reciprocal %253 {approx = true} : vector<10x1xf32> -> vector<10x1xf32>
    %257 = vector.broadcast %256 : vector<10x1xf32> to vector<10x8xf32>
    %258 = arith.mulf %255, %257 : vector<10x8xf32>
    %259 = vector.extract_strided_slice %214 {offsets = [0, 16], sizes = [10, 8], strides = [1, 1]} : vector<10x96xf32> to vector<10x8xf32>
    %260 = arith.truncf %259 : vector<10x8xf32> to vector<10x8xbf16>
    %261 = vector.extract_strided_slice %214 {offsets = [0, 48], sizes = [10, 8], strides = [1, 1]} : vector<10x96xf32> to vector<10x8xf32>
    %262 = arith.truncf %261 : vector<10x8xf32> to vector<10x8xbf16>
    %263 = vector.extract_strided_slice %214 {offsets = [0, 80], sizes = [10, 8], strides = [1, 1]} : vector<10x96xf32> to vector<10x8xf32>
    %264 = arith.truncf %263 : vector<10x8xf32> to vector<10x8xbf16>
    %cst_80 = arith.constant dense<0.000000e+00> : vector<10x10xf32>
    %265 = tpu.matmul %260, %262, %cst_80 {dimension_numbers = #tpu.dot_dimension_numbers<[1], [1], [0], [0], [0, 0, 1, 0], [], []>} : vector<10x8xbf16>, vector<10x8xbf16>, vector<10x10xf32> -> vector<10x10xf32>
    %cst_81 = arith.constant 0.353553385 : f32
    %266 = vector.broadcast %cst_81 : f32 to vector<10x10xf32>
    %267 = arith.mulf %265, %266 : vector<10x10xf32>
    %268 = arith.addf %267, %0 : vector<10x10xf32>
    %cst_82 = arith.constant dense<0xFF800000> : vector<10xf32>
    %269 = vector.multi_reduction <maximumf>, %268, %cst_82 [1] : vector<10x10xf32> to vector<10xf32>
    %270 = vector.shape_cast %269 : vector<10xf32> to vector<10x1xf32>
    %271 = vector.broadcast %270 : vector<10x1xf32> to vector<10x10xf32>
    %272 = arith.subf %268, %271 : vector<10x10xf32>
    %273 = math.exp %272 : vector<10x10xf32>
    %cst_83 = arith.constant dense<0.000000e+00> : vector<10xf32>
    %274 = vector.multi_reduction <add>, %273, %cst_83 [1] : vector<10x10xf32> to vector<10xf32>
    %275 = vector.shape_cast %274 : vector<10xf32> to vector<10x1xf32>
    %276 = arith.truncf %273 : vector<10x10xf32> to vector<10x10xbf16>
    %cst_84 = arith.constant dense<0.000000e+00> : vector<10x8xf32>
    %277 = tpu.matmul %276, %264, %cst_84 {dimension_numbers = #tpu.dot_dimension_numbers<[1], [0], [0], [1], [0, 0, 1, 1], [], []>} : vector<10x10xbf16>, vector<10x8xbf16>, vector<10x8xf32> -> vector<10x8xf32>
    %278 = tpu.reciprocal %275 {approx = true} : vector<10x1xf32> -> vector<10x1xf32>
    %279 = vector.broadcast %278 : vector<10x1xf32> to vector<10x8xf32>
    %280 = arith.mulf %277, %279 : vector<10x8xf32>
    %281 = vector.extract_strided_slice %214 {offsets = [0, 24], sizes = [10, 8], strides = [1, 1]} : vector<10x96xf32> to vector<10x8xf32>
    %282 = arith.truncf %281 : vector<10x8xf32> to vector<10x8xbf16>
    %283 = vector.extract_strided_slice %214 {offsets = [0, 56], sizes = [10, 8], strides = [1, 1]} : vector<10x96xf32> to vector<10x8xf32>
    %284 = arith.truncf %283 : vector<10x8xf32> to vector<10x8xbf16>
    %285 = vector.extract_strided_slice %214 {offsets = [0, 88], sizes = [10, 8], strides = [1, 1]} : vector<10x96xf32> to vector<10x8xf32>
    %286 = arith.truncf %285 : vector<10x8xf32> to vector<10x8xbf16>
    %cst_85 = arith.constant dense<0.000000e+00> : vector<10x10xf32>
    %287 = tpu.matmul %282, %284, %cst_85 {dimension_numbers = #tpu.dot_dimension_numbers<[1], [1], [0], [0], [0, 0, 1, 0], [], []>} : vector<10x8xbf16>, vector<10x8xbf16>, vector<10x10xf32> -> vector<10x10xf32>
    %cst_86 = arith.constant 0.353553385 : f32
    %288 = vector.broadcast %cst_86 : f32 to vector<10x10xf32>
    %289 = arith.mulf %287, %288 : vector<10x10xf32>
    %290 = arith.addf %289, %0 : vector<10x10xf32>
    %cst_87 = arith.constant dense<0xFF800000> : vector<10xf32>
    %291 = vector.multi_reduction <maximumf>, %290, %cst_87 [1] : vector<10x10xf32> to vector<10xf32>
    %292 = vector.shape_cast %291 : vector<10xf32> to vector<10x1xf32>
    %293 = vector.broadcast %292 : vector<10x1xf32> to vector<10x10xf32>
    %294 = arith.subf %290, %293 : vector<10x10xf32>
    %295 = math.exp %294 : vector<10x10xf32>
    %cst_88 = arith.constant dense<0.000000e+00> : vector<10xf32>
    %296 = vector.multi_reduction <add>, %295, %cst_88 [1] : vector<10x10xf32> to vector<10xf32>
    %297 = vector.shape_cast %296 : vector<10xf32> to vector<10x1xf32>
    %298 = arith.truncf %295 : vector<10x10xf32> to vector<10x10xbf16>
    %cst_89 = arith.constant dense<0.000000e+00> : vector<10x8xf32>
    %299 = tpu.matmul %298, %286, %cst_89 {dimension_numbers = #tpu.dot_dimension_numbers<[1], [0], [0], [1], [0, 0, 1, 1], [], []>} : vector<10x10xbf16>, vector<10x8xbf16>, vector<10x8xf32> -> vector<10x8xf32>
    %300 = tpu.reciprocal %297 {approx = true} : vector<10x1xf32> -> vector<10x1xf32>
    %301 = vector.broadcast %300 : vector<10x1xf32> to vector<10x8xf32>
    %302 = arith.mulf %299, %301 : vector<10x8xf32>
    %303 = tpu.concatenate %236, %258, %280, %302 in 1 : vector<10x8xf32>, vector<10x8xf32>, vector<10x8xf32>, vector<10x8xf32> -> vector<10x32xf32>
    %304 = arith.truncf %303 : vector<10x32xf32> to vector<10x32xbf16>
    %c1_90 = arith.constant 1 : index
    %c0_91 = arith.constant 0 : index
    %c0_92 = arith.constant 0 : index
    %305 = vector.load %arg6[%c1_90, %c0_91, %c0_92] : memref<2x32x32xbf16, #tpu.memory_space<vmem>>, vector<1x32x32xbf16>
    %306 = vector.shape_cast %305 : vector<1x32x32xbf16> to vector<32x32xbf16>
    %cst_93 = arith.constant dense<0.000000e+00> : vector<10x32xf32>
    %307 = tpu.matmul %304, %306, %cst_93 {dimension_numbers = #tpu.dot_dimension_numbers<[1], [0], [0], [1], [0, 0, 1, 1], [], []>} : vector<10x32xbf16>, vector<32x32xbf16>, vector<10x32xf32> -> vector<10x32xf32>
    %308 = arith.addf %178, %307 : vector<10x32xf32>
    %309 = vector.broadcast %184 : vector<1x32xf32> to vector<10x32xf32>
    %310 = arith.addf %308, %309 : vector<10x32xf32>
    %cst_94 = arith.constant dense<0.000000e+00> : vector<10xf32>
    %311 = vector.multi_reduction <add>, %310, %cst_94 [1] : vector<10x32xf32> to vector<10xf32>
    %312 = vector.shape_cast %311 : vector<10xf32> to vector<10x1xf32>
    %cst_95 = arith.constant 3.200000e+01 : f32
    %313 = vector.broadcast %cst_95 : f32 to vector<10x1xf32>
    %314 = arith.divf %312, %313 : vector<10x1xf32>
    %315 = vector.broadcast %314 : vector<10x1xf32> to vector<10x32xf32>
    %316 = arith.subf %310, %315 : vector<10x32xf32>
    %317 = arith.mulf %316, %316 : vector<10x32xf32>
    %cst_96 = arith.constant dense<0.000000e+00> : vector<10xf32>
    %318 = vector.multi_reduction <add>, %317, %cst_96 [1] : vector<10x32xf32> to vector<10xf32>
    %319 = vector.shape_cast %318 : vector<10xf32> to vector<10x1xf32>
    %cst_97 = arith.constant 3.200000e+01 : f32
    %320 = vector.broadcast %cst_97 : f32 to vector<10x1xf32>
    %321 = arith.divf %319, %320 : vector<10x1xf32>
    %cst_98 = arith.constant 9.99999997E-7 : f32
    %322 = vector.broadcast %cst_98 : f32 to vector<10x1xf32>
    %323 = arith.addf %321, %322 : vector<10x1xf32>
    %324 = math.rsqrt %323 : vector<10x1xf32>
    %325 = vector.broadcast %324 : vector<10x1xf32> to vector<10x32xf32>
    %326 = arith.mulf %316, %325 : vector<10x32xf32>
    %327 = vector.broadcast %185 : vector<1x32xf32> to vector<10x32xf32>
    %328 = arith.mulf %326, %327 : vector<10x32xf32>
    %329 = vector.broadcast %186 : vector<1x32xf32> to vector<10x32xf32>
    %330 = arith.addf %328, %329 : vector<10x32xf32>
    %331 = arith.truncf %330 : vector<10x32xf32> to vector<10x32xbf16>
    %c1_99 = arith.constant 1 : index
    %c0_100 = arith.constant 0 : index
    %c0_101 = arith.constant 0 : index
    %332 = vector.load %arg7[%c1_99, %c0_100, %c0_101] : memref<2x32x128xbf16, #tpu.memory_space<vmem>>, vector<1x32x128xbf16>
    %333 = vector.shape_cast %332 : vector<1x32x128xbf16> to vector<32x128xbf16>
    %cst_102 = arith.constant dense<0.000000e+00> : vector<10x128xf32>
    %334 = tpu.matmul %331, %333, %cst_102 {dimension_numbers = #tpu.dot_dimension_numbers<[1], [0], [0], [1], [0, 0, 1, 1], [], []>} : vector<10x32xbf16>, vector<32x128xbf16>, vector<10x128xf32> -> vector<10x128xf32>
    %335 = vector.broadcast %187 : vector<1x128xf32> to vector<10x128xf32>
    %336 = arith.addf %334, %335 : vector<10x128xf32>
    %cst_103 = arith.constant 5.000000e-01 : f32
    %337 = vector.broadcast %cst_103 : f32 to vector<10x128xf32>
    %338 = arith.mulf %337, %336 : vector<10x128xf32>
    %cst_104 = arith.constant 0.707106769 : f32
    %339 = vector.broadcast %cst_104 : f32 to vector<10x128xf32>
    %340 = arith.mulf %336, %339 : vector<10x128xf32>
    %341 = math.erf %340 : vector<10x128xf32>
    %cst_105 = arith.constant 1.000000e+00 : f32
    %342 = vector.broadcast %cst_105 : f32 to vector<10x128xf32>
    %343 = arith.addf %342, %341 : vector<10x128xf32>
    %344 = arith.mulf %338, %343 : vector<10x128xf32>
    %345 = arith.truncf %344 : vector<10x128xf32> to vector<10x128xbf16>
    %c1_106 = arith.constant 1 : index
    %c0_107 = arith.constant 0 : index
    %c0_108 = arith.constant 0 : index
    %346 = vector.load %arg8[%c1_106, %c0_107, %c0_108] : memref<2x128x32xbf16, #tpu.memory_space<vmem>>, vector<1x128x32xbf16>
    %347 = vector.shape_cast %346 : vector<1x128x32xbf16> to vector<128x32xbf16>
    %cst_109 = arith.constant dense<0.000000e+00> : vector<10x32xf32>
    %348 = tpu.matmul %345, %347, %cst_109 {dimension_numbers = #tpu.dot_dimension_numbers<[1], [0], [0], [1], [0, 0, 1, 1], [], []>} : vector<10x128xbf16>, vector<128x32xbf16>, vector<10x32xf32> -> vector<10x32xf32>
    %349 = arith.addf %310, %348 : vector<10x32xf32>
    %350 = vector.broadcast %188 : vector<1x32xf32> to vector<10x32xf32>
    %351 = arith.addf %349, %350 : vector<10x32xf32>
    %c0_110 = arith.constant 0 : index
    %c0_111 = arith.constant 0 : index
    %352 = vector.load %arg10[%c0_110, %c0_111] : memref<48x32xf32, #tpu.memory_space<vmem>>, vector<48x32xf32>
    %353 = vector.extract_strided_slice %352 {offsets = [0, 0], sizes = [1, 32], strides = [1, 1]} : vector<48x32xf32> to vector<1x32xf32>
    %354 = vector.extract_strided_slice %352 {offsets = [1, 0], sizes = [1, 32], strides = [1, 1]} : vector<48x32xf32> to vector<1x32xf32>
    %355 = vector.extract_strided_slice %352 {offsets = [2, 0], sizes = [1, 8], strides = [1, 1]} : vector<48x32xf32> to vector<1x8xf32>
    %356 = vector.extract_strided_slice %352 {offsets = [3, 0], sizes = [1, 32], strides = [1, 1]} : vector<48x32xf32> to vector<1x32xf32>
    %357 = vector.extract_strided_slice %352 {offsets = [8, 0], sizes = [32, 8], strides = [1, 1]} : vector<48x32xf32> to vector<32x8xf32>
    %358 = vector.extract_strided_slice %352 {offsets = [40, 0], sizes = [8, 32], strides = [1, 1]} : vector<48x32xf32> to vector<8x32xf32>
    %cst_112 = arith.constant dense<0.000000e+00> : vector<10xf32>
    %359 = vector.multi_reduction <add>, %351, %cst_112 [1] : vector<10x32xf32> to vector<10xf32>
    %360 = vector.shape_cast %359 : vector<10xf32> to vector<10x1xf32>
    %cst_113 = arith.constant 3.200000e+01 : f32
    %361 = vector.broadcast %cst_113 : f32 to vector<10x1xf32>
    %362 = arith.divf %360, %361 : vector<10x1xf32>
    %363 = vector.broadcast %362 : vector<10x1xf32> to vector<10x32xf32>
    %364 = arith.subf %351, %363 : vector<10x32xf32>
    %365 = arith.mulf %364, %364 : vector<10x32xf32>
    %cst_114 = arith.constant dense<0.000000e+00> : vector<10xf32>
    %366 = vector.multi_reduction <add>, %365, %cst_114 [1] : vector<10x32xf32> to vector<10xf32>
    %367 = vector.shape_cast %366 : vector<10xf32> to vector<10x1xf32>
    %cst_115 = arith.constant 3.200000e+01 : f32
    %368 = vector.broadcast %cst_115 : f32 to vector<10x1xf32>
    %369 = arith.divf %367, %368 : vector<10x1xf32>
    %cst_116 = arith.constant 9.99999997E-7 : f32
    %370 = vector.broadcast %cst_116 : f32 to vector<10x1xf32>
    %371 = arith.addf %369, %370 : vector<10x1xf32>
    %372 = math.rsqrt %371 : vector<10x1xf32>
    %373 = vector.broadcast %372 : vector<10x1xf32> to vector<10x32xf32>
    %374 = arith.mulf %364, %373 : vector<10x32xf32>
    %375 = vector.broadcast %353 : vector<1x32xf32> to vector<10x32xf32>
    %376 = arith.mulf %374, %375 : vector<10x32xf32>
    %377 = vector.broadcast %354 : vector<1x32xf32> to vector<10x32xf32>
    %378 = arith.addf %376, %377 : vector<10x32xf32>
    %379 = arith.truncf %378 : vector<10x32xf32> to vector<10x32xbf16>
    %380 = arith.truncf %357 : vector<32x8xf32> to vector<32x8xbf16>
    %cst_117 = arith.constant dense<0.000000e+00> : vector<10x8xf32>
    %381 = tpu.matmul %379, %380, %cst_117 {dimension_numbers = #tpu.dot_dimension_numbers<[1], [0], [0], [1], [0, 0, 1, 1], [], []>} : vector<10x32xbf16>, vector<32x8xbf16>, vector<10x8xf32> -> vector<10x8xf32>
    %382 = vector.broadcast %355 : vector<1x8xf32> to vector<10x8xf32>
    %383 = arith.addf %381, %382 : vector<10x8xf32>
    %cst_118 = arith.constant 5.000000e-01 : f32
    %384 = vector.broadcast %cst_118 : f32 to vector<10x8xf32>
    %385 = arith.mulf %384, %383 : vector<10x8xf32>
    %cst_119 = arith.constant 0.707106769 : f32
    %386 = vector.broadcast %cst_119 : f32 to vector<10x8xf32>
    %387 = arith.mulf %383, %386 : vector<10x8xf32>
    %388 = math.erf %387 : vector<10x8xf32>
    %cst_120 = arith.constant 1.000000e+00 : f32
    %389 = vector.broadcast %cst_120 : f32 to vector<10x8xf32>
    %390 = arith.addf %389, %388 : vector<10x8xf32>
    %391 = arith.mulf %385, %390 : vector<10x8xf32>
    %392 = tpu.concatenate %378, %391 in 1 : vector<10x32xf32>, vector<10x8xf32> -> vector<10x40xf32>
    %c0_121 = arith.constant 0 : index
    %c0_122 = arith.constant 0 : index
    %393 = vector.load %arg11[%c0_121, %c0_122] : memref<10x40xf32, #tpu.memory_space<vmem>>, vector<10x40xf32>
    tpu.vector_store %arg11[%c0_121, %c0_122], %392 {strides = array<i32>} : memref<10x40xf32, #tpu.memory_space<vmem>>, vector<10x40xf32>,
    %394 = arith.truncf %391 : vector<10x8xf32> to vector<10x8xbf16>
    %395 = arith.truncf %358 : vector<8x32xf32> to vector<8x32xbf16>
    %cst_123 = arith.constant dense<0.000000e+00> : vector<10x32xf32>
    %396 = tpu.matmul %394, %395, %cst_123 {dimension_numbers = #tpu.dot_dimension_numbers<[1], [0], [0], [1], [0, 0, 1, 1], [], []>} : vector<10x8xbf16>, vector<8x32xbf16>, vector<10x32xf32> -> vector<10x32xf32>
    %397 = vector.broadcast %356 : vector<1x32xf32> to vector<10x32xf32>
    %398 = arith.addf %396, %397 : vector<10x32xf32>
    %cst_124 = arith.constant 5.000000e-01 : f32
    %399 = vector.broadcast %cst_124 : f32 to vector<10x32xf32>
    %400 = arith.mulf %399, %398 : vector<10x32xf32>
    %cst_125 = arith.constant 0.707106769 : f32
    %401 = vector.broadcast %cst_125 : f32 to vector<10x32xf32>
    %402 = arith.mulf %398, %401 : vector<10x32xf32>
    %403 = math.erf %402 : vector<10x32xf32>
    %cst_126 = arith.constant 1.000000e+00 : f32
    %404 = vector.broadcast %cst_126 : f32 to vector<10x32xf32>
    %405 = arith.addf %404, %403 : vector<10x32xf32>
    %406 = arith.mulf %400, %405 : vector<10x32xf32>
    %407 = tpu.iota {dimensions = array<i32: 0>} : vector<10x32xi32>
    %c0_i32 = arith.constant 0 : i32
    %408 = vector.broadcast %c0_i32 : i32 to vector<10x32xi32>
    %409 = arith.cmpi sge, %407, %408 : vector<10x32xi32>
    %c5_i32 = arith.constant 5 : i32
    %410 = vector.broadcast %c5_i32 : i32 to vector<10x32xi32>
    %411 = arith.cmpi slt, %407, %410 : vector<10x32xi32>
    %412 = arith.andi %409, %411 : vector<10x32xi1>
    %cst_127 = arith.constant -1.000000e+30 : f32
    %413 = vector.broadcast %cst_127 : f32 to vector<10x32xf32>
    %414 = arith.select %412, %406, %413 : vector<10x32xi1>, vector<10x32xf32>
    %cst_128 = arith.constant dense<0xFF800000> : vector<32xf32>
    %415 = vector.multi_reduction <maximumf>, %414, %cst_128 [0] : vector<10x32xf32> to vector<32xf32>
    %416 = vector.shape_cast %415 : vector<32xf32> to vector<1x32xf32>
    %c5_i32_129 = arith.constant 5 : i32
    %417 = vector.broadcast %c5_i32_129 : i32 to vector<10x32xi32>
    %418 = arith.cmpi sge, %407, %417 : vector<10x32xi32>
    %c10_i32 = arith.constant 10 : i32
    %419 = vector.broadcast %c10_i32 : i32 to vector<10x32xi32>
    %420 = arith.cmpi slt, %407, %419 : vector<10x32xi32>
    %421 = arith.andi %418, %420 : vector<10x32xi1>
    %cst_130 = arith.constant -1.000000e+30 : f32
    %422 = vector.broadcast %cst_130 : f32 to vector<10x32xf32>
    %423 = arith.select %421, %406, %422 : vector<10x32xi1>, vector<10x32xf32>
    %cst_131 = arith.constant dense<0xFF800000> : vector<32xf32>
    %424 = vector.multi_reduction <maximumf>, %423, %cst_131 [0] : vector<10x32xf32> to vector<32xf32>
    %425 = vector.shape_cast %424 : vector<32xf32> to vector<1x32xf32>
    %426 = tpu.concatenate %416, %425 in 0 : vector<1x32xf32>, vector<1x32xf32> -> vector<2x32xf32>
    %c0_132 = arith.constant 0 : index
    %c0_133 = arith.constant 0 : index
    %427 = vector.load %arg12[%c0_132, %c0_133] : memref<2x32xf32, #tpu.memory_space<vmem>>, vector<2x32xf32>
    tpu.vector_store %arg12[%c0_132, %c0_133], %426 {strides = array<i32>} : memref<2x32xf32, #tpu.memory_space<vmem>>, vector<2x32xf32>,
    return
  }
  func.func @transform_0(%arg0: i32) -> (i32, i32) {
    %c0_i32 = arith.constant 0 : i32
    %c0_i32_0 = arith.constant 0 : i32
    %c0_i32_1 = arith.constant 0 : i32
    return %c0_i32, %c0_i32_0 : i32, i32
  }
  func.func @transform_1(%arg0: i32) -> (i32, i32) {
    %c0_i32 = arith.constant 0 : i32
    %c0_i32_0 = arith.constant 0 : i32
    %c0_i32_1 = arith.constant 0 : i32
    return %c0_i32, %c0_i32_0 : i32, i32
  }
  func.func @transform_2(%arg0: i32) -> (i32, i32) {
    %c0_i32 = arith.constant 0 : i32
    %c0_i32_0 = arith.constant 0 : i32
    %c0_i32_1 = arith.constant 0 : i32
    return %c0_i32, %c0_i32_0 : i32, i32
  }
  func.func @transform_3(%arg0: i32) -> (i32, i32) {
    %c0_i32 = arith.constant 0 : i32
    %c0_i32_0 = arith.constant 0 : i32
    %c0_i32_1 = arith.constant 0 : i32
    return %c0_i32, %c0_i32_0 : i32, i32
  }
  func.func @transform_4(%arg0: i32) -> (i32, i32, i32) {
    %c0_i32 = arith.constant 0 : i32
    %c0_i32_0 = arith.constant 0 : i32
    %c0_i32_1 = arith.constant 0 : i32
    %c0_i32_2 = arith.constant 0 : i32
    return %c0_i32, %c0_i32_0, %c0_i32_1 : i32, i32, i32
  }
  func.func @transform_5(%arg0: i32) -> (i32, i32, i32) {
    %c0_i32 = arith.constant 0 : i32
    %c0_i32_0 = arith.constant 0 : i32
    %c0_i32_1 = arith.constant 0 : i32
    %c0_i32_2 = arith.constant 0 : i32
    return %c0_i32, %c0_i32_0, %c0_i32_1 : i32, i32, i32
  }
  func.func @transform_6(%arg0: i32) -> (i32, i32, i32) {
    %c0_i32 = arith.constant 0 : i32
    %c0_i32_0 = arith.constant 0 : i32
    %c0_i32_1 = arith.constant 0 : i32
    %c0_i32_2 = arith.constant 0 : i32
    return %c0_i32, %c0_i32_0, %c0_i32_1 : i32, i32, i32
  }
  func.func @transform_7(%arg0: i32) -> (i32, i32, i32) {
    %c0_i32 = arith.constant 0 : i32
    %c0_i32_0 = arith.constant 0 : i32
    %c0_i32_1 = arith.constant 0 : i32
    %c0_i32_2 = arith.constant 0 : i32
    return %c0_i32, %c0_i32_0, %c0_i32_1 : i32, i32, i32
  }
  func.func @transform_8(%arg0: i32) -> (i32, i32, i32) {
    %c0_i32 = arith.constant 0 : i32
    %c0_i32_0 = arith.constant 0 : i32
    %c0_i32_1 = arith.constant 0 : i32
    %c0_i32_2 = arith.constant 0 : i32
    return %c0_i32, %c0_i32_0, %c0_i32_1 : i32, i32, i32
  }
  func.func @transform_9(%arg0: i32) -> (i32, i32) {
    %c0_i32 = arith.constant 0 : i32
    %c0_i32_0 = arith.constant 0 : i32
    %c0_i32_1 = arith.constant 0 : i32
    return %c0_i32, %c0_i32_0 : i32, i32
  }
  func.func @transform_10(%arg0: i32) -> (i32, i32) {
    %c0_i32 = arith.constant 0 : i32
    %c0_i32_0 = arith.constant 0 : i32
    %c0_i32_1 = arith.constant 0 : i32
    return %c0_i32, %c0_i32_0 : i32, i32
  }
  func.func @transform_11(%arg0: i32) -> (i32, i32) {
    %c0_i32 = arith.constant 0 : i32
    %c0_i32_0 = arith.constant 0 : i32
    %c0_i32_1 = arith.constant 0 : i32
    return %c0_i32, %c0_i32_0 : i32, i32
  }
}

</mosaic_0001>

<llo_original>
// kernel: tile.9
$region0: #{tile.9}
  %s0 = inlined_call_operand.vmem [shape: f32[2,5,32], index: 0, kind: input, shape index: {}]
  %s1 = inlined_call_operand.vmem [shape: f32[10,32], index: 1, kind: output, shape index: {}]
  %v2 = vld [vmem:[%s0] sm:$0x1f]
  %vm3 = vcmask 261120
  %4 = vst.msk [vmem:[%s1] sm:$0x1f] %vm3, %v2
  %s5 = scalar_lea.vmem %s0, 8
  %v6 = vld [vmem:[%s5] sm:$0x1f]
  %vm7 = vcmask 261120
  %s8 = scalar_lea.vmem %s1, 5
  %9 = vst.msk [vmem:[%s8] sm:$0x1f] %vm7, %v6

// kernel: attribute_transformer4_forward.1
$region0: #{attribute_transformer4_forward.1}
  #allocation0 [shape = 'u32[]', space=smem, size = 0x4, offset = 0x4, fixed_abs, tag = 'smem constant byte address 0x4 - core index']
  #allocation1 [shape = 'u32[144,128]{1,0:T(1,128)}', space=vmem, size = 0x12000, scoped, tag = 'internal scratch']
  %s0 = inlined_call_operand.vmem [shape: bf16[10,192], index: 0, kind: input, shape index: {}]
  %s1 = inlined_call_operand.vmem [shape: f32[10,32], index: 1, kind: input, shape index: {}]
  %s2 = inlined_call_operand.vmem [shape: f32[10,10], index: 2, kind: input, shape index: {}]
  %s3 = inlined_call_operand.vmem [shape: bf16[192,32], index: 3, kind: input, shape index: {}]
  %s4 = inlined_call_operand.vmem [shape: bf16[2,32,96], index: 4, kind: input, shape index: {}]
  %s5 = inlined_call_operand.vmem [shape: bf16[2,32,32], index: 5, kind: input, shape index: {}]
  %s6 = inlined_call_operand.vmem [shape: bf16[2,32,128], index: 6, kind: input, shape index: {}]
  %s7 = inlined_call_operand.vmem [shape: bf16[2,128,32], index: 7, kind: input, shape index: {}]
  %s8 = inlined_call_operand.vmem [shape: f32[2,8,128], index: 8, kind: input, shape index: {}]
  %s9 = inlined_call_operand.vmem [shape: f32[48,32], index: 9, kind: input, shape index: {}]
  %s10 = inlined_call_operand.vmem [shape: f32[10,40], index: 10, kind: output, shape index: {0}]
  %s11 = inlined_call_operand.hbm [shape: f32[2,32], index: 11, kind: output, shape index: {1}]
  %12 = xla_tuple %s10, %s11
  %s13 = sld [smem:[#allocation0]]
  $region58: #{attribute_transformer4_forward.1} parent=0
    _
  %s15 = ssub.s32 1, %s13
  %s16 = scalar_select 0, %s15, %s13
  $region1: #{attribute_transformer4_forward.1} parent=0
    #allocation2 [shape = 'u8[1024]{0}', space=vmem, size = 0x400, scoped, tag = 'output window, operand 1, single buffered']
    #allocation3 [shape = 's32[1]{0}', space=sflag, size = 0x4, scoped, tag = 'scoped memory for attribute_transformer4_forward.1']
    %17 = vsyncpa [#allocation3], 0
    // Predicated region
    $region2: #{attribute_transformer4_forward.1} parent=1 // pred_check
      _
    $region3: #{attribute_transformer4_forward.1} parent=1 // pred_check_branch
      %19 = sbr.rel (0) target = $region5
    $region4: #{attribute_transformer4_forward.1} parent=1 // pred_region
      _
    $region5: #{attribute_transformer4_forward.1} parent=1 // pred_fallthru
      _
    // Predicated region
    $region6: #{attribute_transformer4_forward.1} parent=1 // pred_check
      _
    $region7: #{attribute_transformer4_forward.1} parent=1 // pred_check_branch
      %21 = sbr.rel (0) target = $region9
    $region8: #{attribute_transformer4_forward.1} parent=1 // pred_region
      _
    $region9: #{attribute_transformer4_forward.1} parent=1 // pred_fallthru
      _
    // Predicated region
    $region10: #{attribute_transformer4_forward.1} parent=1 // pred_check
      _
    $region11: #{attribute_transformer4_forward.1} parent=1 // pred_check_branch
      %23 = sbr.rel (0) target = $region13
    $region12: #{attribute_transformer4_forward.1} parent=1 // pred_region
      _
    $region13: #{attribute_transformer4_forward.1} parent=1 // pred_fallthru
      _
    // Predicated region
    $region14: #{attribute_transformer4_forward.1} parent=1 // pred_check
      _
    $region15: #{attribute_transformer4_forward.1} parent=1 // pred_check_branch
      %25 = sbr.rel (0) target = $region17
    $region16: #{attribute_transformer4_forward.1} parent=1 // pred_region
      _
    $region17: #{attribute_transformer4_forward.1} parent=1 // pred_fallthru
      _
    // Predicated region
    $region18: #{attribute_transformer4_forward.1} parent=1 // pred_check
      _
    $region19: #{attribute_transformer4_forward.1} parent=1 // pred_check_branch
      %27 = sbr.rel (0) target = $region21
    $region20: #{attribute_transformer4_forward.1} parent=1 // pred_region
      _
    $region21: #{attribute_transformer4_forward.1} parent=1 // pred_fallthru
      _
    // Predicated region
    $region22: #{attribute_transformer4_forward.1} parent=1 // pred_check
      _
    $region23: #{attribute_transformer4_forward.1} parent=1 // pred_check_branch
      %29 = sbr.rel (0) target = $region25
    $region24: #{attribute_transformer4_forward.1} parent=1 // pred_region
      _
    $region25: #{attribute_transformer4_forward.1} parent=1 // pred_fallthru
      _
    // Predicated region
    $region26: #{attribute_transformer4_forward.1} parent=1 // pred_check
      _
    $region27: #{attribute_transformer4_forward.1} parent=1 // pred_check_branch
      %31 = sbr.rel (0) target = $region29
    $region28: #{attribute_transformer4_forward.1} parent=1 // pred_region
      _
    $region29: #{attribute_transformer4_forward.1} parent=1 // pred_fallthru
      _
    // Predicated region
    $region30: #{attribute_transformer4_forward.1} parent=1 // pred_check
      _
    $region31: #{attribute_transformer4_forward.1} parent=1 // pred_check_branch
      %33 = sbr.rel (0) target = $region33
    $region32: #{attribute_transformer4_forward.1} parent=1 // pred_region
      _
    $region33: #{attribute_transformer4_forward.1} parent=1 // pred_fallthru
      _
    // Predicated region
    $region34: #{attribute_transformer4_forward.1} parent=1 // pred_check
      _
    $region35: #{attribute_transformer4_forward.1} parent=1 // pred_check_branch
      %35 = sbr.rel (0) target = $region37
    $region36: #{attribute_transformer4_forward.1} parent=1 // pred_region
      _
    $region37: #{attribute_transformer4_forward.1} parent=1 // pred_fallthru
      _
    // Predicated region
    $region38: #{attribute_transformer4_forward.1} parent=1 // pred_check
      _
    $region39: #{attribute_transformer4_forward.1} parent=1 // pred_check_branch
      %37 = sbr.rel (0) target = $region41
    $region40: #{attribute_transformer4_forward.1} parent=1 // pred_region
      _
    $region41: #{attribute_transformer4_forward.1} parent=1 // pred_fallthru
      _
    %v39 = vld [vmem:[%s2] sm:$0xff]
    %v40 = vld [vmem:[%s2 + $0x8] sm:$0x3]
    %v41 = vld [vmem:[%s1] sm:$0xff]
    %v42 = vld [vmem:[%s1 + $0x8] sm:$0x3]
    %v43 = vld [vmem:[%s0] sm:$0xff]
    %v44 = vld [vmem:[%s0 + $0x8] sm:$0x11]
    %v45 = vld [vmem:[%s3] sm:$0xf]
    %v46 = vld [vmem:[%s3 + $0x4] sm:$0xf]
    %v47 = vld [vmem:[%s3 + $0x8] sm:$0xf]
    %v48 = vld [vmem:[%s3 + $0xc] sm:$0xf]
    %v49 = vld [vmem:[%s3 + $0x10] sm:$0xf]
    %v50 = vld [vmem:[%s3 + $0x14] sm:$0xf]
    %v51 = vld [vmem:[%s3 + $0x18] sm:$0xf]
    %v52 = vld [vmem:[%s3 + $0x1c] sm:$0xf]
    %v53 = vld [vmem:[%s3 + $0x20] sm:$0xf]
    %v54 = vld [vmem:[%s3 + $0x24] sm:$0xf]
    %v55 = vld [vmem:[%s3 + $0x28] sm:$0xf]
    %v56 = vld [vmem:[%s3 + $0x2c] sm:$0xf]
    %v57 = vld [vmem:[%s3 + $0x30] sm:$0xf]
    %v58 = vld [vmem:[%s3 + $0x34] sm:$0xf]
    %v59 = vld [vmem:[%s3 + $0x38] sm:$0xf]
    %v60 = vld [vmem:[%s3 + $0x3c] sm:$0xf]
    %v61 = vld [vmem:[%s3 + $0x40] sm:$0xf]
    %v62 = vld [vmem:[%s3 + $0x44] sm:$0xf]
    %v63 = vld [vmem:[%s3 + $0x48] sm:$0xf]
    %v64 = vld [vmem:[%s3 + $0x4c] sm:$0xf]
    %v65 = vld [vmem:[%s3 + $0x50] sm:$0xf]
    %v66 = vld [vmem:[%s3 + $0x54] sm:$0xf]
    %v67 = vld [vmem:[%s3 + $0x58] sm:$0xf]
    %v68 = vld [vmem:[%s3 + $0x5c] sm:$0xf]
    %v71 = vunpack.c.l.b16 %v43
    %v72 = vunpack.c.h.b16 %v43
    %v73 = vunpack.c.l.b16 %v44
    %v74 = vunpack.c.h.b16 %v44
    %v75 = vpack.c.b16 %v73, %v71
    %v76 = vpack.c.b16 %v74, %v72
    %v102 = vunpack.c.l.b16 %v45
    %v103 = vunpack.c.l.b16 %v46
    %v104 = vunpack.c.l.b16 %v47
    %v105 = vunpack.c.l.b16 %v48
    %v106 = vunpack.c.l.b16 %v49
    %v107 = vunpack.c.l.b16 %v50
    %v108 = vunpack.c.l.b16 %v51
    %v109 = vunpack.c.l.b16 %v52
    %v110 = vunpack.c.l.b16 %v53
    %v111 = vunpack.c.l.b16 %v54
    %v112 = vunpack.c.l.b16 %v55
    %v113 = vunpack.c.l.b16 %v56
    %v114 = vunpack.c.l.b16 %v57
    %v115 = vunpack.c.l.b16 %v58
    %v116 = vunpack.c.l.b16 %v59
    %v117 = vunpack.c.l.b16 %v60
    %v118 = vunpack.c.l.b16 %v61
    %v119 = vunpack.c.l.b16 %v62
    %v120 = vunpack.c.l.b16 %v63
    %v121 = vunpack.c.l.b16 %v64
    %v122 = vunpack.c.l.b16 %v65
    %v123 = vunpack.c.l.b16 %v66
    %v124 = vunpack.c.l.b16 %v67
    %v125 = vunpack.c.l.b16 %v68
    %v126 = vpack.c.b16 %v103, %v102
    %v127 = vpack.c.b16 %v105, %v104
    %v128 = vpack.c.b16 %v107, %v106
    %v129 = vpack.c.b16 %v109, %v108
    %v130 = vpack.c.b16 %v111, %v110
    %v131 = vpack.c.b16 %v113, %v112
    %v132 = vpack.c.b16 %v115, %v114
    %v133 = vpack.c.b16 %v117, %v116
    %v134 = vpack.c.b16 %v119, %v118
    %v135 = vpack.c.b16 %v121, %v120
    %v136 = vpack.c.b16 %v123, %v122
    %v137 = vpack.c.b16 %v125, %v124
    %vm150 = vcmask 523264
    %v152 = vsel %vm150, %v76, 0
    %154 = vmatprep.subr.bf16.mxu0 0
    %155 = vmatpush1.bf16.msra.mxu0 %v126
    %156 = vmatprep.subr.bf16.mxu0 0
    %157 = vmatpush1.bf16.msra.mxu0 %v127
    %158 = vmatprep.subr.bf16.mxu0 0
    %159 = vmatpush1.bf16.msra.mxu0 %v128
    %160 = vmatprep.subr.bf16.mxu0 0
    %161 = vmatpush1.bf16.msra.mxu0 %v129
    %162 = vmatprep.subr.bf16.mxu0 0
    %163 = vmatpush1.bf16.msra.mxu0 %v130
    %164 = vmatprep.subr.bf16.mxu0 0
    %165 = vmatpush1.bf16.msra.mxu0 %v131
    %166 = vmatprep.subr.bf16.mxu0 0
    %167 = vmatpush1.bf16.msra.mxu0 %v132
    %168 = vmatprep.subr.bf16.mxu0 0
    %169 = vmatpush1.bf16.msra.mxu0 %v133
    %170 = vmatprep.subr.bf16.mxu0 0
    %171 = vmatpush1.bf16.msra.mxu0 %v134
    %172 = vmatprep.subr.bf16.mxu0 0
    %173 = vmatpush1.bf16.msra.mxu0 %v135
    %174 = vmatprep.subr.bf16.mxu0 0
    %175 = vmatpush1.bf16.msra.mxu0 %v136
    %176 = vmatprep.subr.bf16.mxu0 0
    %177 = vmatpush1.bf16.msra.mxu0 %v137
    %178 = vmatprep.subr.bf16.mxu0 0
    %179 = vmatpush1.bf16.msra.mxu0 0
    %180 = vmatprep.subr.bf16.mxu0 0
    %181 = vmatpush1.bf16.msra.mxu0 0
    %182 = vmatprep.subr.bf16.mxu0 0
    %183 = vmatpush1.bf16.msra.mxu0 0
    %184 = vmatprep.subr.bf16.mxu0 0
    %185 = vmatpush1.bf16.msra.mxu0 0
    %186 = vmatprep.mubr.bf16.mxu0 %v152
    %187 = vmatmul.mubr.bf16.gmra.mrb[0].mxu0 %v75
    %v188 = vpop.f32.mrb[0].mxu0
    %v189 = vadd.f32 0.0, %v188
    %v190 = vpop.f32.mrb[0].mxu0
    %v191 = vpop.f32.mrb[0].mxu0
    %v192 = vadd.f32 0.0, %v191
    %v193 = vpop.f32.mrb[0].mxu0
    %194 = vdwg.mxu0
    %v195 = vadd.f32 %v41, %v189
    %v196 = vadd.f32 %v42, %v192
    %v197 = vld [vmem:[%s8] sm:$0xff]
    %vm198 = vcmask 261120
    %v199 = vsel %vm198, %v195, 0.0
    %200 = vadd.xlane.f32.xlu0 %v199
    %v201 = vpop.xlane.xlu0 %200
    %vm202 = vcmask 254976
    %v203 = vsel %vm202, %v196, 0.0
    %204 = vadd.xlane.f32.xlu0 %v203
    %v205 = vpop.xlane.xlu0 %204
    %v206 = vrcp.pop 32.0
    %v207 = vmul.f32 %v201, %v206
    %v208 = vmul.f32 %v205, %v206
    %v209 = vsub.f32 %v195, %v207
    %v210 = vsub.f32 %v196, %v208
    %v211 = vmul.f32 %v209, %v209
    %v212 = vmul.f32 %v210, %v210
    %v213 = vsel %vm198, %v211, 0.0
    %214 = vadd.xlane.f32.xlu0 %v213
    %v215 = vpop.xlane.xlu0 %214
    %v216 = vsel %vm202, %v212, 0.0
    %217 = vadd.xlane.f32.xlu0 %v216
    %v218 = vpop.xlane.xlu0 %217
    %v219 = vmul.f32 %v215, %v206
    %v220 = vmul.f32 %v218, %v206
    %v221 = vadd.f32 %v219, 1e-06
    %v222 = vadd.f32 %v220, 1e-06
    %v223 = vrsqrt.pop %v221
    %v224 = vrsqrt.pop %v222
    %v225 = vmul.f32 %v209, %v223
    %v226 = vmul.f32 %v210, %v224
    %v227 = vlaneseq
    %v228 = vshrl.u32 %v227, 7
    %v229 = vsub.s32 0, %v228
    %v230 = vrot.slane %v197, %v229
    %v231 = vmul.f32 %v225, %v230
    %v232 = vmul.f32 %v226, %v230
    %v233 = vlaneseq
    %v234 = vshrl.u32 %v233, 7
    %v235 = vsub.s32 1, %v234
    %v236 = vrot.slane %v197, %v235
    %v237 = vadd.f32 %v231, %v236
    %v238 = vadd.f32 %v232, %v236
    %v239 = vpack.c.bf16 %v238, %v237
    %v240 = vld [vmem:[%s4] sm:$0xf]
    %v241 = vld [vmem:[%s4 + $0x4] sm:$0xf]
    %v242 = vld [vmem:[%s4 + $0x8] sm:$0xf]
    %v243 = vld [vmem:[%s4 + $0xc] sm:$0xf]
    %v244 = vlaneseq
    %v245 = vshrl.u32 %v244, 7
    %v246 = vsub.s32 2, %v245
    %v247 = vrot.slane %v197, %v246
    %v252 = vunpack.c.l.b16 %v240
    %v253 = vunpack.c.l.b16 %v241
    %v254 = vunpack.c.l.b16 %v242
    %v255 = vunpack.c.l.b16 %v243
    %v256 = vpack.c.b16 %v253, %v252
    %v257 = vpack.c.b16 %v255, %v254
    %v261 = vsel %vm198, %v239, 0
    %263 = vmatprep.subr.bf16.mxu0 0
    %264 = vmatpush1.bf16.msra.mxu0 %v256
    %265 = vmatprep.subr.bf16.mxu0 0
    %266 = vmatpush1.bf16.msra.mxu0 %v257
    %267 = vmatprep.subr.bf16.mxu0 0
    %268 = vmatpush1.bf16.msra.mxu0 0
    %269 = vmatprep.subr.bf16.mxu0 0
    %270 = vmatpush1.bf16.msra.mxu0 0
    %271 = vmatprep.subr.bf16.mxu0 0
    %272 = vmatpush1.bf16.msra.mxu0 0
    %273 = vmatprep.subr.bf16.mxu0 0
    %274 = vmatpush1.bf16.msra.mxu0 0
    %275 = vmatprep.subr.bf16.mxu0 0
    %276 = vmatpush1.bf16.msra.mxu0 0
    %277 = vmatprep.subr.bf16.mxu0 0
    %278 = vmatpush1.bf16.msra.mxu0 0
    %279 = vmatprep.subr.bf16.mxu0 0
    %280 = vmatpush1.bf16.msra.mxu0 0
    %281 = vmatprep.subr.bf16.mxu0 0
    %282 = vmatpush1.bf16.msra.mxu0 0
    %283 = vmatprep.subr.bf16.mxu0 0
    %284 = vmatpush1.bf16.msra.mxu0 0
    %285 = vmatprep.subr.bf16.mxu0 0
    %286 = vmatpush1.bf16.msra.mxu0 0
    %287 = vmatprep.subr.bf16.mxu0 0
    %288 = vmatpush1.bf16.msra.mxu0 0
    %289 = vmatprep.subr.bf16.mxu0 0
    %290 = vmatpush1.bf16.msra.mxu0 0
    %291 = vmatprep.subr.bf16.mxu0 0
    %292 = vmatpush1.bf16.msra.mxu0 0
    %293 = vmatprep.subr.bf16.mxu0 0
    %294 = vmatpush1.bf16.msra.mxu0 0
    %295 = vmatprep.mubr.bf16.mxu0 0
    %296 = vmatmul.mubr.bf16.gmra.mrb[0].mxu0 %v261
    %v297 = vpop.f32.mrb[0].mxu0
    %v298 = vadd.f32 %v247, %v297
    %v299 = vpop.f32.mrb[0].mxu0
    %v300 = vpop.f32.mrb[0].mxu0
    %v301 = vadd.f32 %v247, %v300
    %v302 = vpop.f32.mrb[0].mxu0
    %303 = vdwg.mxu0
    %v304 = vpack.c.bf16 %v301, %v298
    %306 = vrot.lane.b32.xlu0 %v304, 96
    %v307 = vpop.permute.xlu0 %306
    %vm308 = vcmask 64512
    %v310 = vsel %vm308, %v304, 0
    %v313 = vsel %vm308, %v307, 0
    %315 = vmatprep.subr.bf16.mxu0 0
    %316 = vmatpush1.bf16.xpose.msra.mxu0 %v313
    %317 = vmatprep.subr.bf16.mxu0 0
    %318 = vmatpush1.bf16.xpose.msra.mxu0 0
    %319 = vmatprep.subr.bf16.mxu0 0
    %320 = vmatpush1.bf16.xpose.msra.mxu0 0
    %321 = vmatprep.subr.bf16.mxu0 0
    %322 = vmatpush1.bf16.xpose.msra.mxu0 0
    %323 = vmatprep.subr.bf16.mxu0 0
    %324 = vmatpush1.bf16.xpose.msra.mxu0 0
    %325 = vmatprep.subr.bf16.mxu0 0
    %326 = vmatpush1.bf16.xpose.msra.mxu0 0
    %327 = vmatprep.subr.bf16.mxu0 0
    %328 = vmatpush1.bf16.xpose.msra.mxu0 0
    %329 = vmatprep.subr.bf16.mxu0 0
    %330 = vmatpush1.bf16.xpose.msra.mxu0 0
    %331 = vmatprep.subr.bf16.mxu0 0
    %332 = vmatpush1.bf16.xpose.msra.mxu0 0
    %333 = vmatprep.subr.bf16.mxu0 0
    %334 = vmatpush1.bf16.xpose.msra.mxu0 0
    %335 = vmatprep.subr.bf16.mxu0 0
    %336 = vmatpush1.bf16.xpose.msra.mxu0 0
    %337 = vmatprep.subr.bf16.mxu0 0
    %338 = vmatpush1.bf16.xpose.msra.mxu0 0
    %339 = vmatprep.subr.bf16.mxu0 0
    %340 = vmatpush1.bf16.xpose.msra.mxu0 0
    %341 = vmatprep.subr.bf16.mxu0 0
    %342 = vmatpush1.bf16.xpose.msra.mxu0 0
    %343 = vmatprep.subr.bf16.mxu0 0
    %344 = vmatpush1.bf16.xpose.msra.mxu0 0
    %345 = vmatprep.subr.bf16.mxu0 0
    %346 = vmatpush1.bf16.xpose.msra.mxu0 0
    %347 = vmatprep.mubr.bf16.mxu0 0
    %348 = vmatmul.mubr.bf16.gmra.mrb[0].mxu0 %v310
    %v349 = vpop.f32.mrb[0].mxu0
    %v350 = vadd.f32 0.0, %v349
    %v351 = vpop.f32.mrb[0].mxu0
    %v352 = vpop.f32.mrb[0].mxu0
    %v353 = vadd.f32 0.0, %v352
    %v354 = vpop.f32.mrb[0].mxu0
    %355 = vdwg.mxu0
    %v356 = vmul.f32 %v350, 0.35355338
    %v357 = vmul.f32 %v353, 0.35355338
    %v358 = vadd.f32 %v356, %v39
    %v359 = vadd.f32 %v357, %v40
    %vm360 = vcmask 80896
    %v361 = vsel %vm360, %v358, -inf
    %362 = vmax.xlane.f32.xlu0 %v361
    %v363 = vpop.xlane.xlu0 %362
    %vm364 = vcmask 74752
    %v365 = vsel %vm364, %v359, -inf
    %366 = vmax.xlane.f32.xlu0 %v365
    %v367 = vpop.xlane.xlu0 %366
    %v368 = vsub.f32 %v358, %v363
    %v369 = vsub.f32 %v359, %v367
    %v370 = vmul.f32 %v368, 1.442695
    %v371 = vpow.pop %v370
    %v372 = vmul.f32 %v369, 1.442695
    %v373 = vpow.pop %v372
    %v374 = vsel %vm360, %v371, 0.0
    %375 = vadd.xlane.f32.xlu0 %v374
    %v376 = vpop.xlane.xlu0 %375
    %v377 = vsel %vm364, %v373, 0.0
    %378 = vadd.xlane.f32.xlu0 %v377
    %v379 = vpop.xlane.xlu0 %378
    %v380 = vpack.c.bf16 %v373, %v371
    %381 = vrot.lane.b32.xlu0 %v304, 64
    %v382 = vpop.permute.xlu0 %381
    %v384 = vsel %vm360, %v380, 0
    %vm386 = vcmask 1044480
    %v388 = vsel %vm386, %v382, 0
    %390 = vmatprep.subr.bf16.mxu0 0
    %391 = vmatpush1.bf16.msra.mxu0 %v388
    %392 = vmatprep.subr.bf16.mxu0 0
    %393 = vmatpush1.bf16.msra.mxu0 0
    %394 = vmatprep.subr.bf16.mxu0 0
    %395 = vmatpush1.bf16.msra.mxu0 0
    %396 = vmatprep.subr.bf16.mxu0 0
    %397 = vmatpush1.bf16.msra.mxu0 0
    %398 = vmatprep.subr.bf16.mxu0 0
    %399 = vmatpush1.bf16.msra.mxu0 0
    %400 = vmatprep.subr.bf16.mxu0 0
    %401 = vmatpush1.bf16.msra.mxu0 0
    %402 = vmatprep.subr.bf16.mxu0 0
    %403 = vmatpush1.bf16.msra.mxu0 0
    %404 = vmatprep.subr.bf16.mxu0 0
    %405 = vmatpush1.bf16.msra.mxu0 0
    %406 = vmatprep.subr.bf16.mxu0 0
    %407 = vmatpush1.bf16.msra.mxu0 0
    %408 = vmatprep.subr.bf16.mxu0 0
    %409 = vmatpush1.bf16.msra.mxu0 0
    %410 = vmatprep.subr.bf16.mxu0 0
    %411 = vmatpush1.bf16.msra.mxu0 0
    %412 = vmatprep.subr.bf16.mxu0 0
    %413 = vmatpush1.bf16.msra.mxu0 0
    %414 = vmatprep.subr.bf16.mxu0 0
    %415 = vmatpush1.bf16.msra.mxu0 0
    %416 = vmatprep.subr.bf16.mxu0 0
    %417 = vmatpush1.bf16.msra.mxu0 0
    %418 = vmatprep.subr.bf16.mxu0 0
    %419 = vmatpush1.bf16.msra.mxu0 0
    %420 = vmatprep.subr.bf16.mxu0 0
    %421 = vmatpush1.bf16.msra.mxu0 0
    %422 = vmatprep.mubr.bf16.mxu0 0
    %423 = vmatmul.mubr.bf16.gmra.mrb[0].mxu0 %v384
    %v424 = vpop.f32.mrb[0].mxu0
    %v425 = vadd.f32 0.0, %v424
    %v426 = vpop.f32.mrb[0].mxu0
    %v427 = vpop.f32.mrb[0].mxu0
    %v428 = vadd.f32 0.0, %v427
    %v429 = vpop.f32.mrb[0].mxu0
    %430 = vdwg.mxu0
    %v431 = vrcp.pop %v376
    %v432 = vrcp.pop %v379
    %v433 = vmul.f32 %v425, %v431
    %v434 = vmul.f32 %v428, %v432
    %435 = vrot.lane.b32.xlu0 %v304, 120
    %v436 = vpop.permute.xlu0 %435
    %437 = vrot.lane.b32.xlu0 %v304, 88
    %v438 = vpop.permute.xlu0 %437
    %v440 = vsel %vm308, %v436, 0
    %v443 = vsel %vm308, %v438, 0
    %445 = vmatprep.subr.bf16.mxu0 0
    %446 = vmatpush1.bf16.xpose.msra.mxu0 %v443
    %447 = vmatprep.subr.bf16.mxu0 0
    %448 = vmatpush1.bf16.xpose.msra.mxu0 0
    %449 = vmatprep.subr.bf16.mxu0 0
    %450 = vmatpush1.bf16.xpose.msra.mxu0 0
    %451 = vmatprep.subr.bf16.mxu0 0
    %452 = vmatpush1.bf16.xpose.msra.mxu0 0
    %453 = vmatprep.subr.bf16.mxu0 0
    %454 = vmatpush1.bf16.xpose.msra.mxu0 0
    %455 = vmatprep.subr.bf16.mxu0 0
    %456 = vmatpush1.bf16.xpose.msra.mxu0 0
    %457 = vmatprep.subr.bf16.mxu0 0
    %458 = vmatpush1.bf16.xpose.msra.mxu0 0
    %459 = vmatprep.subr.bf16.mxu0 0
    %460 = vmatpush1.bf16.xpose.msra.mxu0 0
    %461 = vmatprep.subr.bf16.mxu0 0
    %462 = vmatpush1.bf16.xpose.msra.mxu0 0
    %463 = vmatprep.subr.bf16.mxu0 0
    %464 = vmatpush1.bf16.xpose.msra.mxu0 0
    %465 = vmatprep.subr.bf16.mxu0 0
    %466 = vmatpush1.bf16.xpose.msra.mxu0 0
    %467 = vmatprep.subr.bf16.mxu0 0
    %468 = vmatpush1.bf16.xpose.msra.mxu0 0
    %469 = vmatprep.subr.bf16.mxu0 0
    %470 = vmatpush1.bf16.xpose.msra.mxu0 0
    %471 = vmatprep.subr.bf16.mxu0 0
    %472 = vmatpush1.bf16.xpose.msra.mxu0 0
    %473 = vmatprep.subr.bf16.mxu0 0
    %474 = vmatpush1.bf16.xpose.msra.mxu0 0
    %475 = vmatprep.subr.bf16.mxu0 0
    %476 = vmatpush1.bf16.xpose.msra.mxu0 0
    %477 = vmatprep.mubr.bf16.mxu0 0
    %478 = vmatmul.mubr.bf16.gmra.mrb[0].mxu0 %v440
    %v479 = vpop.f32.mrb[0].mxu0
    %v480 = vadd.f32 0.0, %v479
    %v481 = vpop.f32.mrb[0].mxu0
    %v482 = vpop.f32.mrb[0].mxu0
    %v483 = vadd.f32 0.0, %v482
    %v484 = vpop.f32.mrb[0].mxu0
    %485 = vdwg.mxu0
    %v486 = vmul.f32 %v480, 0.35355338
    %v487 = vmul.f32 %v483, 0.35355338
    %v488 = vadd.f32 %v486, %v39
    %v489 = vadd.f32 %v487, %v40
    %v490 = vsel %vm360, %v488, -inf
    %491 = vmax.xlane.f32.xlu0 %v490
    %v492 = vpop.xlane.xlu0 %491
    %v493 = vsel %vm364, %v489, -inf
    %494 = vmax.xlane.f32.xlu0 %v493
    %v495 = vpop.xlane.xlu0 %494
    %v496 = vsub.f32 %v488, %v492
    %v497 = vsub.f32 %v489, %v495
    %v498 = vmul.f32 %v496, 1.442695
    %v499 = vpow.pop %v498
    %v500 = vmul.f32 %v497, 1.442695
    %v501 = vpow.pop %v500
    %v502 = vsel %vm360, %v499, 0.0
    %503 = vadd.xlane.f32.xlu0 %v502
    %v504 = vpop.xlane.xlu0 %503
    %v505 = vsel %vm364, %v501, 0.0
    %506 = vadd.xlane.f32.xlu0 %v505
    %v507 = vpop.xlane.xlu0 %506
    %v508 = vpack.c.bf16 %v501, %v499
    %509 = vrot.lane.b32.xlu0 %v304, 56
    %v510 = vpop.permute.xlu0 %509
    %v512 = vsel %vm360, %v508, 0
    %v515 = vsel %vm386, %v510, 0
    %517 = vmatprep.subr.bf16.mxu0 0
    %518 = vmatpush1.bf16.msra.mxu0 %v515
    %519 = vmatprep.subr.bf16.mxu0 0
    %520 = vmatpush1.bf16.msra.mxu0 0
    %521 = vmatprep.subr.bf16.mxu0 0
    %522 = vmatpush1.bf16.msra.mxu0 0
    %523 = vmatprep.subr.bf16.mxu0 0
    %524 = vmatpush1.bf16.msra.mxu0 0
    %525 = vmatprep.subr.bf16.mxu0 0
    %526 = vmatpush1.bf16.msra.mxu0 0
    %527 = vmatprep.subr.bf16.mxu0 0
    %528 = vmatpush1.bf16.msra.mxu0 0
    %529 = vmatprep.subr.bf16.mxu0 0
    %530 = vmatpush1.bf16.msra.mxu0 0
    %531 = vmatprep.subr.bf16.mxu0 0
    %532 = vmatpush1.bf16.msra.mxu0 0
    %533 = vmatprep.subr.bf16.mxu0 0
    %534 = vmatpush1.bf16.msra.mxu0 0
    %535 = vmatprep.subr.bf16.mxu0 0
    %536 = vmatpush1.bf16.msra.mxu0 0
    %537 = vmatprep.subr.bf16.mxu0 0
    %538 = vmatpush1.bf16.msra.mxu0 0
    %539 = vmatprep.subr.bf16.mxu0 0
    %540 = vmatpush1.bf16.msra.mxu0 0
    %541 = vmatprep.subr.bf16.mxu0 0
    %542 = vmatpush1.bf16.msra.mxu0 0
    %543 = vmatprep.subr.bf16.mxu0 0
    %544 = vmatpush1.bf16.msra.mxu0 0
    %545 = vmatprep.subr.bf16.mxu0 0
    %546 = vmatpush1.bf16.msra.mxu0 0
    %547 = vmatprep.subr.bf16.mxu0 0
    %548 = vmatpush1.bf16.msra.mxu0 0
    %549 = vmatprep.mubr.bf16.mxu0 0
    %550 = vmatmul.mubr.bf16.gmra.mrb[0].mxu0 %v512
    %v551 = vpop.f32.mrb[0].mxu0
    %v552 = vadd.f32 0.0, %v551
    %v553 = vpop.f32.mrb[0].mxu0
    %v554 = vpop.f32.mrb[0].mxu0
    %v555 = vadd.f32 0.0, %v554
    %v556 = vpop.f32.mrb[0].mxu0
    %557 = vdwg.mxu0
    %v558 = vrcp.pop %v504
    %v559 = vrcp.pop %v507
    %v560 = vmul.f32 %v552, %v558
    %v561 = vmul.f32 %v555, %v559
    %562 = vrot.lane.b32.xlu0 %v304, 112
    %v563 = vpop.permute.xlu0 %562
    %564 = vrot.lane.b32.xlu0 %v304, 80
    %v565 = vpop.permute.xlu0 %564
    %v567 = vsel %vm308, %v563, 0
    %v570 = vsel %vm308, %v565, 0
    %572 = vmatprep.subr.bf16.mxu0 0
    %573 = vmatpush1.bf16.xpose.msra.mxu0 %v570
    %574 = vmatprep.subr.bf16.mxu0 0
    %575 = vmatpush1.bf16.xpose.msra.mxu0 0
    %576 = vmatprep.subr.bf16.mxu0 0
    %577 = vmatpush1.bf16.xpose.msra.mxu0 0
    %578 = vmatprep.subr.bf16.mxu0 0
    %579 = vmatpush1.bf16.xpose.msra.mxu0 0
    %580 = vmatprep.subr.bf16.mxu0 0
    %581 = vmatpush1.bf16.xpose.msra.mxu0 0
    %582 = vmatprep.subr.bf16.mxu0 0
    %583 = vmatpush1.bf16.xpose.msra.mxu0 0
    %584 = vmatprep.subr.bf16.mxu0 0
    %585 = vmatpush1.bf16.xpose.msra.mxu0 0
    %586 = vmatprep.subr.bf16.mxu0 0
    %587 = vmatpush1.bf16.xpose.msra.mxu0 0
    %588 = vmatprep.subr.bf16.mxu0 0
    %589 = vmatpush1.bf16.xpose.msra.mxu0 0
    %590 = vmatprep.subr.bf16.mxu0 0
    %591 = vmatpush1.bf16.xpose.msra.mxu0 0
    %592 = vmatprep.subr.bf16.mxu0 0
    %593 = vmatpush1.bf16.xpose.msra.mxu0 0
    %594 = vmatprep.subr.bf16.mxu0 0
    %595 = vmatpush1.bf16.xpose.msra.mxu0 0
    %596 = vmatprep.subr.bf16.mxu0 0
    %597 = vmatpush1.bf16.xpose.msra.mxu0 0
    %598 = vmatprep.subr.bf16.mxu0 0
    %599 = vmatpush1.bf16.xpose.msra.mxu0 0
    %600 = vmatprep.subr.bf16.mxu0 0
    %601 = vmatpush1.bf16.xpose.msra.mxu0 0
    %602 = vmatprep.subr.bf16.mxu0 0
    %603 = vmatpush1.bf16.xpose.msra.mxu0 0
    %604 = vmatprep.mubr.bf16.mxu0 0
    %605 = vmatmul.mubr.bf16.gmra.mrb[0].mxu0 %v567
    %v606 = vpop.f32.mrb[0].mxu0
    %v607 = vadd.f32 0.0, %v606
    %v608 = vpop.f32.mrb[0].mxu0
    %v609 = vpop.f32.mrb[0].mxu0
    %v610 = vadd.f32 0.0, %v609
    %v611 = vpop.f32.mrb[0].mxu0
    %612 = vdwg.mxu0
    %v613 = vmul.f32 %v607, 0.35355338
    %v614 = vmul.f32 %v610, 0.35355338
    %v615 = vadd.f32 %v613, %v39
    %v616 = vadd.f32 %v614, %v40
    %v617 = vsel %vm360, %v615, -inf
    %618 = vmax.xlane.f32.xlu0 %v617
    %v619 = vpop.xlane.xlu0 %618
    %v620 = vsel %vm364, %v616, -inf
    %621 = vmax.xlane.f32.xlu0 %v620
    %v622 = vpop.xlane.xlu0 %621
    %v623 = vsub.f32 %v615, %v619
    %v624 = vsub.f32 %v616, %v622
    %v625 = vmul.f32 %v623, 1.442695
    %v626 = vpow.pop %v625
    %v627 = vmul.f32 %v624, 1.442695
    %v628 = vpow.pop %v627
    %v629 = vsel %vm360, %v626, 0.0
    %630 = vadd.xlane.f32.xlu0 %v629
    %v631 = vpop.xlane.xlu0 %630
    %v632 = vsel %vm364, %v628, 0.0
    %633 = vadd.xlane.f32.xlu0 %v632
    %v634 = vpop.xlane.xlu0 %633
    %v635 = vpack.c.bf16 %v628, %v626
    %636 = vrot.lane.b32.xlu0 %v304, 48
    %v637 = vpop.permute.xlu0 %636
    %v639 = vsel %vm360, %v635, 0
    %v642 = vsel %vm386, %v637, 0
    %644 = vmatprep.subr.bf16.mxu0 0
    %645 = vmatpush1.bf16.msra.mxu0 %v642
    %646 = vmatprep.subr.bf16.mxu0 0
    %647 = vmatpush1.bf16.msra.mxu0 0
    %648 = vmatprep.subr.bf16.mxu0 0
    %649 = vmatpush1.bf16.msra.mxu0 0
    %650 = vmatprep.subr.bf16.mxu0 0
    %651 = vmatpush1.bf16.msra.mxu0 0
    %652 = vmatprep.subr.bf16.mxu0 0
    %653 = vmatpush1.bf16.msra.mxu0 0
    %654 = vmatprep.subr.bf16.mxu0 0
    %655 = vmatpush1.bf16.msra.mxu0 0
    %656 = vmatprep.subr.bf16.mxu0 0
    %657 = vmatpush1.bf16.msra.mxu0 0
    %658 = vmatprep.subr.bf16.mxu0 0
    %659 = vmatpush1.bf16.msra.mxu0 0
    %660 = vmatprep.subr.bf16.mxu0 0
    %661 = vmatpush1.bf16.msra.mxu0 0
    %662 = vmatprep.subr.bf16.mxu0 0
    %663 = vmatpush1.bf16.msra.mxu0 0
    %664 = vmatprep.subr.bf16.mxu0 0
    %665 = vmatpush1.bf16.msra.mxu0 0
    %666 = vmatprep.subr.bf16.mxu0 0
    %667 = vmatpush1.bf16.msra.mxu0 0
    %668 = vmatprep.subr.bf16.mxu0 0
    %669 = vmatpush1.bf16.msra.mxu0 0
    %670 = vmatprep.subr.bf16.mxu0 0
    %671 = vmatpush1.bf16.msra.mxu0 0
    %672 = vmatprep.subr.bf16.mxu0 0
    %673 = vmatpush1.bf16.msra.mxu0 0
    %674 = vmatprep.subr.bf16.mxu0 0
    %675 = vmatpush1.bf16.msra.mxu0 0
    %676 = vmatprep.mubr.bf16.mxu0 0
    %677 = vmatmul.mubr.bf16.gmra.mrb[0].mxu0 %v639
    %v678 = vpop.f32.mrb[0].mxu0
    %v679 = vadd.f32 0.0, %v678
    %v680 = vpop.f32.mrb[0].mxu0
    %v681 = vpop.f32.mrb[0].mxu0
    %v682 = vadd.f32 0.0, %v681
    %v683 = vpop.f32.mrb[0].mxu0
    %684 = vdwg.mxu0
    %v685 = vrcp.pop %v631
    %v686 = vrcp.pop %v634
    %v687 = vmul.f32 %v679, %v685
    %v688 = vmul.f32 %v682, %v686
    %689 = vrot.lane.b32.xlu0 %v304, 104
    %v690 = vpop.permute.xlu0 %689
    %691 = vrot.lane.b32.xlu0 %v304, 72
    %v692 = vpop.permute.xlu0 %691
    %v694 = vsel %vm308, %v690, 0
    %v697 = vsel %vm308, %v692, 0
    %699 = vmatprep.subr.bf16.mxu0 0
    %700 = vmatpush1.bf16.xpose.msra.mxu0 %v697
    %701 = vmatprep.subr.bf16.mxu0 0
    %702 = vmatpush1.bf16.xpose.msra.mxu0 0
    %703 = vmatprep.subr.bf16.mxu0 0
    %704 = vmatpush1.bf16.xpose.msra.mxu0 0
    %705 = vmatprep.subr.bf16.mxu0 0
    %706 = vmatpush1.bf16.xpose.msra.mxu0 0
    %707 = vmatprep.subr.bf16.mxu0 0
    %708 = vmatpush1.bf16.xpose.msra.mxu0 0
    %709 = vmatprep.subr.bf16.mxu0 0
    %710 = vmatpush1.bf16.xpose.msra.mxu0 0
    %711 = vmatprep.subr.bf16.mxu0 0
    %712 = vmatpush1.bf16.xpose.msra.mxu0 0
    %713 = vmatprep.subr.bf16.mxu0 0
    %714 = vmatpush1.bf16.xpose.msra.mxu0 0
    %715 = vmatprep.subr.bf16.mxu0 0
    %716 = vmatpush1.bf16.xpose.msra.mxu0 0
    %717 = vmatprep.subr.bf16.mxu0 0
    %718 = vmatpush1.bf16.xpose.msra.mxu0 0
    %719 = vmatprep.subr.bf16.mxu0 0
    %720 = vmatpush1.bf16.xpose.msra.mxu0 0
    %721 = vmatprep.subr.bf16.mxu0 0
    %722 = vmatpush1.bf16.xpose.msra.mxu0 0
    %723 = vmatprep.subr.bf16.mxu0 0
    %724 = vmatpush1.bf16.xpose.msra.mxu0 0
    %725 = vmatprep.subr.bf16.mxu0 0
    %726 = vmatpush1.bf16.xpose.msra.mxu0 0
    %727 = vmatprep.subr.bf16.mxu0 0
    %728 = vmatpush1.bf16.xpose.msra.mxu0 0
    %729 = vmatprep.subr.bf16.mxu0 0
    %730 = vmatpush1.bf16.xpose.msra.mxu0 0
    %731 = vmatprep.mubr.bf16.mxu0 0
    %732 = vmatmul.mubr.bf16.gmra.mrb[0].mxu0 %v694
    %v733 = vpop.f32.mrb[0].mxu0
    %v734 = vadd.f32 0.0, %v733
    %v735 = vpop.f32.mrb[0].mxu0
    %v736 = vpop.f32.mrb[0].mxu0
    %v737 = vadd.f32 0.0, %v736
    %v738 = vpop.f32.mrb[0].mxu0
    %739 = vdwg.mxu0
    %v740 = vmul.f32 %v734, 0.35355338
    %v741 = vmul.f32 %v737, 0.35355338
    %v742 = vadd.f32 %v740, %v39
    %v743 = vadd.f32 %v741, %v40
    %v744 = vsel %vm360, %v742, -inf
    %745 = vmax.xlane.f32.xlu0 %v744
    %v746 = vpop.xlane.xlu0 %745
    %v747 = vsel %vm364, %v743, -inf
    %748 = vmax.xlane.f32.xlu0 %v747
    %v749 = vpop.xlane.xlu0 %748
    %v750 = vsub.f32 %v742, %v746
    %v751 = vsub.f32 %v743, %v749
    %v752 = vmul.f32 %v750, 1.442695
    %v753 = vpow.pop %v752
    %v754 = vmul.f32 %v751, 1.442695
    %v755 = vpow.pop %v754
    %v756 = vsel %vm360, %v753, 0.0
    %757 = vadd.xlane.f32.xlu0 %v756
    %v758 = vpop.xlane.xlu0 %757
    %v759 = vsel %vm364, %v755, 0.0
    %760 = vadd.xlane.f32.xlu0 %v759
    %v761 = vpop.xlane.xlu0 %760
    %v762 = vpack.c.bf16 %v755, %v753
    %763 = vrot.lane.b32.xlu0 %v304, 40
    %v764 = vpop.permute.xlu0 %763
    %v766 = vsel %vm360, %v762, 0
    %v769 = vsel %vm386, %v764, 0
    %771 = vmatprep.subr.bf16.mxu0 0
    %772 = vmatpush1.bf16.msra.mxu0 %v769
    %773 = vmatprep.subr.bf16.mxu0 0
    %774 = vmatpush1.bf16.msra.mxu0 0
    %775 = vmatprep.subr.bf16.mxu0 0
    %776 = vmatpush1.bf16.msra.mxu0 0
    %777 = vmatprep.subr.bf16.mxu0 0
    %778 = vmatpush1.bf16.msra.mxu0 0
    %779 = vmatprep.subr.bf16.mxu0 0
    %780 = vmatpush1.bf16.msra.mxu0 0
    %781 = vmatprep.subr.bf16.mxu0 0
    %782 = vmatpush1.bf16.msra.mxu0 0
    %783 = vmatprep.subr.bf16.mxu0 0
    %784 = vmatpush1.bf16.msra.mxu0 0
    %785 = vmatprep.subr.bf16.mxu0 0
    %786 = vmatpush1.bf16.msra.mxu0 0
    %787 = vmatprep.subr.bf16.mxu0 0
    %788 = vmatpush1.bf16.msra.mxu0 0
    %789 = vmatprep.subr.bf16.mxu0 0
    %790 = vmatpush1.bf16.msra.mxu0 0
    %791 = vmatprep.subr.bf16.mxu0 0
    %792 = vmatpush1.bf16.msra.mxu0 0
    %793 = vmatprep.subr.bf16.mxu0 0
    %794 = vmatpush1.bf16.msra.mxu0 0
    %795 = vmatprep.subr.bf16.mxu0 0
    %796 = vmatpush1.bf16.msra.mxu0 0
    %797 = vmatprep.subr.bf16.mxu0 0
    %798 = vmatpush1.bf16.msra.mxu0 0
    %799 = vmatprep.subr.bf16.mxu0 0
    %800 = vmatpush1.bf16.msra.mxu0 0
    %801 = vmatprep.subr.bf16.mxu0 0
    %802 = vmatpush1.bf16.msra.mxu0 0
    %803 = vmatprep.mubr.bf16.mxu0 0
    %804 = vmatmul.mubr.bf16.gmra.mrb[0].mxu0 %v766
    %v805 = vpop.f32.mrb[0].mxu0
    %v806 = vadd.f32 0.0, %v805
    %v807 = vpop.f32.mrb[0].mxu0
    %v808 = vpop.f32.mrb[0].mxu0
    %v809 = vadd.f32 0.0, %v808
    %v810 = vpop.f32.mrb[0].mxu0
    %811 = vdwg.mxu0
    %v812 = vrcp.pop %v758
    %v813 = vrcp.pop %v761
    %v814 = vmul.f32 %v806, %v812
    %v815 = vmul.f32 %v809, %v813
    %818 = vrot.lane.b32.xlu0 %v560, 8
    %v819 = vpop.permute.xlu0 %818
    %820 = vrot.lane.b32.xlu0 %v561, 8
    %v821 = vpop.permute.xlu0 %820
    %826 = vrot.lane.b32.xlu0 %v687, 16
    %v827 = vpop.permute.xlu0 %826
    %828 = vrot.lane.b32.xlu0 %v688, 16
    %v829 = vpop.permute.xlu0 %828
    %834 = vrot.lane.b32.xlu0 %v814, 24
    %v835 = vpop.permute.xlu0 %834
    %836 = vrot.lane.b32.xlu0 %v815, 24
    %v837 = vpop.permute.xlu0 %836
    %v840 = vsel %vm308, %v433, %v819
    %v841 = vsel %vm308, %v434, %v821
    %vm842 = vcmask 130048
    %v843 = vsel %vm842, %v840, %v827
    %v844 = vsel %vm842, %v841, %v829
    %vm845 = vcmask 195584
    %v846 = vsel %vm845, %v843, %v835
    %v847 = vsel %vm845, %v844, %v837
    %v848 = vpack.c.bf16 %v847, %v846
    %v849 = vld [vmem:[%s5] sm:$0xf]
    %v850 = vld [vmem:[%s5 + $0x4] sm:$0xf]
    %v851 = vld [vmem:[%s5 + $0x8] sm:$0xf]
    %v852 = vld [vmem:[%s5 + $0xc] sm:$0xf]
    %v857 = vunpack.c.l.b16 %v849
    %v858 = vunpack.c.l.b16 %v850
    %v859 = vunpack.c.l.b16 %v851
    %v860 = vunpack.c.l.b16 %v852
    %v861 = vpack.c.b16 %v858, %v857
    %v862 = vpack.c.b16 %v860, %v859
    %v866 = vsel %vm198, %v848, 0
    %868 = vmatprep.subr.bf16.mxu0 0
    %869 = vmatpush1.bf16.msra.mxu0 %v861
    %870 = vmatprep.subr.bf16.mxu0 0
    %871 = vmatpush1.bf16.msra.mxu0 %v862
    %872 = vmatprep.subr.bf16.mxu0 0
    %873 = vmatpush1.bf16.msra.mxu0 0
    %874 = vmatprep.subr.bf16.mxu0 0
    %875 = vmatpush1.bf16.msra.mxu0 0
    %876 = vmatprep.subr.bf16.mxu0 0
    %877 = vmatpush1.bf16.msra.mxu0 0
    %878 = vmatprep.subr.bf16.mxu0 0
    %879 = vmatpush1.bf16.msra.mxu0 0
    %880 = vmatprep.subr.bf16.mxu0 0
    %881 = vmatpush1.bf16.msra.mxu0 0
    %882 = vmatprep.subr.bf16.mxu0 0
    %883 = vmatpush1.bf16.msra.mxu0 0
    %884 = vmatprep.subr.bf16.mxu0 0
    %885 = vmatpush1.bf16.msra.mxu0 0
    %886 = vmatprep.subr.bf16.mxu0 0
    %887 = vmatpush1.bf16.msra.mxu0 0
    %888 = vmatprep.subr.bf16.mxu0 0
    %889 = vmatpush1.bf16.msra.mxu0 0
    %890 = vmatprep.subr.bf16.mxu0 0
    %891 = vmatpush1.bf16.msra.mxu0 0
    %892 = vmatprep.subr.bf16.mxu0 0
    %893 = vmatpush1.bf16.msra.mxu0 0
    %894 = vmatprep.subr.bf16.mxu0 0
    %895 = vmatpush1.bf16.msra.mxu0 0
    %896 = vmatprep.subr.bf16.mxu0 0
    %897 = vmatpush1.bf16.msra.mxu0 0
    %898 = vmatprep.subr.bf16.mxu0 0
    %899 = vmatpush1.bf16.msra.mxu0 0
    %900 = vmatprep.mubr.bf16.mxu0 0
    %901 = vmatmul.mubr.bf16.gmra.mrb[0].mxu0 %v866
    %v902 = vpop.f32.mrb[0].mxu0
    %v903 = vadd.f32 0.0, %v902
    %v904 = vpop.f32.mrb[0].mxu0
    %v905 = vpop.f32.mrb[0].mxu0
    %v906 = vadd.f32 0.0, %v905
    %v907 = vpop.f32.mrb[0].mxu0
    %908 = vdwg.mxu0
    %v909 = vadd.f32 %v195, %v903
    %v910 = vadd.f32 %v196, %v906
    %v911 = vlaneseq
    %v912 = vshrl.u32 %v911, 7
    %v913 = vsub.s32 3, %v912
    %v914 = vrot.slane %v197, %v913
    %v915 = vadd.f32 %v909, %v914
    %v916 = vadd.f32 %v910, %v914
    %v917 = vsel %vm198, %v915, 0.0
    %918 = vadd.xlane.f32.xlu0 %v917
    %v919 = vpop.xlane.xlu0 %918
    %v920 = vsel %vm202, %v916, 0.0
    %921 = vadd.xlane.f32.xlu0 %v920
    %v922 = vpop.xlane.xlu0 %921
    %v923 = vmul.f32 %v919, %v206
    %v924 = vmul.f32 %v922, %v206
    %v925 = vsub.f32 %v915, %v923
    %v926 = vsub.f32 %v916, %v924
    %v927 = vmul.f32 %v925, %v925
    %v928 = vmul.f32 %v926, %v926
    %v929 = vsel %vm198, %v927, 0.0
    %930 = vadd.xlane.f32.xlu0 %v929
    %v931 = vpop.xlane.xlu0 %930
    %v932 = vsel %vm202, %v928, 0.0
    %933 = vadd.xlane.f32.xlu0 %v932
    %v934 = vpop.xlane.xlu0 %933
    %v935 = vmul.f32 %v931, %v206
    %v936 = vmul.f32 %v934, %v206
    %v937 = vadd.f32 %v935, 1e-06
    %v938 = vadd.f32 %v936, 1e-06
    %v939 = vrsqrt.pop %v937
    %v940 = vrsqrt.pop %v938
    %v941 = vmul.f32 %v925, %v939
    %v942 = vmul.f32 %v926, %v940
    %v943 = vlaneseq
    %v944 = vshrl.u32 %v943, 7
    %v945 = vsub.s32 4, %v944
    %v946 = vrot.slane %v197, %v945
    %v947 = vmul.f32 %v941, %v946
    %v948 = vmul.f32 %v942, %v946
    %v949 = vlaneseq
    %v950 = vshrl.u32 %v949, 7
    %v951 = vsub.s32 5, %v950
    %v952 = vrot.slane %v197, %v951
    %v953 = vadd.f32 %v947, %v952
    %v954 = vadd.f32 %v948, %v952
    %v955 = vpack.c.bf16 %v954, %v953
    %v956 = vld [vmem:[%s6] sm:$0xf]
    %v957 = vld [vmem:[%s6 + $0x4] sm:$0xf]
    %v958 = vld [vmem:[%s6 + $0x8] sm:$0xf]
    %v959 = vld [vmem:[%s6 + $0xc] sm:$0xf]
    %v960 = vlaneseq
    %v961 = vshrl.u32 %v960, 7
    %v962 = vsub.s32 6, %v961
    %v963 = vrot.slane %v197, %v962
    %v968 = vunpack.c.l.b16 %v956
    %v969 = vunpack.c.l.b16 %v957
    %v970 = vunpack.c.l.b16 %v958
    %v971 = vunpack.c.l.b16 %v959
    %v972 = vpack.c.b16 %v969, %v968
    %v973 = vpack.c.b16 %v971, %v970
    %v977 = vsel %vm198, %v955, 0
    %979 = vmatprep.subr.bf16.mxu0 0
    %980 = vmatpush1.bf16.msra.mxu0 %v972
    %981 = vmatprep.subr.bf16.mxu0 0
    %982 = vmatpush1.bf16.msra.mxu0 %v973
    %983 = vmatprep.subr.bf16.mxu0 0
    %984 = vmatpush1.bf16.msra.mxu0 0
    %985 = vmatprep.subr.bf16.mxu0 0
    %986 = vmatpush1.bf16.msra.mxu0 0
    %987 = vmatprep.subr.bf16.mxu0 0
    %988 = vmatpush1.bf16.msra.mxu0 0
    %989 = vmatprep.subr.bf16.mxu0 0
    %990 = vmatpush1.bf16.msra.mxu0 0
    %991 = vmatprep.subr.bf16.mxu0 0
    %992 = vmatpush1.bf16.msra.mxu0 0
    %993 = vmatprep.subr.bf16.mxu0 0
    %994 = vmatpush1.bf16.msra.mxu0 0
    %995 = vmatprep.subr.bf16.mxu0 0
    %996 = vmatpush1.bf16.msra.mxu0 0
    %997 = vmatprep.subr.bf16.mxu0 0
    %998 = vmatpush1.bf16.msra.mxu0 0
    %999 = vmatprep.subr.bf16.mxu0 0
    %1000 = vmatpush1.bf16.msra.mxu0 0
    %1001 = vmatprep.subr.bf16.mxu0 0
    %1002 = vmatpush1.bf16.msra.mxu0 0
    %1003 = vmatprep.subr.bf16.mxu0 0
    %1004 = vmatpush1.bf16.msra.mxu0 0
    %1005 = vmatprep.subr.bf16.mxu0 0
    %1006 = vmatpush1.bf16.msra.mxu0 0
    %1007 = vmatprep.subr.bf16.mxu0 0
    %1008 = vmatpush1.bf16.msra.mxu0 0
    %1009 = vmatprep.subr.bf16.mxu0 0
    %1010 = vmatpush1.bf16.msra.mxu0 0
    %1011 = vmatprep.mubr.bf16.mxu0 0
    %1012 = vmatmul.mubr.bf16.gmra.mrb[0].mxu0 %v977
    %v1013 = vpop.f32.mrb[0].mxu0
    %v1014 = vadd.f32 %v963, %v1013
    %v1015 = vpop.f32.mrb[0].mxu0
    %v1016 = vpop.f32.mrb[0].mxu0
    %v1017 = vadd.f32 %v963, %v1016
    %v1018 = vpop.f32.mrb[0].mxu0
    %1019 = vdwg.mxu0
    %v1020 = vmul.f32 %v1014, 0.5
    %v1021 = vmul.f32 %v1017, 0.5
    %v1022 = vmul.f32 %v1014, 0.70710677
    %v1023 = vmul.f32 %v1017, 0.70710677
    %v1024 = verf.f32.pop %v1022
    %v1025 = verf.f32.pop %v1023
    %v1026 = vadd.f32 %v1024, 1.0
    %v1027 = vadd.f32 %v1025, 1.0
    %v1028 = vmul.f32 %v1020, %v1026
    %v1029 = vmul.f32 %v1021, %v1027
    %v1030 = vpack.c.bf16 %v1029, %v1028
    %v1031 = vld [vmem:[%s7] sm:$0xf]
    %v1032 = vld [vmem:[%s7 + $0x4] sm:$0xf]
    %v1033 = vld [vmem:[%s7 + $0x8] sm:$0xf]
    %v1034 = vld [vmem:[%s7 + $0xc] sm:$0xf]
    %v1035 = vld [vmem:[%s7 + $0x10] sm:$0xf]
    %v1036 = vld [vmem:[%s7 + $0x14] sm:$0xf]
    %v1037 = vld [vmem:[%s7 + $0x18] sm:$0xf]
    %v1038 = vld [vmem:[%s7 + $0x1c] sm:$0xf]
    %v1039 = vld [vmem:[%s7 + $0x20] sm:$0xf]
    %v1040 = vld [vmem:[%s7 + $0x24] sm:$0xf]
    %v1041 = vld [vmem:[%s7 + $0x28] sm:$0xf]
    %v1042 = vld [vmem:[%s7 + $0x2c] sm:$0xf]
    %v1043 = vld [vmem:[%s7 + $0x30] sm:$0xf]
    %v1044 = vld [vmem:[%s7 + $0x34] sm:$0xf]
    %v1045 = vld [vmem:[%s7 + $0x38] sm:$0xf]
    %v1046 = vld [vmem:[%s7 + $0x3c] sm:$0xf]
    %v1063 = vunpack.c.l.b16 %v1031
    %v1064 = vunpack.c.l.b16 %v1032
    %v1065 = vunpack.c.l.b16 %v1033
    %v1066 = vunpack.c.l.b16 %v1034
    %v1067 = vunpack.c.l.b16 %v1035
    %v1068 = vunpack.c.l.b16 %v1036
    %v1069 = vunpack.c.l.b16 %v1037
    %v1070 = vunpack.c.l.b16 %v1038
    %v1071 = vunpack.c.l.b16 %v1039
    %v1072 = vunpack.c.l.b16 %v1040
    %v1073 = vunpack.c.l.b16 %v1041
    %v1074 = vunpack.c.l.b16 %v1042
    %v1075 = vunpack.c.l.b16 %v1043
    %v1076 = vunpack.c.l.b16 %v1044
    %v1077 = vunpack.c.l.b16 %v1045
    %v1078 = vunpack.c.l.b16 %v1046
    %v1079 = vpack.c.b16 %v1064, %v1063
    %v1080 = vpack.c.b16 %v1066, %v1065
    %v1081 = vpack.c.b16 %v1068, %v1067
    %v1082 = vpack.c.b16 %v1070, %v1069
    %v1083 = vpack.c.b16 %v1072, %v1071
    %v1084 = vpack.c.b16 %v1074, %v1073
    %v1085 = vpack.c.b16 %v1076, %v1075
    %v1086 = vpack.c.b16 %v1078, %v1077
    %1095 = vmatprep.subr.bf16.mxu0 0
    %1096 = vmatpush1.bf16.msra.mxu0 %v1079
    %1097 = vmatprep.subr.bf16.mxu0 0
    %1098 = vmatpush1.bf16.msra.mxu0 %v1080
    %1099 = vmatprep.subr.bf16.mxu0 0
    %1100 = vmatpush1.bf16.msra.mxu0 %v1081
    %1101 = vmatprep.subr.bf16.mxu0 0
    %1102 = vmatpush1.bf16.msra.mxu0 %v1082
    %1103 = vmatprep.subr.bf16.mxu0 0
    %1104 = vmatpush1.bf16.msra.mxu0 %v1083
    %1105 = vmatprep.subr.bf16.mxu0 0
    %1106 = vmatpush1.bf16.msra.mxu0 %v1084
    %1107 = vmatprep.subr.bf16.mxu0 0
    %1108 = vmatpush1.bf16.msra.mxu0 %v1085
    %1109 = vmatprep.subr.bf16.mxu0 0
    %1110 = vmatpush1.bf16.msra.mxu0 %v1086
    %1111 = vmatprep.subr.bf16.mxu0 0
    %1112 = vmatpush1.bf16.msra.mxu0 0
    %1113 = vmatprep.subr.bf16.mxu0 0
    %1114 = vmatpush1.bf16.msra.mxu0 0
    %1115 = vmatprep.subr.bf16.mxu0 0
    %1116 = vmatpush1.bf16.msra.mxu0 0
    %1117 = vmatprep.subr.bf16.mxu0 0
    %1118 = vmatpush1.bf16.msra.mxu0 0
    %1119 = vmatprep.subr.bf16.mxu0 0
    %1120 = vmatpush1.bf16.msra.mxu0 0
    %1121 = vmatprep.subr.bf16.mxu0 0
    %1122 = vmatpush1.bf16.msra.mxu0 0
    %1123 = vmatprep.subr.bf16.mxu0 0
    %1124 = vmatpush1.bf16.msra.mxu0 0
    %1125 = vmatprep.subr.bf16.mxu0 0
    %1126 = vmatpush1.bf16.msra.mxu0 0
    %1127 = vmatprep.mubr.bf16.mxu0 0
    %1128 = vmatmul.mubr.bf16.gmra.mrb[0].mxu0 %v1030
    %v1129 = vpop.f32.mrb[0].mxu0
    %v1130 = vadd.f32 0.0, %v1129
    %v1131 = vpop.f32.mrb[0].mxu0
    %v1132 = vpop.f32.mrb[0].mxu0
    %v1133 = vadd.f32 0.0, %v1132
    %v1134 = vpop.f32.mrb[0].mxu0
    %1135 = vdwg.mxu0
    %v1136 = vadd.f32 %v915, %v1130
    %v1137 = vadd.f32 %v916, %v1133
    %v1138 = vlaneseq
    %v1139 = vshrl.u32 %v1138, 7
    %v1140 = vsub.s32 7, %v1139
    %v1141 = vrot.slane %v197, %v1140
    %v1142 = vadd.f32 %v1136, %v1141
    %v1143 = vadd.f32 %v1137, %v1141
    %s1144 = scalar_lea.vmem %s8, 8
    %v1145 = vld [vmem:[%s1144] sm:$0xff]
    %v1146 = vsel %vm198, %v1142, 0.0
    %1147 = vadd.xlane.f32.xlu0 %v1146
    %v1148 = vpop.xlane.xlu0 %1147
    %v1149 = vsel %vm202, %v1143, 0.0
    %1150 = vadd.xlane.f32.xlu0 %v1149
    %v1151 = vpop.xlane.xlu0 %1150
    %v1152 = vmul.f32 %v1148, %v206
    %v1153 = vmul.f32 %v1151, %v206
    %v1154 = vsub.f32 %v1142, %v1152
    %v1155 = vsub.f32 %v1143, %v1153
    %v1156 = vmul.f32 %v1154, %v1154
    %v1157 = vmul.f32 %v1155, %v1155
    %v1158 = vsel %vm198, %v1156, 0.0
    %1159 = vadd.xlane.f32.xlu0 %v1158
    %v1160 = vpop.xlane.xlu0 %1159
    %v1161 = vsel %vm202, %v1157, 0.0
    %1162 = vadd.xlane.f32.xlu0 %v1161
    %v1163 = vpop.xlane.xlu0 %1162
    %v1164 = vmul.f32 %v1160, %v206
    %v1165 = vmul.f32 %v1163, %v206
    %v1166 = vadd.f32 %v1164, 1e-06
    %v1167 = vadd.f32 %v1165, 1e-06
    %v1168 = vrsqrt.pop %v1166
    %v1169 = vrsqrt.pop %v1167
    %v1170 = vmul.f32 %v1154, %v1168
    %v1171 = vmul.f32 %v1155, %v1169
    %v1172 = vlaneseq
    %v1173 = vshrl.u32 %v1172, 7
    %v1174 = vsub.s32 0, %v1173
    %v1175 = vrot.slane %v1145, %v1174
    %v1176 = vmul.f32 %v1170, %v1175
    %v1177 = vmul.f32 %v1171, %v1175
    %v1178 = vlaneseq
    %v1179 = vshrl.u32 %v1178, 7
    %v1180 = vsub.s32 1, %v1179
    %v1181 = vrot.slane %v1145, %v1180
    %v1182 = vadd.f32 %v1176, %v1181
    %v1183 = vadd.f32 %v1177, %v1181
    %v1184 = vpack.c.bf16 %v1183, %v1182
    %s1185 = scalar_lea.vmem %s4, 16
    %v1186 = vld [vmem:[%s1185] sm:$0xf]
    %v1187 = vld [vmem:[%s1185 + $0x4] sm:$0xf]
    %v1188 = vld [vmem:[%s1185 + $0x8] sm:$0xf]
    %v1189 = vld [vmem:[%s1185 + $0xc] sm:$0xf]
    %v1190 = vlaneseq
    %v1191 = vshrl.u32 %v1190, 7
    %v1192 = vsub.s32 2, %v1191
    %v1193 = vrot.slane %v1145, %v1192
    %v1198 = vunpack.c.l.b16 %v1186
    %v1199 = vunpack.c.l.b16 %v1187
    %v1200 = vunpack.c.l.b16 %v1188
    %v1201 = vunpack.c.l.b16 %v1189
    %v1202 = vpack.c.b16 %v1199, %v1198
    %v1203 = vpack.c.b16 %v1201, %v1200
    %v1207 = vsel %vm198, %v1184, 0
    %1209 = vmatprep.subr.bf16.mxu0 0
    %1210 = vmatpush1.bf16.msra.mxu0 %v1202
    %1211 = vmatprep.subr.bf16.mxu0 0
    %1212 = vmatpush1.bf16.msra.mxu0 %v1203
    %1213 = vmatprep.subr.bf16.mxu0 0
    %1214 = vmatpush1.bf16.msra.mxu0 0
    %1215 = vmatprep.subr.bf16.mxu0 0
    %1216 = vmatpush1.bf16.msra.mxu0 0
    %1217 = vmatprep.subr.bf16.mxu0 0
    %1218 = vmatpush1.bf16.msra.mxu0 0
    %1219 = vmatprep.subr.bf16.mxu0 0
    %1220 = vmatpush1.bf16.msra.mxu0 0
    %1221 = vmatprep.subr.bf16.mxu0 0
    %1222 = vmatpush1.bf16.msra.mxu0 0
    %1223 = vmatprep.subr.bf16.mxu0 0
    %1224 = vmatpush1.bf16.msra.mxu0 0
    %1225 = vmatprep.subr.bf16.mxu0 0
    %1226 = vmatpush1.bf16.msra.mxu0 0
    %1227 = vmatprep.subr.bf16.mxu0 0
    %1228 = vmatpush1.bf16.msra.mxu0 0
    %1229 = vmatprep.subr.bf16.mxu0 0
    %1230 = vmatpush1.bf16.msra.mxu0 0
    %1231 = vmatprep.subr.bf16.mxu0 0
    %1232 = vmatpush1.bf16.msra.mxu0 0
    %1233 = vmatprep.subr.bf16.mxu0 0
    %1234 = vmatpush1.bf16.msra.mxu0 0
    %1235 = vmatprep.subr.bf16.mxu0 0
    %1236 = vmatpush1.bf16.msra.mxu0 0
    %1237 = vmatprep.subr.bf16.mxu0 0
    %1238 = vmatpush1.bf16.msra.mxu0 0
    %1239 = vmatprep.subr.bf16.mxu0 0
    %1240 = vmatpush1.bf16.msra.mxu0 0
    %1241 = vmatprep.mubr.bf16.mxu0 0
    %1242 = vmatmul.mubr.bf16.gmra.mrb[0].mxu0 %v1207
    %v1243 = vpop.f32.mrb[0].mxu0
    %v1244 = vadd.f32 %v1193, %v1243
    %v1245 = vpop.f32.mrb[0].mxu0
    %v1246 = vpop.f32.mrb[0].mxu0
    %v1247 = vadd.f32 %v1193, %v1246
    %v1248 = vpop.f32.mrb[0].mxu0
    %1249 = vdwg.mxu0
    %v1250 = vpack.c.bf16 %v1247, %v1244
    %1252 = vrot.lane.b32.xlu0 %v1250, 96
    %v1253 = vpop.permute.xlu0 %1252
    %v1255 = vsel %vm308, %v1250, 0
    %v1258 = vsel %vm308, %v1253, 0
    %1260 = vmatprep.subr.bf16.mxu0 0
    %1261 = vmatpush1.bf16.xpose.msra.mxu0 %v1258
    %1262 = vmatprep.subr.bf16.mxu0 0
    %1263 = vmatpush1.bf16.xpose.msra.mxu0 0
    %1264 = vmatprep.subr.bf16.mxu0 0
    %1265 = vmatpush1.bf16.xpose.msra.mxu0 0
    %1266 = vmatprep.subr.bf16.mxu0 0
    %1267 = vmatpush1.bf16.xpose.msra.mxu0 0
    %1268 = vmatprep.subr.bf16.mxu0 0
    %1269 = vmatpush1.bf16.xpose.msra.mxu0 0
    %1270 = vmatprep.subr.bf16.mxu0 0
    %1271 = vmatpush1.bf16.xpose.msra.mxu0 0
    %1272 = vmatprep.subr.bf16.mxu0 0
    %1273 = vmatpush1.bf16.xpose.msra.mxu0 0
    %1274 = vmatprep.subr.bf16.mxu0 0
    %1275 = vmatpush1.bf16.xpose.msra.mxu0 0
    %1276 = vmatprep.subr.bf16.mxu0 0
    %1277 = vmatpush1.bf16.xpose.msra.mxu0 0
    %1278 = vmatprep.subr.bf16.mxu0 0
    %1279 = vmatpush1.bf16.xpose.msra.mxu0 0
    %1280 = vmatprep.subr.bf16.mxu0 0
    %1281 = vmatpush1.bf16.xpose.msra.mxu0 0
    %1282 = vmatprep.subr.bf16.mxu0 0
    %1283 = vmatpush1.bf16.xpose.msra.mxu0 0
    %1284 = vmatprep.subr.bf16.mxu0 0
    %1285 = vmatpush1.bf16.xpose.msra.mxu0 0
    %1286 = vmatprep.subr.bf16.mxu0 0
    %1287 = vmatpush1.bf16.xpose.msra.mxu0 0
    %1288 = vmatprep.subr.bf16.mxu0 0
    %1289 = vmatpush1.bf16.xpose.msra.mxu0 0
    %1290 = vmatprep.subr.bf16.mxu0 0
    %1291 = vmatpush1.bf16.xpose.msra.mxu0 0
    %1292 = vmatprep.mubr.bf16.mxu0 0
    %1293 = vmatmul.mubr.bf16.gmra.mrb[0].mxu0 %v1255
    %v1294 = vpop.f32.mrb[0].mxu0
    %v1295 = vadd.f32 0.0, %v1294
    %v1296 = vpop.f32.mrb[0].mxu0
    %v1297 = vpop.f32.mrb[0].mxu0
    %v1298 = vadd.f32 0.0, %v1297
    %v1299 = vpop.f32.mrb[0].mxu0
    %1300 = vdwg.mxu0
    %v1301 = vmul.f32 %v1295, 0.35355338
    %v1302 = vmul.f32 %v1298, 0.35355338
    %v1303 = vadd.f32 %v1301, %v39
    %v1304 = vadd.f32 %v1302, %v40
    %v1305 = vsel %vm360, %v1303, -inf
    %1306 = vmax.xlane.f32.xlu0 %v1305
    %v1307 = vpop.xlane.xlu0 %1306
    %v1308 = vsel %vm364, %v1304, -inf
    %1309 = vmax.xlane.f32.xlu0 %v1308
    %v1310 = vpop.xlane.xlu0 %1309
    %v1311 = vsub.f32 %v1303, %v1307
    %v1312 = vsub.f32 %v1304, %v1310
    %v1313 = vmul.f32 %v1311, 1.442695
    %v1314 = vpow.pop %v1313
    %v1315 = vmul.f32 %v1312, 1.442695
    %v1316 = vpow.pop %v1315
    %v1317 = vsel %vm360, %v1314, 0.0
    %1318 = vadd.xlane.f32.xlu0 %v1317
    %v1319 = vpop.xlane.xlu0 %1318
    %v1320 = vsel %vm364, %v1316, 0.0
    %1321 = vadd.xlane.f32.xlu0 %v1320
    %v1322 = vpop.xlane.xlu0 %1321
    %v1323 = vpack.c.bf16 %v1316, %v1314
    %1324 = vrot.lane.b32.xlu0 %v1250, 64
    %v1325 = vpop.permute.xlu0 %1324
    %v1327 = vsel %vm360, %v1323, 0
    %v1330 = vsel %vm386, %v1325, 0
    %1332 = vmatprep.subr.bf16.mxu0 0
    %1333 = vmatpush1.bf16.msra.mxu0 %v1330
    %1334 = vmatprep.subr.bf16.mxu0 0
    %1335 = vmatpush1.bf16.msra.mxu0 0
    %1336 = vmatprep.subr.bf16.mxu0 0
    %1337 = vmatpush1.bf16.msra.mxu0 0
    %1338 = vmatprep.subr.bf16.mxu0 0
    %1339 = vmatpush1.bf16.msra.mxu0 0
    %1340 = vmatprep.subr.bf16.mxu0 0
    %1341 = vmatpush1.bf16.msra.mxu0 0
    %1342 = vmatprep.subr.bf16.mxu0 0
    %1343 = vmatpush1.bf16.msra.mxu0 0
    %1344 = vmatprep.subr.bf16.mxu0 0
    %1345 = vmatpush1.bf16.msra.mxu0 0
    %1346 = vmatprep.subr.bf16.mxu0 0
    %1347 = vmatpush1.bf16.msra.mxu0 0
    %1348 = vmatprep.subr.bf16.mxu0 0
    %1349 = vmatpush1.bf16.msra.mxu0 0
    %1350 = vmatprep.subr.bf16.mxu0 0
    %1351 = vmatpush1.bf16.msra.mxu0 0
    %1352 = vmatprep.subr.bf16.mxu0 0
    %1353 = vmatpush1.bf16.msra.mxu0 0
    %1354 = vmatprep.subr.bf16.mxu0 0
    %1355 = vmatpush1.bf16.msra.mxu0 0
    %1356 = vmatprep.subr.bf16.mxu0 0
    %1357 = vmatpush1.bf16.msra.mxu0 0
    %1358 = vmatprep.subr.bf16.mxu0 0
    %1359 = vmatpush1.bf16.msra.mxu0 0
    %1360 = vmatprep.subr.bf16.mxu0 0
    %1361 = vmatpush1.bf16.msra.mxu0 0
    %1362 = vmatprep.subr.bf16.mxu0 0
    %1363 = vmatpush1.bf16.msra.mxu0 0
    %1364 = vmatprep.mubr.bf16.mxu0 0
    %1365 = vmatmul.mubr.bf16.gmra.mrb[0].mxu0 %v1327
    %v1366 = vpop.f32.mrb[0].mxu0
    %v1367 = vadd.f32 0.0, %v1366
    %v1368 = vpop.f32.mrb[0].mxu0
    %v1369 = vpop.f32.mrb[0].mxu0
    %v1370 = vadd.f32 0.0, %v1369
    %v1371 = vpop.f32.mrb[0].mxu0
    %1372 = vdwg.mxu0
    %v1373 = vrcp.pop %v1319
    %v1374 = vrcp.pop %v1322
    %v1375 = vmul.f32 %v1367, %v1373
    %v1376 = vmul.f32 %v1370, %v1374
    %1377 = vrot.lane.b32.xlu0 %v1250, 120
    %v1378 = vpop.permute.xlu0 %1377
    %1379 = vrot.lane.b32.xlu0 %v1250, 88
    %v1380 = vpop.permute.xlu0 %1379
    %v1382 = vsel %vm308, %v1378, 0
    %v1385 = vsel %vm308, %v1380, 0
    %1387 = vmatprep.subr.bf16.mxu0 0
    %1388 = vmatpush1.bf16.xpose.msra.mxu0 %v1385
    %1389 = vmatprep.subr.bf16.mxu0 0
    %1390 = vmatpush1.bf16.xpose.msra.mxu0 0
    %1391 = vmatprep.subr.bf16.mxu0 0
    %1392 = vmatpush1.bf16.xpose.msra.mxu0 0
    %1393 = vmatprep.subr.bf16.mxu0 0
    %1394 = vmatpush1.bf16.xpose.msra.mxu0 0
    %1395 = vmatprep.subr.bf16.mxu0 0
    %1396 = vmatpush1.bf16.xpose.msra.mxu0 0
    %1397 = vmatprep.subr.bf16.mxu0 0
    %1398 = vmatpush1.bf16.xpose.msra.mxu0 0
    %1399 = vmatprep.subr.bf16.mxu0 0
    %1400 = vmatpush1.bf16.xpose.msra.mxu0 0
    %1401 = vmatprep.subr.bf16.mxu0 0
    %1402 = vmatpush1.bf16.xpose.msra.mxu0 0
    %1403 = vmatprep.subr.bf16.mxu0 0
    %1404 = vmatpush1.bf16.xpose.msra.mxu0 0
    %1405 = vmatprep.subr.bf16.mxu0 0
    %1406 = vmatpush1.bf16.xpose.msra.mxu0 0
    %1407 = vmatprep.subr.bf16.mxu0 0
    %1408 = vmatpush1.bf16.xpose.msra.mxu0 0
    %1409 = vmatprep.subr.bf16.mxu0 0
    %1410 = vmatpush1.bf16.xpose.msra.mxu0 0
    %1411 = vmatprep.subr.bf16.mxu0 0
    %1412 = vmatpush1.bf16.xpose.msra.mxu0 0
    %1413 = vmatprep.subr.bf16.mxu0 0
    %1414 = vmatpush1.bf16.xpose.msra.mxu0 0
    %1415 = vmatprep.subr.bf16.mxu0 0
    %1416 = vmatpush1.bf16.xpose.msra.mxu0 0
    %1417 = vmatprep.subr.bf16.mxu0 0
    %1418 = vmatpush1.bf16.xpose.msra.mxu0 0
    %1419 = vmatprep.mubr.bf16.mxu0 0
    %1420 = vmatmul.mubr.bf16.gmra.mrb[0].mxu0 %v1382
    %v1421 = vpop.f32.mrb[0].mxu0
    %v1422 = vadd.f32 0.0, %v1421
    %v1423 = vpop.f32.mrb[0].mxu0
    %v1424 = vpop.f32.mrb[0].mxu0
    %v1425 = vadd.f32 0.0, %v1424
    %v1426 = vpop.f32.mrb[0].mxu0
    %1427 = vdwg.mxu0
    %v1428 = vmul.f32 %v1422, 0.35355338
    %v1429 = vmul.f32 %v1425, 0.35355338
    %v1430 = vadd.f32 %v1428, %v39
    %v1431 = vadd.f32 %v1429, %v40
    %v1432 = vsel %vm360, %v1430, -inf
    %1433 = vmax.xlane.f32.xlu0 %v1432
    %v1434 = vpop.xlane.xlu0 %1433
    %v1435 = vsel %vm364, %v1431, -inf
    %1436 = vmax.xlane.f32.xlu0 %v1435
    %v1437 = vpop.xlane.xlu0 %1436
    %v1438 = vsub.f32 %v1430, %v1434
    %v1439 = vsub.f32 %v1431, %v1437
    %v1440 = vmul.f32 %v1438, 1.442695
    %v1441 = vpow.pop %v1440
    %v1442 = vmul.f32 %v1439, 1.442695
    %v1443 = vpow.pop %v1442
    %v1444 = vsel %vm360, %v1441, 0.0
    %1445 = vadd.xlane.f32.xlu0 %v1444
    %v1446 = vpop.xlane.xlu0 %1445
    %v1447 = vsel %vm364, %v1443, 0.0
    %1448 = vadd.xlane.f32.xlu0 %v1447
    %v1449 = vpop.xlane.xlu0 %1448
    %v1450 = vpack.c.bf16 %v1443, %v1441
    %1451 = vrot.lane.b32.xlu0 %v1250, 56
    %v1452 = vpop.permute.xlu0 %1451
    %v1454 = vsel %vm360, %v1450, 0
    %v1457 = vsel %vm386, %v1452, 0
    %1459 = vmatprep.subr.bf16.mxu0 0
    %1460 = vmatpush1.bf16.msra.mxu0 %v1457
    %1461 = vmatprep.subr.bf16.mxu0 0
    %1462 = vmatpush1.bf16.msra.mxu0 0
    %1463 = vmatprep.subr.bf16.mxu0 0
    %1464 = vmatpush1.bf16.msra.mxu0 0
    %1465 = vmatprep.subr.bf16.mxu0 0
    %1466 = vmatpush1.bf16.msra.mxu0 0
    %1467 = vmatprep.subr.bf16.mxu0 0
    %1468 = vmatpush1.bf16.msra.mxu0 0
    %1469 = vmatprep.subr.bf16.mxu0 0
    %1470 = vmatpush1.bf16.msra.mxu0 0
    %1471 = vmatprep.subr.bf16.mxu0 0
    %1472 = vmatpush1.bf16.msra.mxu0 0
    %1473 = vmatprep.subr.bf16.mxu0 0
    %1474 = vmatpush1.bf16.msra.mxu0 0
    %1475 = vmatprep.subr.bf16.mxu0 0
    %1476 = vmatpush1.bf16.msra.mxu0 0
    %1477 = vmatprep.subr.bf16.mxu0 0
    %1478 = vmatpush1.bf16.msra.mxu0 0
    %1479 = vmatprep.subr.bf16.mxu0 0
    %1480 = vmatpush1.bf16.msra.mxu0 0
    %1481 = vmatprep.subr.bf16.mxu0 0
    %1482 = vmatpush1.bf16.msra.mxu0 0
    %1483 = vmatprep.subr.bf16.mxu0 0
    %1484 = vmatpush1.bf16.msra.mxu0 0
    %1485 = vmatprep.subr.bf16.mxu0 0
    %1486 = vmatpush1.bf16.msra.mxu0 0
    %1487 = vmatprep.subr.bf16.mxu0 0
    %1488 = vmatpush1.bf16.msra.mxu0 0
    %1489 = vmatprep.subr.bf16.mxu0 0
    %1490 = vmatpush1.bf16.msra.mxu0 0
    %1491 = vmatprep.mubr.bf16.mxu0 0
    %1492 = vmatmul.mubr.bf16.gmra.mrb[0].mxu0 %v1454
    %v1493 = vpop.f32.mrb[0].mxu0
    %v1494 = vadd.f32 0.0, %v1493
    %v1495 = vpop.f32.mrb[0].mxu0
    %v1496 = vpop.f32.mrb[0].mxu0
    %v1497 = vadd.f32 0.0, %v1496
    %v1498 = vpop.f32.mrb[0].mxu0
    %1499 = vdwg.mxu0
    %v1500 = vrcp.pop %v1446
    %v1501 = vrcp.pop %v1449
    %v1502 = vmul.f32 %v1494, %v1500
    %v1503 = vmul.f32 %v1497, %v1501
    %1504 = vrot.lane.b32.xlu0 %v1250, 112
    %v1505 = vpop.permute.xlu0 %1504
    %1506 = vrot.lane.b32.xlu0 %v1250, 80
    %v1507 = vpop.permute.xlu0 %1506
    %v1509 = vsel %vm308, %v1505, 0
    %v1512 = vsel %vm308, %v1507, 0
    %1514 = vmatprep.subr.bf16.mxu0 0
    %1515 = vmatpush1.bf16.xpose.msra.mxu0 %v1512
    %1516 = vmatprep.subr.bf16.mxu0 0
    %1517 = vmatpush1.bf16.xpose.msra.mxu0 0
    %1518 = vmatprep.subr.bf16.mxu0 0
    %1519 = vmatpush1.bf16.xpose.msra.mxu0 0
    %1520 = vmatprep.subr.bf16.mxu0 0
    %1521 = vmatpush1.bf16.xpose.msra.mxu0 0
    %1522 = vmatprep.subr.bf16.mxu0 0
    %1523 = vmatpush1.bf16.xpose.msra.mxu0 0
    %1524 = vmatprep.subr.bf16.mxu0 0
    %1525 = vmatpush1.bf16.xpose.msra.mxu0 0
    %1526 = vmatprep.subr.bf16.mxu0 0
    %1527 = vmatpush1.bf16.xpose.msra.mxu0 0
    %1528 = vmatprep.subr.bf16.mxu0 0
    %1529 = vmatpush1.bf16.xpose.msra.mxu0 0
    %1530 = vmatprep.subr.bf16.mxu0 0
    %1531 = vmatpush1.bf16.xpose.msra.mxu0 0
    %1532 = vmatprep.subr.bf16.mxu0 0
    %1533 = vmatpush1.bf16.xpose.msra.mxu0 0
    %1534 = vmatprep.subr.bf16.mxu0 0
    %1535 = vmatpush1.bf16.xpose.msra.mxu0 0
    %1536 = vmatprep.subr.bf16.mxu0 0
    %1537 = vmatpush1.bf16.xpose.msra.mxu0 0
    %1538 = vmatprep.subr.bf16.mxu0 0
    %1539 = vmatpush1.bf16.xpose.msra.mxu0 0
    %1540 = vmatprep.subr.bf16.mxu0 0
    %1541 = vmatpush1.bf16.xpose.msra.mxu0 0
    %1542 = vmatprep.subr.bf16.mxu0 0
    %1543 = vmatpush1.bf16.xpose.msra.mxu0 0
    %1544 = vmatprep.subr.bf16.mxu0 0
    %1545 = vmatpush1.bf16.xpose.msra.mxu0 0
    %1546 = vmatprep.mubr.bf16.mxu0 0
    %1547 = vmatmul.mubr.bf16.gmra.mrb[0].mxu0 %v1509
    %v1548 = vpop.f32.mrb[0].mxu0
    %v1549 = vadd.f32 0.0, %v1548
    %v1550 = vpop.f32.mrb[0].mxu0
    %v1551 = vpop.f32.mrb[0].mxu0
    %v1552 = vadd.f32 0.0, %v1551
    %v1553 = vpop.f32.mrb[0].mxu0
    %1554 = vdwg.mxu0
    %v1555 = vmul.f32 %v1549, 0.35355338
    %v1556 = vmul.f32 %v1552, 0.35355338
    %v1557 = vadd.f32 %v1555, %v39
    %v1558 = vadd.f32 %v1556, %v40
    %v1559 = vsel %vm360, %v1557, -inf
    %1560 = vmax.xlane.f32.xlu0 %v1559
    %v1561 = vpop.xlane.xlu0 %1560
    %v1562 = vsel %vm364, %v1558, -inf
    %1563 = vmax.xlane.f32.xlu0 %v1562
    %v1564 = vpop.xlane.xlu0 %1563
    %v1565 = vsub.f32 %v1557, %v1561
    %v1566 = vsub.f32 %v1558, %v1564
    %v1567 = vmul.f32 %v1565, 1.442695
    %v1568 = vpow.pop %v1567
    %v1569 = vmul.f32 %v1566, 1.442695
    %v1570 = vpow.pop %v1569
    %v1571 = vsel %vm360, %v1568, 0.0
    %1572 = vadd.xlane.f32.xlu0 %v1571
    %v1573 = vpop.xlane.xlu0 %1572
    %v1574 = vsel %vm364, %v1570, 0.0
    %1575 = vadd.xlane.f32.xlu0 %v1574
    %v1576 = vpop.xlane.xlu0 %1575
    %v1577 = vpack.c.bf16 %v1570, %v1568
    %1578 = vrot.lane.b32.xlu0 %v1250, 48
    %v1579 = vpop.permute.xlu0 %1578
    %v1581 = vsel %vm360, %v1577, 0
    %v1584 = vsel %vm386, %v1579, 0
    %1586 = vmatprep.subr.bf16.mxu0 0
    %1587 = vmatpush1.bf16.msra.mxu0 %v1584
    %1588 = vmatprep.subr.bf16.mxu0 0
    %1589 = vmatpush1.bf16.msra.mxu0 0
    %1590 = vmatprep.subr.bf16.mxu0 0
    %1591 = vmatpush1.bf16.msra.mxu0 0
    %1592 = vmatprep.subr.bf16.mxu0 0
    %1593 = vmatpush1.bf16.msra.mxu0 0
    %1594 = vmatprep.subr.bf16.mxu0 0
    %1595 = vmatpush1.bf16.msra.mxu0 0
    %1596 = vmatprep.subr.bf16.mxu0 0
    %1597 = vmatpush1.bf16.msra.mxu0 0
    %1598 = vmatprep.subr.bf16.mxu0 0
    %1599 = vmatpush1.bf16.msra.mxu0 0
    %1600 = vmatprep.subr.bf16.mxu0 0
    %1601 = vmatpush1.bf16.msra.mxu0 0
    %1602 = vmatprep.subr.bf16.mxu0 0
    %1603 = vmatpush1.bf16.msra.mxu0 0
    %1604 = vmatprep.subr.bf16.mxu0 0
    %1605 = vmatpush1.bf16.msra.mxu0 0
    %1606 = vmatprep.subr.bf16.mxu0 0
    %1607 = vmatpush1.bf16.msra.mxu0 0
    %1608 = vmatprep.subr.bf16.mxu0 0
    %1609 = vmatpush1.bf16.msra.mxu0 0
    %1610 = vmatprep.subr.bf16.mxu0 0
    %1611 = vmatpush1.bf16.msra.mxu0 0
    %1612 = vmatprep.subr.bf16.mxu0 0
    %1613 = vmatpush1.bf16.msra.mxu0 0
    %1614 = vmatprep.subr.bf16.mxu0 0
    %1615 = vmatpush1.bf16.msra.mxu0 0
    %1616 = vmatprep.subr.bf16.mxu0 0
    %1617 = vmatpush1.bf16.msra.mxu0 0
    %1618 = vmatprep.mubr.bf16.mxu0 0
    %1619 = vmatmul.mubr.bf16.gmra.mrb[0].mxu0 %v1581
    %v1620 = vpop.f32.mrb[0].mxu0
    %v1621 = vadd.f32 0.0, %v1620
    %v1622 = vpop.f32.mrb[0].mxu0
    %v1623 = vpop.f32.mrb[0].mxu0
    %v1624 = vadd.f32 0.0, %v1623
    %v1625 = vpop.f32.mrb[0].mxu0
    %1626 = vdwg.mxu0
    %v1627 = vrcp.pop %v1573
    %v1628 = vrcp.pop %v1576
    %v1629 = vmul.f32 %v1621, %v1627
    %v1630 = vmul.f32 %v1624, %v1628
    %1631 = vrot.lane.b32.xlu0 %v1250, 104
    %v1632 = vpop.permute.xlu0 %1631
    %1633 = vrot.lane.b32.xlu0 %v1250, 72
    %v1634 = vpop.permute.xlu0 %1633
    %v1636 = vsel %vm308, %v1632, 0
    %v1639 = vsel %vm308, %v1634, 0
    %1641 = vmatprep.subr.bf16.mxu0 0
    %1642 = vmatpush1.bf16.xpose.msra.mxu0 %v1639
    %1643 = vmatprep.subr.bf16.mxu0 0
    %1644 = vmatpush1.bf16.xpose.msra.mxu0 0
    %1645 = vmatprep.subr.bf16.mxu0 0
    %1646 = vmatpush1.bf16.xpose.msra.mxu0 0
    %1647 = vmatprep.subr.bf16.mxu0 0
    %1648 = vmatpush1.bf16.xpose.msra.mxu0 0
    %1649 = vmatprep.subr.bf16.mxu0 0
    %1650 = vmatpush1.bf16.xpose.msra.mxu0 0
    %1651 = vmatprep.subr.bf16.mxu0 0
    %1652 = vmatpush1.bf16.xpose.msra.mxu0 0
    %1653 = vmatprep.subr.bf16.mxu0 0
    %1654 = vmatpush1.bf16.xpose.msra.mxu0 0
    %1655 = vmatprep.subr.bf16.mxu0 0
    %1656 = vmatpush1.bf16.xpose.msra.mxu0 0
    %1657 = vmatprep.subr.bf16.mxu0 0
    %1658 = vmatpush1.bf16.xpose.msra.mxu0 0
    %1659 = vmatprep.subr.bf16.mxu0 0
    %1660 = vmatpush1.bf16.xpose.msra.mxu0 0
    %1661 = vmatprep.subr.bf16.mxu0 0
    %1662 = vmatpush1.bf16.xpose.msra.mxu0 0
    %1663 = vmatprep.subr.bf16.mxu0 0
    %1664 = vmatpush1.bf16.xpose.msra.mxu0 0
    %1665 = vmatprep.subr.bf16.mxu0 0
    %1666 = vmatpush1.bf16.xpose.msra.mxu0 0
    %1667 = vmatprep.subr.bf16.mxu0 0
    %1668 = vmatpush1.bf16.xpose.msra.mxu0 0
    %1669 = vmatprep.subr.bf16.mxu0 0
    %1670 = vmatpush1.bf16.xpose.msra.mxu0 0
    %1671 = vmatprep.subr.bf16.mxu0 0
    %1672 = vmatpush1.bf16.xpose.msra.mxu0 0
    %1673 = vmatprep.mubr.bf16.mxu0 0
    %1674 = vmatmul.mubr.bf16.gmra.mrb[0].mxu0 %v1636
    %v1675 = vpop.f32.mrb[0].mxu0
    %v1676 = vadd.f32 0.0, %v1675
    %v1677 = vpop.f32.mrb[0].mxu0
    %v1678 = vpop.f32.mrb[0].mxu0
    %v1679 = vadd.f32 0.0, %v1678
    %v1680 = vpop.f32.mrb[0].mxu0
    %1681 = vdwg.mxu0
    %v1682 = vmul.f32 %v1676, 0.35355338
    %v1683 = vmul.f32 %v1679, 0.35355338
    %v1684 = vadd.f32 %v1682, %v39
    %v1685 = vadd.f32 %v1683, %v40
    %v1686 = vsel %vm360, %v1684, -inf
    %1687 = vmax.xlane.f32.xlu0 %v1686
    %v1688 = vpop.xlane.xlu0 %1687
    %v1689 = vsel %vm364, %v1685, -inf
    %1690 = vmax.xlane.f32.xlu0 %v1689
    %v1691 = vpop.xlane.xlu0 %1690
    %v1692 = vsub.f32 %v1684, %v1688
    %v1693 = vsub.f32 %v1685, %v1691
    %v1694 = vmul.f32 %v1692, 1.442695
    %v1695 = vpow.pop %v1694
    %v1696 = vmul.f32 %v1693, 1.442695
    %v1697 = vpow.pop %v1696
    %v1698 = vsel %vm360, %v1695, 0.0
    %1699 = vadd.xlane.f32.xlu0 %v1698
    %v1700 = vpop.xlane.xlu0 %1699
    %v1701 = vsel %vm364, %v1697, 0.0
    %1702 = vadd.xlane.f32.xlu0 %v1701
    %v1703 = vpop.xlane.xlu0 %1702
    %v1704 = vpack.c.bf16 %v1697, %v1695
    %1705 = vrot.lane.b32.xlu0 %v1250, 40
    %v1706 = vpop.permute.xlu0 %1705
    %v1708 = vsel %vm360, %v1704, 0
    %v1711 = vsel %vm386, %v1706, 0
    %1713 = vmatprep.subr.bf16.mxu0 0
    %1714 = vmatpush1.bf16.msra.mxu0 %v1711
    %1715 = vmatprep.subr.bf16.mxu0 0
    %1716 = vmatpush1.bf16.msra.mxu0 0
    %1717 = vmatprep.subr.bf16.mxu0 0
    %1718 = vmatpush1.bf16.msra.mxu0 0
    %1719 = vmatprep.subr.bf16.mxu0 0
    %1720 = vmatpush1.bf16.msra.mxu0 0
    %1721 = vmatprep.subr.bf16.mxu0 0
    %1722 = vmatpush1.bf16.msra.mxu0 0
    %1723 = vmatprep.subr.bf16.mxu0 0
    %1724 = vmatpush1.bf16.msra.mxu0 0
    %1725 = vmatprep.subr.bf16.mxu0 0
    %1726 = vmatpush1.bf16.msra.mxu0 0
    %1727 = vmatprep.subr.bf16.mxu0 0
    %1728 = vmatpush1.bf16.msra.mxu0 0
    %1729 = vmatprep.subr.bf16.mxu0 0
    %1730 = vmatpush1.bf16.msra.mxu0 0
    %1731 = vmatprep.subr.bf16.mxu0 0
    %1732 = vmatpush1.bf16.msra.mxu0 0
    %1733 = vmatprep.subr.bf16.mxu0 0
    %1734 = vmatpush1.bf16.msra.mxu0 0
    %1735 = vmatprep.subr.bf16.mxu0 0
    %1736 = vmatpush1.bf16.msra.mxu0 0
    %1737 = vmatprep.subr.bf16.mxu0 0
    %1738 = vmatpush1.bf16.msra.mxu0 0
    %1739 = vmatprep.subr.bf16.mxu0 0
    %1740 = vmatpush1.bf16.msra.mxu0 0
    %1741 = vmatprep.subr.bf16.mxu0 0
    %1742 = vmatpush1.bf16.msra.mxu0 0
    %1743 = vmatprep.subr.bf16.mxu0 0
    %1744 = vmatpush1.bf16.msra.mxu0 0
    %1745 = vmatprep.mubr.bf16.mxu0 0
    %1746 = vmatmul.mubr.bf16.gmra.mrb[0].mxu0 %v1708
    %v1747 = vpop.f32.mrb[0].mxu0
    %v1748 = vadd.f32 0.0, %v1747
    %v1749 = vpop.f32.mrb[0].mxu0
    %v1750 = vpop.f32.mrb[0].mxu0
    %v1751 = vadd.f32 0.0, %v1750
    %v1752 = vpop.f32.mrb[0].mxu0
    %1753 = vdwg.mxu0
    %v1754 = vrcp.pop %v1700
    %v1755 = vrcp.pop %v1703
    %v1756 = vmul.f32 %v1748, %v1754
    %v1757 = vmul.f32 %v1751, %v1755
    %1760 = vrot.lane.b32.xlu0 %v1502, 8
    %v1761 = vpop.permute.xlu0 %1760
    %1762 = vrot.lane.b32.xlu0 %v1503, 8
    %v1763 = vpop.permute.xlu0 %1762
    %1768 = vrot.lane.b32.xlu0 %v1629, 16
    %v1769 = vpop.permute.xlu0 %1768
    %1770 = vrot.lane.b32.xlu0 %v1630, 16
    %v1771 = vpop.permute.xlu0 %1770
    %1776 = vrot.lane.b32.xlu0 %v1756, 24
    %v1777 = vpop.permute.xlu0 %1776
    %1778 = vrot.lane.b32.xlu0 %v1757, 24
    %v1779 = vpop.permute.xlu0 %1778
    %v1782 = vsel %vm308, %v1375, %v1761
    %v1783 = vsel %vm308, %v1376, %v1763
    %v1784 = vsel %vm842, %v1782, %v1769
    %v1785 = vsel %vm842, %v1783, %v1771
    %v1786 = vsel %vm845, %v1784, %v1777
    %v1787 = vsel %vm845, %v1785, %v1779
    %v1788 = vpack.c.bf16 %v1787, %v1786
    %s1789 = scalar_lea.vmem %s5, 16
    %v1790 = vld [vmem:[%s1789] sm:$0xf]
    %v1791 = vld [vmem:[%s1789 + $0x4] sm:$0xf]
    %v1792 = vld [vmem:[%s1789 + $0x8] sm:$0xf]
    %v1793 = vld [vmem:[%s1789 + $0xc] sm:$0xf]
    %v1798 = vunpack.c.l.b16 %v1790
    %v1799 = vunpack.c.l.b16 %v1791
    %v1800 = vunpack.c.l.b16 %v1792
    %v1801 = vunpack.c.l.b16 %v1793
    %v1802 = vpack.c.b16 %v1799, %v1798
    %v1803 = vpack.c.b16 %v1801, %v1800
    %v1807 = vsel %vm198, %v1788, 0
    %1809 = vmatprep.subr.bf16.mxu0 0
    %1810 = vmatpush1.bf16.msra.mxu0 %v1802
    %1811 = vmatprep.subr.bf16.mxu0 0
    %1812 = vmatpush1.bf16.msra.mxu0 %v1803
    %1813 = vmatprep.subr.bf16.mxu0 0
    %1814 = vmatpush1.bf16.msra.mxu0 0
    %1815 = vmatprep.subr.bf16.mxu0 0
    %1816 = vmatpush1.bf16.msra.mxu0 0
    %1817 = vmatprep.subr.bf16.mxu0 0
    %1818 = vmatpush1.bf16.msra.mxu0 0
    %1819 = vmatprep.subr.bf16.mxu0 0
    %1820 = vmatpush1.bf16.msra.mxu0 0
    %1821 = vmatprep.subr.bf16.mxu0 0
    %1822 = vmatpush1.bf16.msra.mxu0 0
    %1823 = vmatprep.subr.bf16.mxu0 0
    %1824 = vmatpush1.bf16.msra.mxu0 0
    %1825 = vmatprep.subr.bf16.mxu0 0
    %1826 = vmatpush1.bf16.msra.mxu0 0
    %1827 = vmatprep.subr.bf16.mxu0 0
    %1828 = vmatpush1.bf16.msra.mxu0 0
    %1829 = vmatprep.subr.bf16.mxu0 0
    %1830 = vmatpush1.bf16.msra.mxu0 0
    %1831 = vmatprep.subr.bf16.mxu0 0
    %1832 = vmatpush1.bf16.msra.mxu0 0
    %1833 = vmatprep.subr.bf16.mxu0 0
    %1834 = vmatpush1.bf16.msra.mxu0 0
    %1835 = vmatprep.subr.bf16.mxu0 0
    %1836 = vmatpush1.bf16.msra.mxu0 0
    %1837 = vmatprep.subr.bf16.mxu0 0
    %1838 = vmatpush1.bf16.msra.mxu0 0
    %1839 = vmatprep.subr.bf16.mxu0 0
    %1840 = vmatpush1.bf16.msra.mxu0 0
    %1841 = vmatprep.mubr.bf16.mxu0 0
    %1842 = vmatmul.mubr.bf16.gmra.mrb[0].mxu0 %v1807
    %v1843 = vpop.f32.mrb[0].mxu0
    %v1844 = vadd.f32 0.0, %v1843
    %v1845 = vpop.f32.mrb[0].mxu0
    %v1846 = vpop.f32.mrb[0].mxu0
    %v1847 = vadd.f32 0.0, %v1846
    %v1848 = vpop.f32.mrb[0].mxu0
    %1849 = vdwg.mxu0
    %v1850 = vadd.f32 %v1142, %v1844
    %v1851 = vadd.f32 %v1143, %v1847
    %v1852 = vlaneseq
    %v1853 = vshrl.u32 %v1852, 7
    %v1854 = vsub.s32 3, %v1853
    %v1855 = vrot.slane %v1145, %v1854
    %v1856 = vadd.f32 %v1850, %v1855
    %v1857 = vadd.f32 %v1851, %v1855
    %v1858 = vsel %vm198, %v1856, 0.0
    %1859 = vadd.xlane.f32.xlu0 %v1858
    %v1860 = vpop.xlane.xlu0 %1859
    %v1861 = vsel %vm202, %v1857, 0.0
    %1862 = vadd.xlane.f32.xlu0 %v1861
    %v1863 = vpop.xlane.xlu0 %1862
    %v1864 = vmul.f32 %v1860, %v206
    %v1865 = vmul.f32 %v1863, %v206
    %v1866 = vsub.f32 %v1856, %v1864
    %v1867 = vsub.f32 %v1857, %v1865
    %v1868 = vmul.f32 %v1866, %v1866
    %v1869 = vmul.f32 %v1867, %v1867
    %v1870 = vsel %vm198, %v1868, 0.0
    %1871 = vadd.xlane.f32.xlu0 %v1870
    %v1872 = vpop.xlane.xlu0 %1871
    %v1873 = vsel %vm202, %v1869, 0.0
    %1874 = vadd.xlane.f32.xlu0 %v1873
    %v1875 = vpop.xlane.xlu0 %1874
    %v1876 = vmul.f32 %v1872, %v206
    %v1877 = vmul.f32 %v1875, %v206
    %v1878 = vadd.f32 %v1876, 1e-06
    %v1879 = vadd.f32 %v1877, 1e-06
    %v1880 = vrsqrt.pop %v1878
    %v1881 = vrsqrt.pop %v1879
    %v1882 = vmul.f32 %v1866, %v1880
    %v1883 = vmul.f32 %v1867, %v1881
    %v1884 = vlaneseq
    %v1885 = vshrl.u32 %v1884, 7
    %v1886 = vsub.s32 4, %v1885
    %v1887 = vrot.slane %v1145, %v1886
    %v1888 = vmul.f32 %v1882, %v1887
    %v1889 = vmul.f32 %v1883, %v1887
    %v1890 = vlaneseq
    %v1891 = vshrl.u32 %v1890, 7
    %v1892 = vsub.s32 5, %v1891
    %v1893 = vrot.slane %v1145, %v1892
    %v1894 = vadd.f32 %v1888, %v1893
    %v1895 = vadd.f32 %v1889, %v1893
    %v1896 = vpack.c.bf16 %v1895, %v1894
    %s1897 = scalar_lea.vmem %s6, 16
    %v1898 = vld [vmem:[%s1897] sm:$0xf]
    %v1899 = vld [vmem:[%s1897 + $0x4] sm:$0xf]
    %v1900 = vld [vmem:[%s1897 + $0x8] sm:$0xf]
    %v1901 = vld [vmem:[%s1897 + $0xc] sm:$0xf]
    %v1902 = vlaneseq
    %v1903 = vshrl.u32 %v1902, 7
    %v1904 = vsub.s32 6, %v1903
    %v1905 = vrot.slane %v1145, %v1904
    %v1910 = vunpack.c.l.b16 %v1898
    %v1911 = vunpack.c.l.b16 %v1899
    %v1912 = vunpack.c.l.b16 %v1900
    %v1913 = vunpack.c.l.b16 %v1901
    %v1914 = vpack.c.b16 %v1911, %v1910
    %v1915 = vpack.c.b16 %v1913, %v1912
    %v1919 = vsel %vm198, %v1896, 0
    %1921 = vmatprep.subr.bf16.mxu0 0
    %1922 = vmatpush1.bf16.msra.mxu0 %v1914
    %1923 = vmatprep.subr.bf16.mxu0 0
    %1924 = vmatpush1.bf16.msra.mxu0 %v1915
    %1925 = vmatprep.subr.bf16.mxu0 0
    %1926 = vmatpush1.bf16.msra.mxu0 0
    %1927 = vmatprep.subr.bf16.mxu0 0
    %1928 = vmatpush1.bf16.msra.mxu0 0
    %1929 = vmatprep.subr.bf16.mxu0 0
    %1930 = vmatpush1.bf16.msra.mxu0 0
    %1931 = vmatprep.subr.bf16.mxu0 0
    %1932 = vmatpush1.bf16.msra.mxu0 0
    %1933 = vmatprep.subr.bf16.mxu0 0
    %1934 = vmatpush1.bf16.msra.mxu0 0
    %1935 = vmatprep.subr.bf16.mxu0 0
    %1936 = vmatpush1.bf16.msra.mxu0 0
    %1937 = vmatprep.subr.bf16.mxu0 0
    %1938 = vmatpush1.bf16.msra.mxu0 0
    %1939 = vmatprep.subr.bf16.mxu0 0
    %1940 = vmatpush1.bf16.msra.mxu0 0
    %1941 = vmatprep.subr.bf16.mxu0 0
    %1942 = vmatpush1.bf16.msra.mxu0 0
    %1943 = vmatprep.subr.bf16.mxu0 0
    %1944 = vmatpush1.bf16.msra.mxu0 0
    %1945 = vmatprep.subr.bf16.mxu0 0
    %1946 = vmatpush1.bf16.msra.mxu0 0
    %1947 = vmatprep.subr.bf16.mxu0 0
    %1948 = vmatpush1.bf16.msra.mxu0 0
    %1949 = vmatprep.subr.bf16.mxu0 0
    %1950 = vmatpush1.bf16.msra.mxu0 0
    %1951 = vmatprep.subr.bf16.mxu0 0
    %1952 = vmatpush1.bf16.msra.mxu0 0
    %1953 = vmatprep.mubr.bf16.mxu0 0
    %1954 = vmatmul.mubr.bf16.gmra.mrb[0].mxu0 %v1919
    %v1955 = vpop.f32.mrb[0].mxu0
    %v1956 = vadd.f32 %v1905, %v1955
    %v1957 = vpop.f32.mrb[0].mxu0
    %v1958 = vpop.f32.mrb[0].mxu0
    %v1959 = vadd.f32 %v1905, %v1958
    %v1960 = vpop.f32.mrb[0].mxu0
    %1961 = vdwg.mxu0
    %v1962 = vmul.f32 %v1956, 0.5
    %v1963 = vmul.f32 %v1959, 0.5
    %v1964 = vmul.f32 %v1956, 0.70710677
    %v1965 = vmul.f32 %v1959, 0.70710677
    %v1966 = verf.f32.pop %v1964
    %v1967 = verf.f32.pop %v1965
    %v1968 = vadd.f32 %v1966, 1.0
    %v1969 = vadd.f32 %v1967, 1.0
    %v1970 = vmul.f32 %v1962, %v1968
    %v1971 = vmul.f32 %v1963, %v1969
    %v1972 = vpack.c.bf16 %v1971, %v1970
    %s1973 = scalar_lea.vmem %s7, 64
    %v1974 = vld [vmem:[%s1973] sm:$0xf]
    %v1975 = vld [vmem:[%s1973 + $0x4] sm:$0xf]
    %v1976 = vld [vmem:[%s1973 + $0x8] sm:$0xf]
    %v1977 = vld [vmem:[%s1973 + $0xc] sm:$0xf]
    %v1978 = vld [vmem:[%s1973 + $0x10] sm:$0xf]
    %v1979 = vld [vmem:[%s1973 + $0x14] sm:$0xf]
    %v1980 = vld [vmem:[%s1973 + $0x18] sm:$0xf]
    %v1981 = vld [vmem:[%s1973 + $0x1c] sm:$0xf]
    %v1982 = vld [vmem:[%s1973 + $0x20] sm:$0xf]
    %v1983 = vld [vmem:[%s1973 + $0x24] sm:$0xf]
    %v1984 = vld [vmem:[%s1973 + $0x28] sm:$0xf]
    %v1985 = vld [vmem:[%s1973 + $0x2c] sm:$0xf]
    %v1986 = vld [vmem:[%s1973 + $0x30] sm:$0xf]
    %v1987 = vld [vmem:[%s1973 + $0x34] sm:$0xf]
    %v1988 = vld [vmem:[%s1973 + $0x38] sm:$0xf]
    %v1989 = vld [vmem:[%s1973 + $0x3c] sm:$0xf]
    %v2006 = vunpack.c.l.b16 %v1974
    %v2007 = vunpack.c.l.b16 %v1975
    %v2008 = vunpack.c.l.b16 %v1976
    %v2009 = vunpack.c.l.b16 %v1977
    %v2010 = vunpack.c.l.b16 %v1978
    %v2011 = vunpack.c.l.b16 %v1979
    %v2012 = vunpack.c.l.b16 %v1980
    %v2013 = vunpack.c.l.b16 %v1981
    %v2014 = vunpack.c.l.b16 %v1982
    %v2015 = vunpack.c.l.b16 %v1983
    %v2016 = vunpack.c.l.b16 %v1984
    %v2017 = vunpack.c.l.b16 %v1985
    %v2018 = vunpack.c.l.b16 %v1986
    %v2019 = vunpack.c.l.b16 %v1987
    %v2020 = vunpack.c.l.b16 %v1988
    %v2021 = vunpack.c.l.b16 %v1989
    %v2022 = vpack.c.b16 %v2007, %v2006
    %v2023 = vpack.c.b16 %v2009, %v2008
    %v2024 = vpack.c.b16 %v2011, %v2010
    %v2025 = vpack.c.b16 %v2013, %v2012
    %v2026 = vpack.c.b16 %v2015, %v2014
    %v2027 = vpack.c.b16 %v2017, %v2016
    %v2028 = vpack.c.b16 %v2019, %v2018
    %v2029 = vpack.c.b16 %v2021, %v2020
    %2038 = vmatprep.subr.bf16.mxu0 0
    %2039 = vmatpush1.bf16.msra.mxu0 %v2022
    %2040 = vmatprep.subr.bf16.mxu0 0
    %2041 = vmatpush1.bf16.msra.mxu0 %v2023
    %2042 = vmatprep.subr.bf16.mxu0 0
    %2043 = vmatpush1.bf16.msra.mxu0 %v2024
    %2044 = vmatprep.subr.bf16.mxu0 0
    %2045 = vmatpush1.bf16.msra.mxu0 %v2025
    %2046 = vmatprep.subr.bf16.mxu0 0
    %2047 = vmatpush1.bf16.msra.mxu0 %v2026
    %2048 = vmatprep.subr.bf16.mxu0 0
    %2049 = vmatpush1.bf16.msra.mxu0 %v2027
    %2050 = vmatprep.subr.bf16.mxu0 0
    %2051 = vmatpush1.bf16.msra.mxu0 %v2028
    %2052 = vmatprep.subr.bf16.mxu0 0
    %2053 = vmatpush1.bf16.msra.mxu0 %v2029
    %2054 = vmatprep.subr.bf16.mxu0 0
    %2055 = vmatpush1.bf16.msra.mxu0 0
    %2056 = vmatprep.subr.bf16.mxu0 0
    %2057 = vmatpush1.bf16.msra.mxu0 0
    %2058 = vmatprep.subr.bf16.mxu0 0
    %2059 = vmatpush1.bf16.msra.mxu0 0
    %2060 = vmatprep.subr.bf16.mxu0 0
    %2061 = vmatpush1.bf16.msra.mxu0 0
    %2062 = vmatprep.subr.bf16.mxu0 0
    %2063 = vmatpush1.bf16.msra.mxu0 0
    %2064 = vmatprep.subr.bf16.mxu0 0
    %2065 = vmatpush1.bf16.msra.mxu0 0
    %2066 = vmatprep.subr.bf16.mxu0 0
    %2067 = vmatpush1.bf16.msra.mxu0 0
    %2068 = vmatprep.subr.bf16.mxu0 0
    %2069 = vmatpush1.bf16.msra.mxu0 0
    %2070 = vmatprep.mubr.bf16.mxu0 0
    %2071 = vmatmul.mubr.bf16.gmra.mrb[0].mxu0 %v1972
    %v2072 = vpop.f32.mrb[0].mxu0
    %v2073 = vadd.f32 0.0, %v2072
    %v2074 = vpop.f32.mrb[0].mxu0
    %v2075 = vpop.f32.mrb[0].mxu0
    %v2076 = vadd.f32 0.0, %v2075
    %v2077 = vpop.f32.mrb[0].mxu0
    %2078 = vdwg.mxu0
    %v2079 = vadd.f32 %v1856, %v2073
    %v2080 = vadd.f32 %v1857, %v2076
    %v2081 = vlaneseq
    %v2082 = vshrl.u32 %v2081, 7
    %v2083 = vsub.s32 7, %v2082
    %v2084 = vrot.slane %v1145, %v2083
    %v2085 = vadd.f32 %v2079, %v2084
    %v2086 = vadd.f32 %v2080, %v2084
    %v2087 = vld [vmem:[%s9] sm:$0xff]
    %v2088 = vld [vmem:[%s9 + $0x8] sm:$0xff]
    %v2089 = vld [vmem:[%s9 + $0x10] sm:$0xff]
    %v2090 = vld [vmem:[%s9 + $0x18] sm:$0xff]
    %v2091 = vld [vmem:[%s9 + $0x20] sm:$0xff]
    %v2092 = vld [vmem:[%s9 + $0x28] sm:$0xff]
    %v2093 = vsel %vm198, %v2085, 0.0
    %2094 = vadd.xlane.f32.xlu0 %v2093
    %v2095 = vpop.xlane.xlu0 %2094
    %v2096 = vsel %vm202, %v2086, 0.0
    %2097 = vadd.xlane.f32.xlu0 %v2096
    %v2098 = vpop.xlane.xlu0 %2097
    %v2099 = vmul.f32 %v2095, %v206
    %v2100 = vmul.f32 %v2098, %v206
    %v2101 = vsub.f32 %v2085, %v2099
    %v2102 = vsub.f32 %v2086, %v2100
    %v2103 = vmul.f32 %v2101, %v2101
    %v2104 = vmul.f32 %v2102, %v2102
    %v2105 = vsel %vm198, %v2103, 0.0
    %2106 = vadd.xlane.f32.xlu0 %v2105
    %v2107 = vpop.xlane.xlu0 %2106
    %v2108 = vsel %vm202, %v2104, 0.0
    %2109 = vadd.xlane.f32.xlu0 %v2108
    %v2110 = vpop.xlane.xlu0 %2109
    %v2111 = vmul.f32 %v2107, %v206
    %v2112 = vmul.f32 %v2110, %v206
    %v2113 = vadd.f32 %v2111, 1e-06
    %v2114 = vadd.f32 %v2112, 1e-06
    %v2115 = vrsqrt.pop %v2113
    %v2116 = vrsqrt.pop %v2114
    %v2117 = vmul.f32 %v2101, %v2115
    %v2118 = vmul.f32 %v2102, %v2116
    %v2119 = vlaneseq
    %v2120 = vshrl.u32 %v2119, 7
    %v2121 = vsub.s32 0, %v2120
    %v2122 = vrot.slane %v2087, %v2121
    %v2123 = vmul.f32 %v2117, %v2122
    %v2124 = vmul.f32 %v2118, %v2122
    %v2125 = vlaneseq
    %v2126 = vshrl.u32 %v2125, 7
    %v2127 = vsub.s32 1, %v2126
    %v2128 = vrot.slane %v2087, %v2127
    %v2129 = vadd.f32 %v2123, %v2128
    %v2130 = vadd.f32 %v2124, %v2128
    %v2131 = vpack.c.bf16 %v2130, %v2129
    %v2132 = vpack.c.bf16 %v2089, %v2088
    %v2133 = vpack.c.bf16 %v2091, %v2090
    %v2134 = vlaneseq
    %v2135 = vshrl.u32 %v2134, 7
    %v2136 = vsub.s32 2, %v2135
    %v2137 = vrot.slane %v2087, %v2136
    %v2139 = vsel %vm198, %v2131, 0
    %2141 = vmatprep.subr.bf16.mxu0 0
    %2142 = vmatpush1.bf16.msra.mxu0 %v2132
    %2143 = vmatprep.subr.bf16.mxu0 0
    %2144 = vmatpush1.bf16.msra.mxu0 %v2133
    %2145 = vmatprep.subr.bf16.mxu0 0
    %2146 = vmatpush1.bf16.msra.mxu0 0
    %2147 = vmatprep.subr.bf16.mxu0 0
    %2148 = vmatpush1.bf16.msra.mxu0 0
    %2149 = vmatprep.subr.bf16.mxu0 0
    %2150 = vmatpush1.bf16.msra.mxu0 0
    %2151 = vmatprep.subr.bf16.mxu0 0
    %2152 = vmatpush1.bf16.msra.mxu0 0
    %2153 = vmatprep.subr.bf16.mxu0 0
    %2154 = vmatpush1.bf16.msra.mxu0 0
    %2155 = vmatprep.subr.bf16.mxu0 0
    %2156 = vmatpush1.bf16.msra.mxu0 0
    %2157 = vmatprep.subr.bf16.mxu0 0
    %2158 = vmatpush1.bf16.msra.mxu0 0
    %2159 = vmatprep.subr.bf16.mxu0 0
    %2160 = vmatpush1.bf16.msra.mxu0 0
    %2161 = vmatprep.subr.bf16.mxu0 0
    %2162 = vmatpush1.bf16.msra.mxu0 0
    %2163 = vmatprep.subr.bf16.mxu0 0
    %2164 = vmatpush1.bf16.msra.mxu0 0
    %2165 = vmatprep.subr.bf16.mxu0 0
    %2166 = vmatpush1.bf16.msra.mxu0 0
    %2167 = vmatprep.subr.bf16.mxu0 0
    %2168 = vmatpush1.bf16.msra.mxu0 0
    %2169 = vmatprep.subr.bf16.mxu0 0
    %2170 = vmatpush1.bf16.msra.mxu0 0
    %2171 = vmatprep.subr.bf16.mxu0 0
    %2172 = vmatpush1.bf16.msra.mxu0 0
    %2173 = vmatprep.mubr.bf16.mxu0 0
    %2174 = vmatmul.mubr.bf16.gmra.mrb[0].mxu0 %v2139
    %v2175 = vpop.f32.mrb[0].mxu0
    %v2176 = vadd.f32 %v2137, %v2175
    %v2177 = vpop.f32.mrb[0].mxu0
    %v2178 = vpop.f32.mrb[0].mxu0
    %v2179 = vadd.f32 %v2137, %v2178
    %v2180 = vpop.f32.mrb[0].mxu0
    %2181 = vdwg.mxu0
    %v2182 = vmul.f32 %v2176, 0.5
    %v2183 = vmul.f32 %v2179, 0.5
    %v2184 = vmul.f32 %v2176, 0.70710677
    %v2185 = vmul.f32 %v2179, 0.70710677
    %v2186 = verf.f32.pop %v2184
    %v2187 = verf.f32.pop %v2185
    %v2188 = vadd.f32 %v2186, 1.0
    %v2189 = vadd.f32 %v2187, 1.0
    %v2190 = vmul.f32 %v2182, %v2188
    %v2191 = vmul.f32 %v2183, %v2189
    %2194 = vrot.lane.b32.xlu0 %v2190, 32
    %v2195 = vpop.permute.xlu0 %2194
    %2196 = vrot.lane.b32.xlu0 %v2191, 32
    %v2197 = vpop.permute.xlu0 %2196
    %v2200 = vsel %vm198, %v2129, %v2195
    %v2201 = vsel %vm198, %v2130, %v2197
    %vm2202 = vcmask 326656
    %2203 = vst.msk [vmem:[%s10] sm:$0xff] %vm2202, %v2200
    %vm2204 = vcmask 320512
    %2205 = vst.msk [vmem:[%s10 + $0x8] sm:$0x3] %vm2204, %v2201
    %v2206 = vpack.c.bf16 %v2191, %v2190
    %v2207 = vpack.c.bf16 %v2092, %v2092
    %v2208 = vlaneseq
    %v2209 = vshrl.u32 %v2208, 7
    %v2210 = vsub.s32 3, %v2209
    %v2211 = vrot.slane %v2087, %v2210
    %v2213 = vsel %vm308, %v2206, 0
    %vm2215 = vcmask 1043456
    %v2217 = vsel %vm2215, %v2207, 0
    %2219 = vmatprep.subr.bf16.mxu0 0
    %2220 = vmatpush1.bf16.msra.mxu0 %v2217
    %2221 = vmatprep.subr.bf16.mxu0 0
    %2222 = vmatpush1.bf16.msra.mxu0 0
    %2223 = vmatprep.subr.bf16.mxu0 0
    %2224 = vmatpush1.bf16.msra.mxu0 0
    %2225 = vmatprep.subr.bf16.mxu0 0
    %2226 = vmatpush1.bf16.msra.mxu0 0
    %2227 = vmatprep.subr.bf16.mxu0 0
    %2228 = vmatpush1.bf16.msra.mxu0 0
    %2229 = vmatprep.subr.bf16.mxu0 0
    %2230 = vmatpush1.bf16.msra.mxu0 0
    %2231 = vmatprep.subr.bf16.mxu0 0
    %2232 = vmatpush1.bf16.msra.mxu0 0
    %2233 = vmatprep.subr.bf16.mxu0 0
    %2234 = vmatpush1.bf16.msra.mxu0 0
    %2235 = vmatprep.subr.bf16.mxu0 0
    %2236 = vmatpush1.bf16.msra.mxu0 0
    %2237 = vmatprep.subr.bf16.mxu0 0
    %2238 = vmatpush1.bf16.msra.mxu0 0
    %2239 = vmatprep.subr.bf16.mxu0 0
    %2240 = vmatpush1.bf16.msra.mxu0 0
    %2241 = vmatprep.subr.bf16.mxu0 0
    %2242 = vmatpush1.bf16.msra.mxu0 0
    %2243 = vmatprep.subr.bf16.mxu0 0
    %2244 = vmatpush1.bf16.msra.mxu0 0
    %2245 = vmatprep.subr.bf16.mxu0 0
    %2246 = vmatpush1.bf16.msra.mxu0 0
    %2247 = vmatprep.subr.bf16.mxu0 0
    %2248 = vmatpush1.bf16.msra.mxu0 0
    %2249 = vmatprep.subr.bf16.mxu0 0
    %2250 = vmatpush1.bf16.msra.mxu0 0
    %2251 = vmatprep.mubr.bf16.mxu0 0
    %2252 = vmatmul.mubr.bf16.gmra.mrb[0].mxu0 %v2213
    %v2253 = vpop.f32.mrb[0].mxu0
    %v2254 = vadd.f32 %v2211, %v2253
    %v2255 = vpop.f32.mrb[0].mxu0
    %v2256 = vpop.f32.mrb[0].mxu0
    %v2257 = vadd.f32 %v2211, %v2256
    %v2258 = vpop.f32.mrb[0].mxu0
    %2259 = vdwg.mxu0
    %v2260 = vmul.f32 %v2254, 0.5
    %v2261 = vmul.f32 %v2257, 0.5
    %v2262 = vmul.f32 %v2254, 0.70710677
    %v2263 = vmul.f32 %v2257, 0.70710677
    %v2264 = verf.f32.pop %v2262
    %v2265 = verf.f32.pop %v2263
    %v2266 = vadd.f32 %v2264, 1.0
    %v2267 = vadd.f32 %v2265, 1.0
    %v2268 = vmul.f32 %v2260, %v2266
    %v2269 = vmul.f32 %v2261, %v2267
    %v2270 = vlaneseq
    %v2271 = vshrl.u32 %v2270, 7
    %v2272 = vadd.s32 %v2271, 8
    %vm2273 = vcmp.ge.s32.totalorder %v2271, 0
    %vm2274 = vcmp.ge.s32.totalorder %v2272, 0
    %vm2275 = vcmp.lt.s32.totalorder %v2271, 5
    %vm2276 = vcmp.lt.s32.totalorder %v2272, 5
    %vm2277 = vmand %vm2273, %vm2275
    %vm2278 = vmand %vm2274, %vm2276
    %v2279 = vsel %vm2277, %v2268, -1e+30
    %v2280 = vsel %vm2278, %v2269, -1e+30
    %v2281 = vsel %vm198, %v2279, -inf
    %v2282 = vsel %vm202, %v2280, -inf
    %v2283 = vmax.f32 %v2281, %v2282
    %v2284 = vrot.slane %v2283, 4
    %v2285 = vmax.f32 %v2283, %v2284
    %v2286 = vrot.slane %v2285, 2
    %v2287 = vmax.f32 %v2285, %v2286
    %v2288 = vrot.slane %v2287, 1
    %v2289 = vmax.f32 %v2287, %v2288
    %vm2290 = vcmp.ge.s32.totalorder %v2271, 5
    %vm2291 = vcmp.ge.s32.totalorder %v2272, 5
    %vm2292 = vcmp.lt.s32.totalorder %v2271, 10
    %vm2293 = vcmp.lt.s32.totalorder %v2272, 10
    %vm2294 = vmand %vm2290, %vm2292
    %vm2295 = vmand %vm2291, %vm2293
    %v2296 = vsel %vm2294, %v2268, -1e+30
    %v2297 = vsel %vm2295, %v2269, -1e+30
    %v2298 = vsel %vm198, %v2296, -inf
    %v2299 = vsel %vm202, %v2297, -inf
    %v2300 = vmax.f32 %v2298, %v2299
    %v2301 = vrot.slane %v2300, 4
    %v2302 = vmax.f32 %v2300, %v2301
    %v2303 = vrot.slane %v2302, 2
    %v2304 = vmax.f32 %v2302, %v2303
    %v2305 = vrot.slane %v2304, 1
    %v2306 = vmax.f32 %v2304, %v2305
    %vm2307 = vcmask 1040384
    %v2308 = vsel %vm2307, %v2289, %v2306
    %2309 = vst.msk [vmem:[#allocation2] sm:$0x3] %vm202, %v2308
    // Predicated region
    $region42: #{attribute_transformer4_forward.1} parent=1 // pred_check
      _
    $region43: #{attribute_transformer4_forward.1} parent=1 // pred_check_branch
      %2311 = sbr.rel (0) target = $region45
    $region44: #{attribute_transformer4_forward.1} parent=1 // pred_region
      _
    $region45: #{attribute_transformer4_forward.1} parent=1 // pred_fallthru
      _
    // Predicated region
    $region46: #{attribute_transformer4_forward.1} parent=1 // pred_check
      _
    $region47: #{attribute_transformer4_forward.1} parent=1 // pred_check_branch
      %2313 = sbr.rel (0) target = $region49
    $region48: #{attribute_transformer4_forward.1} parent=1 // pred_region
      %s2315 = ssub.s32 32, 32
      %2316 = vsyncadd [#allocation3], %s2315
      %s2318 = sshll.u32 [#allocation2], 4
      %s2319 = int_to_ptr.vmem [resolvable:$true] %s2318
      %2321 = dma.vmem_to_hbm [thread:$0]  %s2319, 32, %s11, [#allocation3]
    $region49: #{attribute_transformer4_forward.1} parent=1 // pred_fallthru
      _
    // Predicated region
    $region50: #{attribute_transformer4_forward.1} parent=1 // pred_check
      _
    $region51: #{attribute_transformer4_forward.1} parent=1 // pred_check_branch
      %2323 = sbr.rel (0) target = $region53
    $region52: #{attribute_transformer4_forward.1} parent=1 // pred_region
      _
    $region53: #{attribute_transformer4_forward.1} parent=1 // pred_fallthru
      _
    // Predicated region
    $region54: #{attribute_transformer4_forward.1} parent=1 // pred_check
      _
    $region55: #{attribute_transformer4_forward.1} parent=1 // pred_check_branch
      %2325 = sbr.rel (0) target = $region57
    $region56: #{attribute_transformer4_forward.1} parent=1 // pred_region
      %2326 = dma.done [#allocation3], 32
    $region57: #{attribute_transformer4_forward.1} parent=1 // pred_fallthru
      _
    %2327 = vsyncpa [#allocation3], 1

</llo_original>
